<compile_context>
chip_gen: v7x
topology: tpu7x:2x2x1
jax: 0.10.0
libtpu: 0.0.40
codegen_flags: <defaults>
</compile_context>

<pallas_src>
import functools

import jax
import jax.numpy as jnp
from jax.experimental import pallas as pl
from jax.experimental.pallas import tpu as pltpu


# ---------------------------------------------------------------------------
# Hardware / tiling helpers
# ---------------------------------------------------------------------------
def _vmem_capacity_bytes():
    """Physical VMEM of the current TPU generation (fallback: v7x-sized 64 MiB)."""
    try:
        info = pltpu.get_tpu_info()
        cap = getattr(info, "vmem_capacity_bytes", None)
        if cap:
            return int(cap)
    except Exception:
        pass
    return 64 * 1024 * 1024


def _divisors(n):
    ds = set()
    i = 1
    while i * i <= n:
        if n % i == 0:
            ds.add(i)
            ds.add(n // i)
        i += 1
    return sorted(ds)


def _knn_working_set(tm, n):
    """Conservative per-step VMEM estimate for the kNN(+cov) kernel."""
    # dist + int32 lane iota + sel + ~2 where/compare temporaries, all (TM, N)
    big = 5 * tm * n * 4
    # double-buffered key blocks: pos_t (3->8 sublane pad) + feat_t (9->16 pad)
    keys = 2 * (8 + 16) * n * 4
    # double-buffered query-side blocks (pos in / idx out / cov out), lane-padded
    qside = 2 * 3 * tm * 128 * 4
    return big + keys + qside


def _knn_budget_bytes():
    cap = _vmem_capacity_bytes()
    return (48 if cap <= 64 * 1024 * 1024 else 96) * 1024 * 1024


def _knn_vmem_limit():
    cap = _vmem_capacity_bytes()
    return (52 if cap <= 64 * 1024 * 1024 else 104) * 1024 * 1024


def _pick_query_tile(n, b):
    """Largest legal query tile (divisor of n, multiple of 8 or == n, <= 1024)
    whose working set fits the generation-aware VMEM budget.  Keeps the total
    program count even when B is odd (v7x 2-TC balance)."""
    budget = _knn_budget_bytes()
    legal = sorted({d for d in _divisors(n) if d % 8 == 0 or d == n},
                   reverse=True)
    tm = None
    for d in legal:
        if d <= 1024 and _knn_working_set(d, n) <= budget:
            tm = d
            break
    if tm is None:
        # TODO(synk): pad / stream keys instead; take the smallest legal tile.
        tm = legal[-1]
    if b % 2 == 1 and (n // tm) % 2 == 1 and tm % 16 == 0 and n % (tm // 2) == 0:
        tm //= 2          # even program count for dual-TensorCore parts
    return tm


def _pick_sublane_tile(s_total):
    for s in (512, 256, 128, 64, 32, 16, 8):
        if s_total % s == 0:
            return s
    return s_total


# ---------------------------------------------------------------------------
# Shared kNN pieces
# ---------------------------------------------------------------------------
def _pairwise_dist(p, p_t, qi, tm):
    """Squared distances (TM, N) of the query tile vs. all keys, clamped >=0,
    with the self entry forced to -1 so self is always selected first."""
    gram = jnp.dot(p, p_t, preferred_element_type=jnp.float32)       # (TM, N) MXU
    sq_q = jnp.sum(p * p, axis=-1, keepdims=True)                    # (TM, 1)
    sq_k = jnp.sum(p_t * p_t, axis=0, keepdims=True)                 # (1, N)
    dist = jnp.maximum(sq_q + sq_k - 2.0 * gram, 0.0)
    rows = qi * tm + jax.lax.broadcasted_iota(jnp.int32, dist.shape, 0)
    lane = jax.lax.broadcasted_iota(jnp.int32, dist.shape, 1)
    dist = jnp.where(lane == rows, jnp.float32(-1.0), dist)
    return dist, lane


def _select_knn(dist, lane, k, dil, need_sel):
    """Top-(k*dil) selection over the lane (key) axis by re-masking the winner
    each step (cheapest VALU path).  Returns the k kept index columns (every
    dil-th hit, each (TM, 1) int32) and, if need_sel, a float32 (TM, N)
    one-hot matrix of the kept hits.  For dil==1 the one-hot matrix is built
    in a single pass after the loop from the masked positions."""
    big_f = jnp.float32(3e38)
    big_i = jnp.int32(2 ** 30)
    n_steps = k * dil
    one_shot_sel = need_sel and dil == 1
    sel = jnp.zeros(dist.shape, jnp.float32) if (need_sel and dil > 1) else None
    cols = []
    # TODO(synk): switch to lax.fori_loop with a small unroll if k*dil grows >~32.
    for s in range(n_steps):
        m = jnp.min(dist, axis=-1, keepdims=True)                    # (TM, 1)
        idx = jnp.min(jnp.where(dist <= m, lane, big_i),
                      axis=-1, keepdims=True)                        # (TM, 1)
        if s % dil == 0:
            cols.append(idx)
            if need_sel and dil > 1:
                sel = sel + (lane == idx).astype(jnp.float32)
        if (s < n_steps - 1) or one_shot_sel:
            dist = jnp.where(lane == idx, big_f, dist)               # mask winner
    if one_shot_sel:
        sel = (dist >= big_f).astype(jnp.float32)                    # the k winners
    return cols, sel


# ---------------------------------------------------------------------------
# Kernel 1a: plain kNN (used for the eigenvalue-space graph)
# ---------------------------------------------------------------------------
def _knn_kernel(pos_ref, pos_t_ref, idx_ref, *, k, dil, tm):
    qi = pl.program_id(1)
    dist, lane = _pairwise_dist(pos_ref[0], pos_t_ref[0], qi, tm)
    cols, _ = _select_knn(dist, lane, k, dil, need_sel=False)
    idx_ref[0] = jnp.concatenate(cols, axis=-1)                      # one (TM, k) store


def knn_pallas(pts, pts_t, k, dil=1):
    """pts: (B, N, C), pts_t: (B, C, N) -> (B, N, k) int32 neighbor indices."""
    B, N, C = pts.shape
    assert k * dil <= N, "k * d must not exceed the number of points"
    tm = _pick_query_tile(N, B)
    kernel = functools.partial(_knn_kernel, k=k, dil=dil, tm=tm)
    return pl.pallas_call(
        kernel,
        out_shape=jax.ShapeDtypeStruct((B, N, k), jnp.int32),
        grid=(B, N // tm),
        in_specs=[pl.BlockSpec((1, tm, C), lambda b, q: (b, q, 0)),
                  pl.BlockSpec((1, C, N), lambda b, q: (b, 0, 0))],
        out_specs=pl.BlockSpec((1, tm, k), lambda b, q: (b, q, 0)),
        compiler_params=pltpu.CompilerParams(
            dimension_semantics=("parallel", "parallel"),
            vmem_limit_bytes=_knn_vmem_limit()),
    )(pts.astype(jnp.float32), pts_t.astype(jnp.float32))


# ---------------------------------------------------------------------------
# Kernel 1b: fused Euclidean kNN + neighbor-difference covariance moments
# ---------------------------------------------------------------------------
def _knn_cov_kernel(pos_ref, pos_t_ref, feat_t_ref, idx_ref, cov_ref, *, k, dil, tm):
    qi = pl.program_id(1)
    p = pos_ref[0]                        # (TM, 3)
    dist, lane = _pairwise_dist(p, pos_t_ref[0], qi, tm)
    cols, sel = _select_knn(dist, lane, k, dil, need_sel=True)
    idx_ref[0] = jnp.concatenate(cols, axis=-1)                      # one (TM, k) store

    # Neighbor moment sums with one MXU matmul against the lane-dense (9, N)
    # moment table; contraction over both minor dims (q @ k^T pattern).
    mom = jnp.einsum("qn,cn->qc", sel, feat_t_ref[0],
                     preferred_element_type=jnp.float32)             # (TM, 9)
    px, py, pz = p[:, 0:1], p[:, 1:2], p[:, 2:3]
    sx, sy, sz = mom[:, 0:1], mom[:, 1:2], mom[:, 2:3]
    sxx, syy, szz = mom[:, 3:4], mom[:, 4:5], mom[:, 5:6]
    sxy, sxz, syz = mom[:, 6:7], mom[:, 7:8], mom[:, 8:9]
    kf = jnp.float32(k)
    # cov of (q_j - p) over the k selected neighbors (self included, zero diff).
    c11 = sxx - 2.0 * px * sx + kf * px * px
    c22 = syy - 2.0 * py * sy + kf * py * py
    c33 = szz - 2.0 * pz * sz + kf * pz * pz
    c12 = sxy - px * sy - py * sx + kf * px * py
    c13 = sxz - px * sz - pz * sx + kf * px * pz
    c23 = syz - py * sz - pz * sy + kf * py * pz
    cov_ref[0] = jnp.concatenate([c11, c22, c33, c12, c13, c23], axis=-1)


def knn_cov_pallas(pts, pts_t, feat_t, k, dil=1):
    """Returns ((B, N, k) int32 indices, (B, N, 6) covariance entries
    [c11 c22 c33 c12 c13 c23]).  feat_t is the lane-dense (B, 9, N) moment
    table [x y z x2 y2 z2 xy xz yz]."""
    B, N, C = pts.shape
    assert k * dil <= N, "k * d must not exceed the number of points"
    tm = _pick_query_tile(N, B)
    kernel = functools.partial(_knn_cov_kernel, k=k, dil=dil, tm=tm)
    return pl.pallas_call(
        kernel,
        out_shape=(jax.ShapeDtypeStruct((B, N, k), jnp.int32),
                   jax.ShapeDtypeStruct((B, N, 6), jnp.float32)),
        grid=(B, N // tm),
        in_specs=[pl.BlockSpec((1, tm, C), lambda b, q: (b, q, 0)),
                  pl.BlockSpec((1, C, N), lambda b, q: (b, 0, 0)),
                  pl.BlockSpec((1, 9, N), lambda b, q: (b, 0, 0))],
        out_specs=(pl.BlockSpec((1, tm, k), lambda b, q: (b, q, 0)),
                   pl.BlockSpec((1, tm, 6), lambda b, q: (b, q, 0))),
        compiler_params=pltpu.CompilerParams(
            dimension_semantics=("parallel", "parallel"),
            vmem_limit_bytes=_knn_vmem_limit()),
    )(pts.astype(jnp.float32), pts_t.astype(jnp.float32),
      feat_t.astype(jnp.float32))


# ---------------------------------------------------------------------------
# Kernel 2: 3x3 eigenvalues via sublane-dense unrolled cyclic Jacobi sweeps
# ---------------------------------------------------------------------------
def _jacobi_rotate(app, aqq, apq, apr, aqr):
    """One Jacobi rotation zeroing apq; returns (app', aqq', apr', aqr')."""
    eps = jnp.float32(1e-30)
    nz = jnp.abs(apq) > eps
    apq_safe = jnp.where(nz, apq, jnp.float32(1.0))
    theta = (aqq - app) / (2.0 * apq_safe)
    sgn = jnp.where(theta >= 0.0, jnp.float32(1.0), jnp.float32(-1.0))
    t = sgn / (jnp.abs(theta) + jnp.sqrt(theta * theta + 1.0))
    t = jnp.where(nz, t, jnp.float32(0.0))
    c = jax.lax.rsqrt(t * t + 1.0)      # EUP slot
    s = t * c
    return (app - t * apq, aqq + t * apq,
            c * apr - s * aqr, s * apr + c * aqr)


def _cov_eig_kernel(cov_ref, eig_ref, *, sweeps):
    # cov_ref: (1, 6, S, 128) -- each component is a dense (S, 128) tile, so all
    # 8 sublanes of every vreg are used (vs. the old (1, TN) shapes).
    a11 = cov_ref[0, 0]
    a22 = cov_ref[0, 1]
    a33 = cov_ref[0, 2]
    a12 = cov_ref[0, 3]
    a13 = cov_ref[0, 4]
    a23 = cov_ref[0, 5]
    for _ in range(sweeps):
        a11, a22, a13, a23 = _jacobi_rotate(a11, a22, a12, a13, a23)
        a12 = jnp.zeros_like(a12)
        a11, a33, a12, a23 = _jacobi_rotate(a11, a33, a13, a12, a23)
        a13 = jnp.zeros_like(a13)
        a22, a33, a12, a13 = _jacobi_rotate(a22, a33, a23, a12, a13)
        a23 = jnp.zeros_like(a23)
    e1 = jnp.maximum(jnp.maximum(a11, a22), a33)
    e3 = jnp.minimum(jnp.minimum(a11, a22), a33)
    e2 = jnp.minimum(jnp.maximum(a11, a22),
                     jnp.maximum(jnp.minimum(a11, a22), a33))   # median of 3
    eig_ref[0, 0] = e1
    eig_ref[0, 1] = e2
    eig_ref[0, 2] = e3


def cov_eig_pallas(cov_t, sweeps=4):
    """cov_t: (B, 6, N) rows [c11 c22 c33 c12 c13 c23] -> eigenvalues (B, 3, N),
    descending.  N is padded to a multiple of 1024 (zero matrices -> zero
    eigenvalues) so every tile is a dense (S, 128) slab."""
    B, _, N = cov_t.shape
    lanes = 128
    n_pad = ((N + 8 * lanes - 1) // (8 * lanes)) * (8 * lanes)
    if n_pad != N:
        cov_t = jnp.pad(cov_t, ((0, 0), (0, 0), (0, n_pad - N)))
    s_total = n_pad // lanes
    s_blk = _pick_sublane_tile(s_total)
    cov4 = cov_t.reshape(B, 6, s_total, lanes).astype(jnp.float32)
    out4 = pl.pallas_call(
        functools.partial(_cov_eig_kernel, sweeps=sweeps),
        out_shape=jax.ShapeDtypeStruct((B, 3, s_total, lanes), jnp.float32),
        grid=(B, s_total // s_blk),
        in_specs=[pl.BlockSpec((1, 6, s_blk, lanes), lambda b, t: (b, 0, t, 0))],
        out_specs=pl.BlockSpec((1, 3, s_blk, lanes), lambda b, t: (b, 0, t, 0)),
        compiler_params=pltpu.CompilerParams(
            dimension_semantics=("parallel", "parallel")),
    )(cov4)
    return out4.reshape(B, 3, n_pad)[:, :, :N]


# ---------------------------------------------------------------------------
# KGraph forward (fps=None path, default branch)
# ---------------------------------------------------------------------------
def kgraph_forward(pos, k, d=1):
    B, N, C = pos.shape
    assert C == 3
    pos = pos.astype(jnp.float32)

    # Centering is an exact no-op for kNN and for covariances of differences,
    # but removes the large cancelling terms from the Gram-based distances and
    # the decomposed covariance moments.
    pos_c = pos - jnp.mean(pos, axis=1, keepdims=True)
    pos_t = jnp.transpose(pos_c, (0, 2, 1))                           # (B, 3, N)
    x, y, z = pos_t[:, 0], pos_t[:, 1], pos_t[:, 2]                   # (B, N) each
    feat_t = jnp.stack([x, y, z, x * x, y * y, z * z,
                        x * y, x * z, y * z], axis=1)                 # (B, 9, N)

    # Fused Euclidean kNN + neighbor-difference covariance.
    nbr_euc, cov6 = knn_cov_pallas(pos_c, pos_t, feat_t, k, d)        # (B,N,k),(B,N,6)

    # Eigenvalues on sublane/lane-dense (B, 6, N) covariances -> (B, 3, N).
    # The (B,N,6)->(B,6,N) and (B,3,N)->(B,N,3) HBM transposes are tiny
    # (B*N*6*4 bytes) relative to the kNN kernels.
    eig_t = cov_eig_pallas(jnp.transpose(cov6, (0, 2, 1)))            # (B, 3, N)
    eig = jnp.transpose(eig_t, (0, 2, 1))                             # (B, N, 3)

    # kNN in eigenvalue space, reusing eig_t as the lane-dense key matrix.
    nbr_eig = knn_pallas(eig, eig_t, k, d)                            # (B, N, k)

    offs = (jnp.arange(B, dtype=jnp.int32) * N)[:, None, None]        # (B, 1, 1)
    centers = jnp.broadcast_to(
        jnp.arange(N, dtype=jnp.int32)[None, :, None], (B, N, k))
    tid = (centers + offs).reshape(-1)
    sid_euc = (nbr_euc + offs).reshape(-1)
    sid_eig = (nbr_eig + offs).reshape(-1)
    return (sid_euc, tid), (sid_eig, tid), eig


if __name__ == "__main__":
    key = jax.random.PRNGKey(0)
    B, N, k = 2, 64, 8
    pos = jax.random.normal(key, (B, N, 3), dtype=jnp.float32)

    (sid_euc, tid_euc), (sid_eig, tid_eig), eig = kgraph_forward(pos, k=k, d=1)
    jax.block_until_ready((sid_euc, tid_euc, sid_eig, tid_eig, eig))

    # Shape / dtype sanity checks.
    assert sid_euc.shape == (B * N * k,) and sid_euc.dtype == jnp.int32
    assert tid_euc.shape == (B * N * k,) and tid_euc.dtype == jnp.int32
    assert sid_eig.shape == (B * N * k,) and tid_eig.shape == (B * N * k,)
    assert eig.shape == (B, N, 3)

    # kNN check: distances of the selected neighbors match the k smallest true
    # squared distances per query (robust to index swaps at fp near-ties).
    d2 = jnp.sum((pos[:, :, None, :] - pos[:, None, :, :]) ** 2, axis=-1)
    offs = (jnp.arange(B, dtype=jnp.int32) * N)[:, None, None]
    nbr = sid_euc.reshape(B, N, k) - offs
    sel_d = jnp.take_along_axis(d2, nbr, axis=-1)
    ref_d = jnp.sort(d2, axis=-1)[..., :k]
    assert jnp.allclose(jnp.sort(sel_d, axis=-1), ref_d, atol=1e-3), "knn mismatch"

    # Eigenvalue check against eigh on covariances rebuilt from the kernel's
    # own neighbor indices.
    pos_flat = pos.reshape(B * N, 3)
    diff = (pos_flat[sid_euc] - pos_flat[tid_euc]).reshape(B, N, k, 3)
    cov = jnp.einsum("bnkc,bnkd->bncd", diff, diff)                   # (B, N, 3, 3)
    eig_ref = jnp.linalg.eigvalsh(cov)[..., ::-1]                     # descending
    assert jnp.allclose(eig, eig_ref, atol=1e-3, rtol=1e-3), "eig mismatch"

    print("KERNEL_OK")
</pallas_src>

<mosaic_0001>
module attributes {stable_mosaic.version = 11 : i64} {
  func.func @_knn_cov_kernel(%arg0: i32, %arg1: i32, %arg2: memref<1x64x3xf32, #tpu.memory_space<vmem>>, %arg3: memref<1x3x64xf32, #tpu.memory_space<vmem>>, %arg4: memref<1x9x64xf32, #tpu.memory_space<vmem>>, %arg5: memref<1x64x8xi32, #tpu.memory_space<vmem>>, %arg6: memref<1x64x6xf32, #tpu.memory_space<vmem>>) attributes {dimension_semantics = [#tpu.dimension_semantics<parallel>, #tpu.dimension_semantics<parallel>], iteration_bounds = array<i64: 2, 1>, scalar_prefetch = 0 : i64, scratch_operands = 0 : i64, tpu.core_type = #tpu.core_type<tc>, window_params = [{transform_indices = @transform_0, window_bounds = array<i64: 1, 64, 3>}, {transform_indices = @transform_1, window_bounds = array<i64: 1, 3, 64>}, {transform_indices = @transform_2, window_bounds = array<i64: 1, 9, 64>}, {transform_indices = @transform_3, window_bounds = array<i64: 1, 64, 8>}, {transform_indices = @transform_4, window_bounds = array<i64: 1, 64, 6>}]} {
    %c0 = arith.constant 0 : index
    %c0_0 = arith.constant 0 : index
    %c0_1 = arith.constant 0 : index
    %0 = vector.load %arg2[%c0, %c0_0, %c0_1] : memref<1x64x3xf32, #tpu.memory_space<vmem>>, vector<1x64x3xf32>
    %1 = vector.shape_cast %0 : vector<1x64x3xf32> to vector<64x3xf32>
    %c0_2 = arith.constant 0 : index
    %c0_3 = arith.constant 0 : index
    %c0_4 = arith.constant 0 : index
    %2 = vector.load %arg3[%c0_2, %c0_3, %c0_4] : memref<1x3x64xf32, #tpu.memory_space<vmem>>, vector<1x3x64xf32>
    %3 = vector.shape_cast %2 : vector<1x3x64xf32> to vector<3x64xf32>
    %cst = arith.constant dense<0.000000e+00> : vector<64x64xf32>
    %4 = tpu.matmul %1, %3, %cst {dimension_numbers = #tpu.dot_dimension_numbers<[1], [0], [0], [1], [0, 0, 1, 1], [], []>} : vector<64x3xf32>, vector<3x64xf32>, vector<64x64xf32> -> vector<64x64xf32>
    %5 = arith.mulf %1, %1 : vector<64x3xf32>
    %cst_5 = arith.constant dense<0.000000e+00> : vector<64xf32>
    %6 = vector.multi_reduction <add>, %5, %cst_5 [1] : vector<64x3xf32> to vector<64xf32>
    %7 = vector.shape_cast %6 : vector<64xf32> to vector<64x1xf32>
    %8 = arith.mulf %3, %3 : vector<3x64xf32>
    %cst_6 = arith.constant dense<0.000000e+00> : vector<64xf32>
    %9 = vector.multi_reduction <add>, %8, %cst_6 [0] : vector<3x64xf32> to vector<64xf32>
    %10 = vector.shape_cast %9 : vector<64xf32> to vector<1x64xf32>
    %11 = vector.broadcast %7 : vector<64x1xf32> to vector<64x64xf32>
    %12 = vector.broadcast %10 : vector<1x64xf32> to vector<64x64xf32>
    %13 = arith.addf %11, %12 : vector<64x64xf32>
    %cst_7 = arith.constant 2.000000e+00 : f32
    %14 = vector.broadcast %cst_7 : f32 to vector<64x64xf32>
    %15 = arith.mulf %14, %4 : vector<64x64xf32>
    %16 = arith.subf %13, %15 : vector<64x64xf32>
    %cst_8 = arith.constant 0.000000e+00 : f32
    %17 = vector.broadcast %cst_8 : f32 to vector<64x64xf32>
    %18 = arith.maximumf %16, %17 : vector<64x64xf32>
    %c64_i32 = arith.constant 64 : i32
    %19 = arith.muli %arg1, %c64_i32 : i32
    %20 = tpu.iota {dimensions = array<i32: 0>} : vector<64x64xi32>
    %21 = vector.broadcast %19 : i32 to vector<64x64xi32>
    %22 = arith.addi %21, %20 : vector<64x64xi32>
    %23 = tpu.iota {dimensions = array<i32: 1>} : vector<64x64xi32>
    %24 = arith.cmpi eq, %23, %22 : vector<64x64xi32>
    %cst_9 = arith.constant -1.000000e+00 : f32
    %25 = vector.broadcast %cst_9 : f32 to vector<64x64xf32>
    %26 = arith.select %24, %25, %18 : vector<64x64xi1>, vector<64x64xf32>
    %cst_10 = arith.constant dense<0x7F800000> : vector<64xf32>
    %27 = vector.multi_reduction <minimumf>, %26, %cst_10 [1] : vector<64x64xf32> to vector<64xf32>
    %28 = vector.shape_cast %27 : vector<64xf32> to vector<64x1xf32>
    %29 = vector.broadcast %28 : vector<64x1xf32> to vector<64x64xf32>
    %30 = arith.cmpf ole, %26, %29 : vector<64x64xf32>
    %c1073741824_i32 = arith.constant 1073741824 : i32
    %31 = vector.broadcast %c1073741824_i32 : i32 to vector<64x64xi32>
    %32 = arith.select %30, %23, %31 : vector<64x64xi1>, vector<64x64xi32>
    %cst_11 = arith.constant dense<2147483647> : vector<64xi32>
    %33 = vector.multi_reduction <minsi>, %32, %cst_11 [1] : vector<64x64xi32> to vector<64xi32>
    %34 = vector.shape_cast %33 : vector<64xi32> to vector<64x1xi32>
    %35 = vector.broadcast %34 : vector<64x1xi32> to vector<64x64xi32>
    %36 = arith.cmpi eq, %23, %35 : vector<64x64xi32>
    %cst_12 = arith.constant 3.000000e+38 : f32
    %37 = vector.broadcast %cst_12 : f32 to vector<64x64xf32>
    %38 = arith.select %36, %37, %26 : vector<64x64xi1>, vector<64x64xf32>
    %cst_13 = arith.constant dense<0x7F800000> : vector<64xf32>
    %39 = vector.multi_reduction <minimumf>, %38, %cst_13 [1] : vector<64x64xf32> to vector<64xf32>
    %40 = vector.shape_cast %39 : vector<64xf32> to vector<64x1xf32>
    %41 = vector.broadcast %40 : vector<64x1xf32> to vector<64x64xf32>
    %42 = arith.cmpf ole, %38, %41 : vector<64x64xf32>
    %c1073741824_i32_14 = arith.constant 1073741824 : i32
    %43 = vector.broadcast %c1073741824_i32_14 : i32 to vector<64x64xi32>
    %44 = arith.select %42, %23, %43 : vector<64x64xi1>, vector<64x64xi32>
    %cst_15 = arith.constant dense<2147483647> : vector<64xi32>
    %45 = vector.multi_reduction <minsi>, %44, %cst_15 [1] : vector<64x64xi32> to vector<64xi32>
    %46 = vector.shape_cast %45 : vector<64xi32> to vector<64x1xi32>
    %47 = vector.broadcast %46 : vector<64x1xi32> to vector<64x64xi32>
    %48 = arith.cmpi eq, %23, %47 : vector<64x64xi32>
    %cst_16 = arith.constant 3.000000e+38 : f32
    %49 = vector.broadcast %cst_16 : f32 to vector<64x64xf32>
    %50 = arith.select %48, %49, %38 : vector<64x64xi1>, vector<64x64xf32>
    %cst_17 = arith.constant dense<0x7F800000> : vector<64xf32>
    %51 = vector.multi_reduction <minimumf>, %50, %cst_17 [1] : vector<64x64xf32> to vector<64xf32>
    %52 = vector.shape_cast %51 : vector<64xf32> to vector<64x1xf32>
    %53 = vector.broadcast %52 : vector<64x1xf32> to vector<64x64xf32>
    %54 = arith.cmpf ole, %50, %53 : vector<64x64xf32>
    %c1073741824_i32_18 = arith.constant 1073741824 : i32
    %55 = vector.broadcast %c1073741824_i32_18 : i32 to vector<64x64xi32>
    %56 = arith.select %54, %23, %55 : vector<64x64xi1>, vector<64x64xi32>
    %cst_19 = arith.constant dense<2147483647> : vector<64xi32>
    %57 = vector.multi_reduction <minsi>, %56, %cst_19 [1] : vector<64x64xi32> to vector<64xi32>
    %58 = vector.shape_cast %57 : vector<64xi32> to vector<64x1xi32>
    %59 = vector.broadcast %58 : vector<64x1xi32> to vector<64x64xi32>
    %60 = arith.cmpi eq, %23, %59 : vector<64x64xi32>
    %cst_20 = arith.constant 3.000000e+38 : f32
    %61 = vector.broadcast %cst_20 : f32 to vector<64x64xf32>
    %62 = arith.select %60, %61, %50 : vector<64x64xi1>, vector<64x64xf32>
    %cst_21 = arith.constant dense<0x7F800000> : vector<64xf32>
    %63 = vector.multi_reduction <minimumf>, %62, %cst_21 [1] : vector<64x64xf32> to vector<64xf32>
    %64 = vector.shape_cast %63 : vector<64xf32> to vector<64x1xf32>
    %65 = vector.broadcast %64 : vector<64x1xf32> to vector<64x64xf32>
    %66 = arith.cmpf ole, %62, %65 : vector<64x64xf32>
    %c1073741824_i32_22 = arith.constant 1073741824 : i32
    %67 = vector.broadcast %c1073741824_i32_22 : i32 to vector<64x64xi32>
    %68 = arith.select %66, %23, %67 : vector<64x64xi1>, vector<64x64xi32>
    %cst_23 = arith.constant dense<2147483647> : vector<64xi32>
    %69 = vector.multi_reduction <minsi>, %68, %cst_23 [1] : vector<64x64xi32> to vector<64xi32>
    %70 = vector.shape_cast %69 : vector<64xi32> to vector<64x1xi32>
    %71 = vector.broadcast %70 : vector<64x1xi32> to vector<64x64xi32>
    %72 = arith.cmpi eq, %23, %71 : vector<64x64xi32>
    %cst_24 = arith.constant 3.000000e+38 : f32
    %73 = vector.broadcast %cst_24 : f32 to vector<64x64xf32>
    %74 = arith.select %72, %73, %62 : vector<64x64xi1>, vector<64x64xf32>
    %cst_25 = arith.constant dense<0x7F800000> : vector<64xf32>
    %75 = vector.multi_reduction <minimumf>, %74, %cst_25 [1] : vector<64x64xf32> to vector<64xf32>
    %76 = vector.shape_cast %75 : vector<64xf32> to vector<64x1xf32>
    %77 = vector.broadcast %76 : vector<64x1xf32> to vector<64x64xf32>
    %78 = arith.cmpf ole, %74, %77 : vector<64x64xf32>
    %c1073741824_i32_26 = arith.constant 1073741824 : i32
    %79 = vector.broadcast %c1073741824_i32_26 : i32 to vector<64x64xi32>
    %80 = arith.select %78, %23, %79 : vector<64x64xi1>, vector<64x64xi32>
    %cst_27 = arith.constant dense<2147483647> : vector<64xi32>
    %81 = vector.multi_reduction <minsi>, %80, %cst_27 [1] : vector<64x64xi32> to vector<64xi32>
    %82 = vector.shape_cast %81 : vector<64xi32> to vector<64x1xi32>
    %83 = vector.broadcast %82 : vector<64x1xi32> to vector<64x64xi32>
    %84 = arith.cmpi eq, %23, %83 : vector<64x64xi32>
    %cst_28 = arith.constant 3.000000e+38 : f32
    %85 = vector.broadcast %cst_28 : f32 to vector<64x64xf32>
    %86 = arith.select %84, %85, %74 : vector<64x64xi1>, vector<64x64xf32>
    %cst_29 = arith.constant dense<0x7F800000> : vector<64xf32>
    %87 = vector.multi_reduction <minimumf>, %86, %cst_29 [1] : vector<64x64xf32> to vector<64xf32>
    %88 = vector.shape_cast %87 : vector<64xf32> to vector<64x1xf32>
    %89 = vector.broadcast %88 : vector<64x1xf32> to vector<64x64xf32>
    %90 = arith.cmpf ole, %86, %89 : vector<64x64xf32>
    %c1073741824_i32_30 = arith.constant 1073741824 : i32
    %91 = vector.broadcast %c1073741824_i32_30 : i32 to vector<64x64xi32>
    %92 = arith.select %90, %23, %91 : vector<64x64xi1>, vector<64x64xi32>
    %cst_31 = arith.constant dense<2147483647> : vector<64xi32>
    %93 = vector.multi_reduction <minsi>, %92, %cst_31 [1] : vector<64x64xi32> to vector<64xi32>
    %94 = vector.shape_cast %93 : vector<64xi32> to vector<64x1xi32>
    %95 = vector.broadcast %94 : vector<64x1xi32> to vector<64x64xi32>
    %96 = arith.cmpi eq, %23, %95 : vector<64x64xi32>
    %cst_32 = arith.constant 3.000000e+38 : f32
    %97 = vector.broadcast %cst_32 : f32 to vector<64x64xf32>
    %98 = arith.select %96, %97, %86 : vector<64x64xi1>, vector<64x64xf32>
    %cst_33 = arith.constant dense<0x7F800000> : vector<64xf32>
    %99 = vector.multi_reduction <minimumf>, %98, %cst_33 [1] : vector<64x64xf32> to vector<64xf32>
    %100 = vector.shape_cast %99 : vector<64xf32> to vector<64x1xf32>
    %101 = vector.broadcast %100 : vector<64x1xf32> to vector<64x64xf32>
    %102 = arith.cmpf ole, %98, %101 : vector<64x64xf32>
    %c1073741824_i32_34 = arith.constant 1073741824 : i32
    %103 = vector.broadcast %c1073741824_i32_34 : i32 to vector<64x64xi32>
    %104 = arith.select %102, %23, %103 : vector<64x64xi1>, vector<64x64xi32>
    %cst_35 = arith.constant dense<2147483647> : vector<64xi32>
    %105 = vector.multi_reduction <minsi>, %104, %cst_35 [1] : vector<64x64xi32> to vector<64xi32>
    %106 = vector.shape_cast %105 : vector<64xi32> to vector<64x1xi32>
    %107 = vector.broadcast %106 : vector<64x1xi32> to vector<64x64xi32>
    %108 = arith.cmpi eq, %23, %107 : vector<64x64xi32>
    %cst_36 = arith.constant 3.000000e+38 : f32
    %109 = vector.broadcast %cst_36 : f32 to vector<64x64xf32>
    %110 = arith.select %108, %109, %98 : vector<64x64xi1>, vector<64x64xf32>
    %cst_37 = arith.constant dense<0x7F800000> : vector<64xf32>
    %111 = vector.multi_reduction <minimumf>, %110, %cst_37 [1] : vector<64x64xf32> to vector<64xf32>
    %112 = vector.shape_cast %111 : vector<64xf32> to vector<64x1xf32>
    %113 = vector.broadcast %112 : vector<64x1xf32> to vector<64x64xf32>
    %114 = arith.cmpf ole, %110, %113 : vector<64x64xf32>
    %c1073741824_i32_38 = arith.constant 1073741824 : i32
    %115 = vector.broadcast %c1073741824_i32_38 : i32 to vector<64x64xi32>
    %116 = arith.select %114, %23, %115 : vector<64x64xi1>, vector<64x64xi32>
    %cst_39 = arith.constant dense<2147483647> : vector<64xi32>
    %117 = vector.multi_reduction <minsi>, %116, %cst_39 [1] : vector<64x64xi32> to vector<64xi32>
    %118 = vector.shape_cast %117 : vector<64xi32> to vector<64x1xi32>
    %119 = vector.broadcast %118 : vector<64x1xi32> to vector<64x64xi32>
    %120 = arith.cmpi eq, %23, %119 : vector<64x64xi32>
    %cst_40 = arith.constant 3.000000e+38 : f32
    %121 = vector.broadcast %cst_40 : f32 to vector<64x64xf32>
    %122 = arith.select %120, %121, %110 : vector<64x64xi1>, vector<64x64xf32>
    %cst_41 = arith.constant 3.000000e+38 : f32
    %123 = vector.broadcast %cst_41 : f32 to vector<64x64xf32>
    %124 = arith.cmpf oge, %122, %123 : vector<64x64xf32>
    %125 = arith.extui %124 : vector<64x64xi1> to vector<64x64xi32>
    %126 = arith.sitofp %125 : vector<64x64xi32> to vector<64x64xf32>
    %127 = tpu.concatenate %34, %46, %58, %70, %82, %94, %106, %118 in 1 : vector<64x1xi32>, vector<64x1xi32>, vector<64x1xi32>, vector<64x1xi32>, vector<64x1xi32>, vector<64x1xi32>, vector<64x1xi32>, vector<64x1xi32> -> vector<64x8xi32>
    %c0_42 = arith.constant 0 : index
    %c0_43 = arith.constant 0 : index
    %c0_44 = arith.constant 0 : index
    %128 = vector.load %arg5[%c0_42, %c0_43, %c0_44] : memref<1x64x8xi32, #tpu.memory_space<vmem>>, vector<1x64x8xi32>
    %129 = vector.shape_cast %128 : vector<1x64x8xi32> to vector<64x8xi32>
    %130 = vector.shape_cast %127 : vector<64x8xi32> to vector<1x64x8xi32>
    tpu.vector_store %arg5[%c0_42, %c0_43, %c0_44], %130 {strides = array<i32>} : memref<1x64x8xi32, #tpu.memory_space<vmem>>, vector<1x64x8xi32>,
    %c0_45 = arith.constant 0 : index
    %c0_46 = arith.constant 0 : index
    %c0_47 = arith.constant 0 : index
    %131 = vector.load %arg4[%c0_45, %c0_46, %c0_47] : memref<1x9x64xf32, #tpu.memory_space<vmem>>, vector<1x9x64xf32>
    %132 = vector.shape_cast %131 : vector<1x9x64xf32> to vector<9x64xf32>
    "tpu.trace_start"() <{level = 10 : i32, message = "qn,cn->qc"}> : () -> ()
    %cst_48 = arith.constant dense<0.000000e+00> : vector<64x9xf32>
    %133 = tpu.matmul %126, %132, %cst_48 {dimension_numbers = #tpu.dot_dimension_numbers<[1], [1], [0], [0], [0, 0, 1, 0], [], []>} : vector<64x64xf32>, vector<9x64xf32>, vector<64x9xf32> -> vector<64x9xf32>
    "tpu.trace_stop"() : () -> ()
    %134 = vector.extract_strided_slice %1 {offsets = [0, 0], sizes = [64, 1], strides = [1, 1]} : vector<64x3xf32> to vector<64x1xf32>
    %135 = vector.extract_strided_slice %1 {offsets = [0, 1], sizes = [64, 1], strides = [1, 1]} : vector<64x3xf32> to vector<64x1xf32>
    %136 = vector.extract_strided_slice %1 {offsets = [0, 2], sizes = [64, 1], strides = [1, 1]} : vector<64x3xf32> to vector<64x1xf32>
    %137 = vector.extract_strided_slice %133 {offsets = [0, 0], sizes = [64, 1], strides = [1, 1]} : vector<64x9xf32> to vector<64x1xf32>
    %138 = vector.extract_strided_slice %133 {offsets = [0, 1], sizes = [64, 1], strides = [1, 1]} : vector<64x9xf32> to vector<64x1xf32>
    %139 = vector.extract_strided_slice %133 {offsets = [0, 2], sizes = [64, 1], strides = [1, 1]} : vector<64x9xf32> to vector<64x1xf32>
    %140 = vector.extract_strided_slice %133 {offsets = [0, 3], sizes = [64, 1], strides = [1, 1]} : vector<64x9xf32> to vector<64x1xf32>
    %141 = vector.extract_strided_slice %133 {offsets = [0, 4], sizes = [64, 1], strides = [1, 1]} : vector<64x9xf32> to vector<64x1xf32>
    %142 = vector.extract_strided_slice %133 {offsets = [0, 5], sizes = [64, 1], strides = [1, 1]} : vector<64x9xf32> to vector<64x1xf32>
    %143 = vector.extract_strided_slice %133 {offsets = [0, 6], sizes = [64, 1], strides = [1, 1]} : vector<64x9xf32> to vector<64x1xf32>
    %144 = vector.extract_strided_slice %133 {offsets = [0, 7], sizes = [64, 1], strides = [1, 1]} : vector<64x9xf32> to vector<64x1xf32>
    %145 = vector.extract_strided_slice %133 {offsets = [0, 8], sizes = [64, 1], strides = [1, 1]} : vector<64x9xf32> to vector<64x1xf32>
    %cst_49 = arith.constant 2.000000e+00 : f32
    %146 = vector.broadcast %cst_49 : f32 to vector<64x1xf32>
    %147 = arith.mulf %146, %134 : vector<64x1xf32>
    %148 = arith.mulf %147, %137 : vector<64x1xf32>
    %149 = arith.subf %140, %148 : vector<64x1xf32>
    %cst_50 = arith.constant 8.000000e+00 : f32
    %150 = vector.broadcast %cst_50 : f32 to vector<64x1xf32>
    %151 = arith.mulf %150, %134 : vector<64x1xf32>
    %152 = arith.mulf %151, %134 : vector<64x1xf32>
    %153 = arith.addf %149, %152 : vector<64x1xf32>
    %cst_51 = arith.constant 2.000000e+00 : f32
    %154 = vector.broadcast %cst_51 : f32 to vector<64x1xf32>
    %155 = arith.mulf %154, %135 : vector<64x1xf32>
    %156 = arith.mulf %155, %138 : vector<64x1xf32>
    %157 = arith.subf %141, %156 : vector<64x1xf32>
    %cst_52 = arith.constant 8.000000e+00 : f32
    %158 = vector.broadcast %cst_52 : f32 to vector<64x1xf32>
    %159 = arith.mulf %158, %135 : vector<64x1xf32>
    %160 = arith.mulf %159, %135 : vector<64x1xf32>
    %161 = arith.addf %157, %160 : vector<64x1xf32>
    %cst_53 = arith.constant 2.000000e+00 : f32
    %162 = vector.broadcast %cst_53 : f32 to vector<64x1xf32>
    %163 = arith.mulf %162, %136 : vector<64x1xf32>
    %164 = arith.mulf %163, %139 : vector<64x1xf32>
    %165 = arith.subf %142, %164 : vector<64x1xf32>
    %cst_54 = arith.constant 8.000000e+00 : f32
    %166 = vector.broadcast %cst_54 : f32 to vector<64x1xf32>
    %167 = arith.mulf %166, %136 : vector<64x1xf32>
    %168 = arith.mulf %167, %136 : vector<64x1xf32>
    %169 = arith.addf %165, %168 : vector<64x1xf32>
    %170 = arith.mulf %134, %138 : vector<64x1xf32>
    %171 = arith.subf %143, %170 : vector<64x1xf32>
    %172 = arith.mulf %135, %137 : vector<64x1xf32>
    %173 = arith.subf %171, %172 : vector<64x1xf32>
    %cst_55 = arith.constant 8.000000e+00 : f32
    %174 = vector.broadcast %cst_55 : f32 to vector<64x1xf32>
    %175 = arith.mulf %174, %134 : vector<64x1xf32>
    %176 = arith.mulf %175, %135 : vector<64x1xf32>
    %177 = arith.addf %173, %176 : vector<64x1xf32>
    %178 = arith.mulf %134, %139 : vector<64x1xf32>
    %179 = arith.subf %144, %178 : vector<64x1xf32>
    %180 = arith.mulf %136, %137 : vector<64x1xf32>
    %181 = arith.subf %179, %180 : vector<64x1xf32>
    %cst_56 = arith.constant 8.000000e+00 : f32
    %182 = vector.broadcast %cst_56 : f32 to vector<64x1xf32>
    %183 = arith.mulf %182, %134 : vector<64x1xf32>
    %184 = arith.mulf %183, %136 : vector<64x1xf32>
    %185 = arith.addf %181, %184 : vector<64x1xf32>
    %186 = arith.mulf %135, %139 : vector<64x1xf32>
    %187 = arith.subf %145, %186 : vector<64x1xf32>
    %188 = arith.mulf %136, %138 : vector<64x1xf32>
    %189 = arith.subf %187, %188 : vector<64x1xf32>
    %cst_57 = arith.constant 8.000000e+00 : f32
    %190 = vector.broadcast %cst_57 : f32 to vector<64x1xf32>
    %191 = arith.mulf %190, %135 : vector<64x1xf32>
    %192 = arith.mulf %191, %136 : vector<64x1xf32>
    %193 = arith.addf %189, %192 : vector<64x1xf32>
    %194 = tpu.concatenate %153, %161, %169, %177, %185, %193 in 1 : vector<64x1xf32>, vector<64x1xf32>, vector<64x1xf32>, vector<64x1xf32>, vector<64x1xf32>, vector<64x1xf32> -> vector<64x6xf32>
    %c0_58 = arith.constant 0 : index
    %c0_59 = arith.constant 0 : index
    %c0_60 = arith.constant 0 : index
    %195 = vector.load %arg6[%c0_58, %c0_59, %c0_60] : memref<1x64x6xf32, #tpu.memory_space<vmem>>, vector<1x64x6xf32>
    %196 = vector.shape_cast %195 : vector<1x64x6xf32> to vector<64x6xf32>
    %197 = vector.shape_cast %194 : vector<64x6xf32> to vector<1x64x6xf32>
    tpu.vector_store %arg6[%c0_58, %c0_59, %c0_60], %197 {strides = array<i32>} : memref<1x64x6xf32, #tpu.memory_space<vmem>>, vector<1x64x6xf32>,
    return
  }
  func.func @transform_0(%arg0: i32, %arg1: i32) -> (i32, i32, i32) {
    %c0_i32 = arith.constant 0 : i32
    %c0_i32_0 = arith.constant 0 : i32
    return %arg0, %arg1, %c0_i32 : i32, i32, i32
  }
  func.func @transform_1(%arg0: i32, %arg1: i32) -> (i32, i32, i32) {
    %c0_i32 = arith.constant 0 : i32
    %c0_i32_0 = arith.constant 0 : i32
    %c0_i32_1 = arith.constant 0 : i32
    return %arg0, %c0_i32, %c0_i32_0 : i32, i32, i32
  }
  func.func @transform_2(%arg0: i32, %arg1: i32) -> (i32, i32, i32) {
    %c0_i32 = arith.constant 0 : i32
    %c0_i32_0 = arith.constant 0 : i32
    %c0_i32_1 = arith.constant 0 : i32
    return %arg0, %c0_i32, %c0_i32_0 : i32, i32, i32
  }
  func.func @transform_3(%arg0: i32, %arg1: i32) -> (i32, i32, i32) {
    %c0_i32 = arith.constant 0 : i32
    %c0_i32_0 = arith.constant 0 : i32
    return %arg0, %arg1, %c0_i32 : i32, i32, i32
  }
  func.func @transform_4(%arg0: i32, %arg1: i32) -> (i32, i32, i32) {
    %c0_i32 = arith.constant 0 : i32
    %c0_i32_0 = arith.constant 0 : i32
    return %arg0, %arg1, %c0_i32 : i32, i32, i32
  }
}

</mosaic_0001>

<llo_original>
// kernel: tpu_custom_call.1
$region0: #{tpu_custom_call.1}
  #allocation0 [shape = 'u32[]', space=smem, size = 0x4, offset = 0x4, fixed_abs, tag = 'smem constant byte address 0x4 - core index']
  #allocation1 [shape = 'u32[144,128]{1,0:T(1,128)}', space=vmem, size = 0x12000, scoped, tag = 'internal scratch']
  %s0 = inlined_call_operand.vmem [shape: f32[2,64,3], index: 0, kind: input, shape index: {}]
  %s1 = inlined_call_operand.vmem [shape: f32[2,3,64], index: 1, kind: input, shape index: {}]
  %s2 = inlined_call_operand.vmem [shape: f32[2,9,64], index: 2, kind: input, shape index: {}]
  %s3 = inlined_call_operand.vmem [shape: s32[2,64,8], index: 3, kind: output, shape index: {0}]
  %s4 = inlined_call_operand.vmem [shape: f32[2,64,6], index: 4, kind: output, shape index: {1}]
  %5 = xla_tuple %s3, %s4
  %s6 = sld [smem:[#allocation0]]
  $region53: #{tpu_custom_call.1} parent=0
    _
  %s8 = ssub.s32 1, %s6
  %s9 = scalar_select 0, %s8, %s6
  loop: start=0, step=1, limit=4
  $region2: #{tpu_custom_call.1} parent=0 // loop_pre_header
    _
  $region3: #{tpu_custom_call.1} parent=0 // loop_header
    %s11 = sphi 0, %s15
    %p12 = scmp.ge.s32.totalorder %s11, 4
    %s18 = sphi 0, %s30
    %s19 = sphi 0, %s26
    %s20 = sphi 0, %s18
    %s21 = sphi 0, %s19
    %s22 = sphi 0, %s20
    %s23 = sphi 0, %s21
    %s35 = sphi 0, %s37
    %s38 = sphi 0, %s35
    %s39 = sphi 0, %s38
    %s55 = sphi 0, %s39
    %s61 = sphi 0, %s63
    %s64 = sphi 0, %s61
    %s65 = sphi 0, %s64
    %s81 = sphi 0, %s65
    %s87 = sphi 0, %s89
    %s90 = sphi 0, %s87
    %s91 = sphi 0, %s90
    %s107 = sphi 0, %s91
    %s115 = sphi 0, %s117
    %s118 = sphi 0, %s115
    %s119 = sphi 0, %s118
    %s135 = sphi 0, %s119
    %s143 = sphi 0, %s145
    %s146 = sphi 0, %s143
    %s147 = sphi 0, %s146
    %s163 = sphi 0, %s147
  $region4: #{tpu_custom_call.1} parent=0 // loop_header_branch
    %14 = sbr.rel (%p12) target = $region8
  $region5: #{tpu_custom_call.1} parent=0 // loop_body
    %s16 = ssub.s32 %s11, 1
    %s17 = ssub.s32 %s11, 2
    %s24 = sadd.s32 1, %s19
    %p25 = scmp.ge.s32.totalorder %s24, 1
    %s26 = scalar_select %p25, 0, %s24
    %s27 = sadd.s32 1, %s18
    %s28 = scalar_select %p25, %s27, %s18
    %p29 = scmp.ge.s32.totalorder %s28, 2
    %s30 = scalar_select %p29, 0, %s28
    %s31 = ssub.s32 %s18, %s30
    %s32 = ssub.s32 %s19, %s26
    %s33 = sor.u32 %s31, %s32
    %p34 = scmp.eq.s32.totalorder %s33, 0
    %s36 = sadd.s32 %s35, 1
    %s37 = scalar_select %p34, %s35, %s36
    %p40 = pneg %p34
    %p41 = scmp.eq.s32.totalorder %s11, 1
    %p42 = por %p40, %p41
    %p43 = scmp.ne.s32.totalorder %s35, %s38
    %p44 = scmp.eq.s32.totalorder %s11, 0
    %p45 = por %p43, %p44
    %p46 = scmp.ne.s32.totalorder %s35, %s38
    %p47 = scmp.eq.s32.totalorder %s16, 1
    %p48 = por %p46, %p47
    %p49 = scmp.ne.s32.totalorder %s38, %s39
    %p50 = scmp.eq.s32.totalorder %s16, 0
    %p51 = por %p49, %p50
    %p52 = scmp.ne.s32.totalorder %s38, %s39
    %p53 = scmp.eq.s32.totalorder %s17, 1
    %p54 = por %p52, %p53
    %p56 = scmp.ne.s32.totalorder %s39, %s55
    %p57 = scmp.eq.s32.totalorder %s17, 0
    %p58 = por %p56, %p57
    %s59 = ssub.s32 %s18, %s30
    %p60 = scmp.eq.s32.totalorder %s59, 0
    %s62 = sadd.s32 %s61, 1
    %s63 = scalar_select %p60, %s61, %s62
    %p66 = pneg %p60
    %p67 = scmp.eq.s32.totalorder %s11, 1
    %p68 = por %p66, %p67
    %p69 = scmp.ne.s32.totalorder %s61, %s64
    %p70 = scmp.eq.s32.totalorder %s11, 0
    %p71 = por %p69, %p70
    %p72 = scmp.ne.s32.totalorder %s61, %s64
    %p73 = scmp.eq.s32.totalorder %s16, 1
    %p74 = por %p72, %p73
    %p75 = scmp.ne.s32.totalorder %s64, %s65
    %p76 = scmp.eq.s32.totalorder %s16, 0
    %p77 = por %p75, %p76
    %p78 = scmp.ne.s32.totalorder %s64, %s65
    %p79 = scmp.eq.s32.totalorder %s17, 1
    %p80 = por %p78, %p79
    %p82 = scmp.ne.s32.totalorder %s65, %s81
    %p83 = scmp.eq.s32.totalorder %s17, 0
    %p84 = por %p82, %p83
    %s85 = ssub.s32 %s18, %s30
    %p86 = scmp.eq.s32.totalorder %s85, 0
    %s88 = sadd.s32 %s87, 1
    %s89 = scalar_select %p86, %s87, %s88
    %p92 = pneg %p86
    %p93 = scmp.eq.s32.totalorder %s11, 1
    %p94 = por %p92, %p93
    %p95 = scmp.ne.s32.totalorder %s87, %s90
    %p96 = scmp.eq.s32.totalorder %s11, 0
    %p97 = por %p95, %p96
    %p98 = scmp.ne.s32.totalorder %s87, %s90
    %p99 = scmp.eq.s32.totalorder %s16, 1
    %p100 = por %p98, %p99
    %p101 = scmp.ne.s32.totalorder %s90, %s91
    %p102 = scmp.eq.s32.totalorder %s16, 0
    %p103 = por %p101, %p102
    %p104 = scmp.ne.s32.totalorder %s90, %s91
    %p105 = scmp.eq.s32.totalorder %s17, 1
    %p106 = por %p104, %p105
    %p108 = scmp.ne.s32.totalorder %s91, %s107
    %p109 = scmp.eq.s32.totalorder %s17, 0
    %p110 = por %p108, %p109
    %s111 = ssub.s32 %s18, %s30
    %s112 = ssub.s32 %s19, %s26
    %s113 = sor.u32 %s111, %s112
    %p114 = scmp.eq.s32.totalorder %s113, 0
    %s116 = sadd.s32 %s115, 1
    %s117 = scalar_select %p114, %s115, %s116
    %p120 = pneg %p114
    %p121 = scmp.eq.s32.totalorder %s11, 1
    %p122 = por %p120, %p121
    %p123 = scmp.ne.s32.totalorder %s115, %s118
    %p124 = scmp.eq.s32.totalorder %s11, 0
    %p125 = por %p123, %p124
    %p126 = scmp.ne.s32.totalorder %s115, %s118
    %p127 = scmp.eq.s32.totalorder %s16, 1
    %p128 = por %p126, %p127
    %p129 = scmp.ne.s32.totalorder %s118, %s119
    %p130 = scmp.eq.s32.totalorder %s16, 0
    %p131 = por %p129, %p130
    %p132 = scmp.ne.s32.totalorder %s118, %s119
    %p133 = scmp.eq.s32.totalorder %s17, 1
    %p134 = por %p132, %p133
    %p136 = scmp.ne.s32.totalorder %s119, %s135
    %p137 = scmp.eq.s32.totalorder %s17, 0
    %p138 = por %p136, %p137
    %s139 = ssub.s32 %s18, %s30
    %s140 = ssub.s32 %s19, %s26
    %s141 = sor.u32 %s139, %s140
    %p142 = scmp.eq.s32.totalorder %s141, 0
    %s144 = sadd.s32 %s143, 1
    %s145 = scalar_select %p142, %s143, %s144
    %p148 = pneg %p142
    %p149 = scmp.eq.s32.totalorder %s11, 1
    %p150 = por %p148, %p149
    %p151 = scmp.ne.s32.totalorder %s143, %s146
    %p152 = scmp.eq.s32.totalorder %s11, 0
    %p153 = por %p151, %p152
    %p154 = scmp.ne.s32.totalorder %s143, %s146
    %p155 = scmp.eq.s32.totalorder %s16, 1
    %p156 = por %p154, %p155
    %p157 = scmp.ne.s32.totalorder %s146, %s147
    %p158 = scmp.eq.s32.totalorder %s16, 0
    %p159 = por %p157, %p158
    %p160 = scmp.ne.s32.totalorder %s146, %s147
    %p161 = scmp.eq.s32.totalorder %s17, 1
    %p162 = por %p160, %p161
    %p164 = scmp.ne.s32.totalorder %s147, %s163
    %p165 = scmp.eq.s32.totalorder %s17, 0
    %p166 = por %p164, %p165
    %p167 = scmp.le.s32.totalorder 1, %s11
    %p168 = scmp.lt.s32.totalorder %s11, 3
    %p169 = pnand %p167, %p168
    %p170 = pneg %p169
    // Predicated region
    $region9: #{tpu_custom_call.1} parent=5 // pred_check
      _
    $region10: #{tpu_custom_call.1} parent=5 // pred_check_branch
      %172 = sbr.rel (%p169) target = $region12
    $region11: #{tpu_custom_call.1} parent=5 // pred_region
      %s173 = ssub.s32 %s11, 1
    $region12: #{tpu_custom_call.1} parent=5 // pred_fallthru
      _
    %p174 = scmp.lt.s32.totalorder %s11, 2
    // Predicated region
    $region13: #{tpu_custom_call.1} parent=5 // pred_check
      %p175 = pneg %p174
    $region14: #{tpu_custom_call.1} parent=5 // pred_check_branch
      %177 = sbr.rel (%p175) target = $region16
    $region15: #{tpu_custom_call.1} parent=5 // pred_region
      // Predicated region
      $region17: #{tpu_custom_call.1} parent=15 // pred_check
        %p178 = pneg %p45
      $region18: #{tpu_custom_call.1} parent=15 // pred_check_branch
        %180 = sbr.rel (%p178) target = $region20
      $region19: #{tpu_custom_call.1} parent=15 // pred_region
        %s181 = smul.u32 8, %s19
        %p182 = scmp.lt.s32.totalorder %s18, 1
        %s183 = scalar_select %p182, %s18, 1
        %p184 = scmp.lt.s32.totalorder %s181, 7
        %s185 = scalar_select %p184, %s181, 7
        %s186 = smul.addr %s183, 8
        %s187 = sadd.s32 %s185, %s186
        %s188 = smul.addr %s187, 8
        %s189 = scalar_lea.vmem %s0, %s188
        %s190 = smul.u32 8, %s19
      $region20: #{tpu_custom_call.1} parent=15 // pred_fallthru
        _
      // Predicated region
      $region21: #{tpu_custom_call.1} parent=15 // pred_check
        %p191 = pneg %p71
      $region22: #{tpu_custom_call.1} parent=15 // pred_check_branch
        %193 = sbr.rel (%p191) target = $region24
      $region23: #{tpu_custom_call.1} parent=15 // pred_region
        %p194 = scmp.lt.s32.totalorder %s18, 1
        %s195 = scalar_select %p194, %s18, 1
        %s196 = smul.addr %s195, 4
        %s197 = scalar_lea.vmem %s1, %s196
      $region24: #{tpu_custom_call.1} parent=15 // pred_fallthru
        _
      // Predicated region
      $region25: #{tpu_custom_call.1} parent=15 // pred_check
        %p198 = pneg %p97
      $region26: #{tpu_custom_call.1} parent=15 // pred_check_branch
        %200 = sbr.rel (%p198) target = $region28
      $region27: #{tpu_custom_call.1} parent=15 // pred_region
        %p201 = scmp.lt.s32.totalorder %s18, 1
        %s202 = scalar_select %p201, %s18, 1
        %s203 = smul.addr %s202, 2
        %s204 = smul.addr %s203, 8
        %s205 = scalar_lea.vmem %s2, %s204
      $region28: #{tpu_custom_call.1} parent=15 // pred_fallthru
        _
    $region16: #{tpu_custom_call.1} parent=5 // pred_fallthru
      _
    %p206 = scmp.le.s32.totalorder 1, %s11
    %p207 = scmp.lt.s32.totalorder %s11, 3
    %p208 = pnand %p206, %p207
    %p209 = pneg %p208
    // Predicated region
    $region29: #{tpu_custom_call.1} parent=5 // pred_check
      _
    $region30: #{tpu_custom_call.1} parent=5 // pred_check_branch
      %211 = sbr.rel (%p208) target = $region32
    $region31: #{tpu_custom_call.1} parent=5 // pred_region
      %s212 = ssub.s32 %s11, 1
      %s213 = smul.u32 8, %s21
      %p214 = scmp.lt.s32.totalorder %s20, 1
      %s215 = scalar_select %p214, %s20, 1
      %p216 = scmp.lt.s32.totalorder %s213, 7
      %s217 = scalar_select %p216, %s213, 7
      %s218 = smul.addr %s215, 8
      %s219 = sadd.s32 %s217, %s218
      %s220 = smul.addr %s219, 8
      %s221 = scalar_lea.vmem %s0, %s220
      %p222 = pneg %p51
      %p223 = pneg %p48
      %p224 = scmp.lt.s32.totalorder %s20, 1
      %s225 = scalar_select %p224, %s20, 1
      %s226 = smul.addr %s225, 4
      %s227 = scalar_lea.vmem %s1, %s226
      %p228 = pneg %p77
      %p229 = pneg %p74
      %p230 = scmp.lt.s32.totalorder %s20, 1
      %s231 = scalar_select %p230, %s20, 1
      %s232 = smul.addr %s231, 2
      %s233 = smul.addr %s232, 8
      %s234 = scalar_lea.vmem %s2, %s233
      %p235 = pneg %p103
      %p236 = pneg %p100
      %p237 = pneg %p131
      %p238 = pneg %p128
      %s239 = smul.u32 8, %s21
      %p240 = scmp.lt.s32.totalorder %s20, 1
      %s241 = scalar_select %p240, %s20, 1
      %p242 = scmp.lt.s32.totalorder %s239, 7
      %s243 = scalar_select %p242, %s239, 7
      %s244 = smul.addr %s241, 8
      %s245 = sadd.s32 %s243, %s244
      %s246 = smul.addr %s245, 8
      %s247 = scalar_lea.vmem %s3, %s246
      %p248 = pneg %p159
      %p249 = pneg %p156
      %s250 = smul.u32 8, %s21
      %p251 = scmp.lt.s32.totalorder %s20, 1
      %s252 = scalar_select %p251, %s20, 1
      %p253 = scmp.lt.s32.totalorder %s250, 7
      %s254 = scalar_select %p253, %s250, 7
      %s255 = smul.addr %s252, 8
      %s256 = sadd.s32 %s254, %s255
      %s257 = smul.addr %s256, 8
      %s258 = scalar_lea.vmem %s4, %s257
      %s259 = smul.u32 8, %s21
      %p260 = scmp.lt.s32.totalorder %s20, 1
      %s261 = scalar_select %p260, %s20, 1
      %p262 = scmp.lt.s32.totalorder %s259, 7
      %s263 = scalar_select %p262, %s259, 7
      %s264 = smul.addr %s261, 8
      %s265 = sadd.s32 %s263, %s264
      %s266 = smul.addr %s265, 8
      %s267 = scalar_lea.vmem %s0, %s266
      %s268 = smul.u32 8, %s21
      %p269 = scmp.lt.s32.totalorder %s20, 1
      %s270 = scalar_select %p269, %s20, 1
      %s271 = smul.addr %s270, 4
      %s272 = scalar_lea.vmem %s1, %s271
      %p273 = scmp.lt.s32.totalorder %s20, 1
      %s274 = scalar_select %p273, %s20, 1
      %s275 = smul.addr %s274, 2
      %s276 = smul.addr %s275, 8
      %s277 = scalar_lea.vmem %s2, %s276
      %s278 = smul.u32 8, %s21
      %p279 = scmp.lt.s32.totalorder %s20, 1
      %s280 = scalar_select %p279, %s20, 1
      %p281 = scmp.lt.s32.totalorder %s278, 7
      %s282 = scalar_select %p281, %s278, 7
      %s283 = smul.addr %s280, 8
      %s284 = sadd.s32 %s282, %s283
      %s285 = smul.addr %s284, 8
      %s286 = scalar_lea.vmem %s3, %s285
      %s287 = smul.u32 8, %s21
      %s288 = smul.u32 8, %s21
      %p289 = scmp.lt.s32.totalorder %s20, 1
      %s290 = scalar_select %p289, %s20, 1
      %p291 = scmp.lt.s32.totalorder %s288, 7
      %s292 = scalar_select %p291, %s288, 7
      %s293 = smul.addr %s290, 8
      %s294 = sadd.s32 %s292, %s293
      %s295 = smul.addr %s294, 8
      %s296 = scalar_lea.vmem %s4, %s295
      %s297 = smul.u32 8, %s21
      %v298 = vld [vmem:[%s267] sm:$0xff]
      %v299 = vld [vmem:[%s267 + $0x8] sm:$0xff]
      %v300 = vld [vmem:[%s267 + $0x10] sm:$0xff]
      %v301 = vld [vmem:[%s267 + $0x18] sm:$0xff]
      %v302 = vld [vmem:[%s267 + $0x20] sm:$0xff]
      %v303 = vld [vmem:[%s267 + $0x28] sm:$0xff]
      %v304 = vld [vmem:[%s267 + $0x30] sm:$0xff]
      %v305 = vld [vmem:[%s267 + $0x38] sm:$0xff]
      %v306 = vld [vmem:[%s272] sm:$0x7]
      %vm307 = vcmask 23552
      %v309 = vsel %vm307, %v298, 0
      %v312 = vsel %vm307, %v299, 0
      %v315 = vsel %vm307, %v300, 0
      %v318 = vsel %vm307, %v301, 0
      %v321 = vsel %vm307, %v302, 0
      %v324 = vsel %vm307, %v303, 0
      %v327 = vsel %vm307, %v304, 0
      %v330 = vsel %vm307, %v305, 0
      %vm332 = vcmask 1042432
      %v334 = vsel %vm332, %v306, 0
      %336 = vmatprep.subr.mxu0 0.0
      %337 = vmatpush1.msra.mxu0 %v334
      %338 = vmatprep.subr.mxu0 0.0
      %339 = vmatpush1.msra.mxu0 0.0
      %340 = vmatprep.subr.mxu0 0.0
      %341 = vmatpush1.msra.mxu0 0.0
      %342 = vmatprep.subr.mxu0 0.0
      %343 = vmatpush1.msra.mxu0 0.0
      %344 = vmatprep.subr.mxu0 0.0
      %345 = vmatpush1.msra.mxu0 0.0
      %346 = vmatprep.subr.mxu0 0.0
      %347 = vmatpush1.msra.mxu0 0.0
      %348 = vmatprep.subr.mxu0 0.0
      %349 = vmatpush1.msra.mxu0 0.0
      %350 = vmatprep.subr.mxu0 0.0
      %351 = vmatpush1.msra.mxu0 0.0
      %352 = vmatprep.subr.mxu0 0.0
      %353 = vmatpush1.msra.mxu0 0.0
      %354 = vmatprep.subr.mxu0 0.0
      %355 = vmatpush1.msra.mxu0 0.0
      %356 = vmatprep.subr.mxu0 0.0
      %357 = vmatpush1.msra.mxu0 0.0
      %358 = vmatprep.subr.mxu0 0.0
      %359 = vmatpush1.msra.mxu0 0.0
      %360 = vmatprep.subr.mxu0 0.0
      %361 = vmatpush1.msra.mxu0 0.0
      %362 = vmatprep.subr.mxu0 0.0
      %363 = vmatpush1.msra.mxu0 0.0
      %364 = vmatprep.subr.mxu0 0.0
      %365 = vmatpush1.msra.mxu0 0.0
      %366 = vmatprep.subr.mxu0 0.0
      %367 = vmatpush1.msra.mxu0 0.0
      %368 = vmatprep.subr.mxu0 0.0
      %369 = vmatpush1.msra.mxu0 0.0
      %370 = vmatprep.subr.mxu0 0.0
      %371 = vmatpush1.msra.mxu0 0.0
      %372 = vmatprep.subr.mxu0 0.0
      %373 = vmatpush1.msra.mxu0 0.0
      %374 = vmatprep.subr.mxu0 0.0
      %375 = vmatpush1.msra.mxu0 0.0
      %376 = vmatprep.subr.mxu0 0.0
      %377 = vmatpush1.msra.mxu0 0.0
      %378 = vmatprep.subr.mxu0 0.0
      %379 = vmatpush1.msra.mxu0 0.0
      %380 = vmatprep.subr.mxu0 0.0
      %381 = vmatpush1.msra.mxu0 0.0
      %382 = vmatprep.subr.mxu0 0.0
      %383 = vmatpush1.msra.mxu0 0.0
      %384 = vmatprep.subr.mxu0 0.0
      %385 = vmatpush1.msra.mxu0 0.0
      %386 = vmatprep.subr.mxu0 0.0
      %387 = vmatpush1.msra.mxu0 0.0
      %388 = vmatprep.subr.mxu0 0.0
      %389 = vmatpush1.msra.mxu0 0.0
      %390 = vmatprep.subr.mxu0 0.0
      %391 = vmatpush1.msra.mxu0 0.0
      %392 = vmatprep.subr.mxu0 0.0
      %393 = vmatpush1.msra.mxu0 0.0
      %394 = vmatprep.subr.mxu0 0.0
      %395 = vmatpush1.msra.mxu0 0.0
      %396 = vmatprep.subr.mxu0 0.0
      %397 = vmatpush1.msra.mxu0 0.0
      %398 = vmatprep.subr.mxu0 0.0
      %399 = vmatpush1.msra.mxu0 0.0
      %400 = vmatprep.mubr.f32.mxu0 0.0
      %401 = vmatmul.mubr.f32.gmra.mrb[0].mxu0 %v309
      %v402 = vpop.f32.mrb[0].mxu0
      %v403 = vadd.f32 0.0, %v402
      %v404 = vpop.f32.mrb[0].mxu0
      %405 = vmatprep.mubr.f32.mxu0 0.0
      %406 = vmatmul.mubr.f32.gmra.mrb[0].mxu0 %v312
      %v407 = vpop.f32.mrb[0].mxu0
      %v408 = vadd.f32 0.0, %v407
      %v409 = vpop.f32.mrb[0].mxu0
      %410 = vmatprep.mubr.f32.mxu0 0.0
      %411 = vmatmul.mubr.f32.gmra.mrb[0].mxu0 %v315
      %v412 = vpop.f32.mrb[0].mxu0
      %v413 = vadd.f32 0.0, %v412
      %v414 = vpop.f32.mrb[0].mxu0
      %415 = vmatprep.mubr.f32.mxu0 0.0
      %416 = vmatmul.mubr.f32.gmra.mrb[0].mxu0 %v318
      %v417 = vpop.f32.mrb[0].mxu0
      %v418 = vadd.f32 0.0, %v417
      %v419 = vpop.f32.mrb[0].mxu0
      %420 = vmatprep.mubr.f32.mxu0 0.0
      %421 = vmatmul.mubr.f32.gmra.mrb[0].mxu0 %v321
      %v422 = vpop.f32.mrb[0].mxu0
      %v423 = vadd.f32 0.0, %v422
      %v424 = vpop.f32.mrb[0].mxu0
      %425 = vmatprep.mubr.f32.mxu0 0.0
      %426 = vmatmul.mubr.f32.gmra.mrb[0].mxu0 %v324
      %v427 = vpop.f32.mrb[0].mxu0
      %v428 = vadd.f32 0.0, %v427
      %v429 = vpop.f32.mrb[0].mxu0
      %430 = vmatprep.mubr.f32.mxu0 0.0
      %431 = vmatmul.mubr.f32.gmra.mrb[0].mxu0 %v327
      %v432 = vpop.f32.mrb[0].mxu0
      %v433 = vadd.f32 0.0, %v432
      %v434 = vpop.f32.mrb[0].mxu0
      %435 = vmatprep.mubr.f32.mxu0 0.0
      %436 = vmatmul.mubr.f32.gmra.mrb[0].mxu0 %v330
      %v437 = vpop.f32.mrb[0].mxu0
      %v438 = vadd.f32 0.0, %v437
      %v439 = vpop.f32.mrb[0].mxu0
      %440 = vdwg.mxu0
      %v441 = vmul.f32 %v298, %v298
      %v442 = vmul.f32 %v299, %v299
      %v443 = vmul.f32 %v300, %v300
      %v444 = vmul.f32 %v301, %v301
      %v445 = vmul.f32 %v302, %v302
      %v446 = vmul.f32 %v303, %v303
      %v447 = vmul.f32 %v304, %v304
      %v448 = vmul.f32 %v305, %v305
      %v449 = vsel %vm307, %v441, 0.0
      %450 = vadd.xlane.f32.xlu0 %v449
      %v451 = vpop.xlane.xlu0 %450
      %v452 = vsel %vm307, %v442, 0.0
      %453 = vadd.xlane.f32.xlu0 %v452
      %v454 = vpop.xlane.xlu0 %453
      %v455 = vsel %vm307, %v443, 0.0
      %456 = vadd.xlane.f32.xlu0 %v455
      %v457 = vpop.xlane.xlu0 %456
      %v458 = vsel %vm307, %v444, 0.0
      %459 = vadd.xlane.f32.xlu0 %v458
      %v460 = vpop.xlane.xlu0 %459
      %v461 = vsel %vm307, %v445, 0.0
      %462 = vadd.xlane.f32.xlu0 %v461
      %v463 = vpop.xlane.xlu0 %462
      %v464 = vsel %vm307, %v446, 0.0
      %465 = vadd.xlane.f32.xlu0 %v464
      %v466 = vpop.xlane.xlu0 %465
      %v467 = vsel %vm307, %v447, 0.0
      %468 = vadd.xlane.f32.xlu0 %v467
      %v469 = vpop.xlane.xlu0 %468
      %v470 = vsel %vm307, %v448, 0.0
      %471 = vadd.xlane.f32.xlu0 %v470
      %v472 = vpop.xlane.xlu0 %471
      %v473 = vmul.f32 %v306, %v306
      %vm474 = vcmask 518144
      %v475 = vsel %vm474, %v473, 0.0
      %v476 = vrot.slane %v475, 4
      %v477 = vadd.f32 %v475, %v476
      %v478 = vrot.slane %v477, 2
      %v479 = vadd.f32 %v477, %v478
      %v480 = vrot.slane %v479, 1
      %v481 = vadd.f32 %v479, %v480
      %v482 = vadd.f32 %v451, %v481
      %v483 = vadd.f32 %v454, %v481
      %v484 = vadd.f32 %v457, %v481
      %v485 = vadd.f32 %v460, %v481
      %v486 = vadd.f32 %v463, %v481
      %v487 = vadd.f32 %v466, %v481
      %v488 = vadd.f32 %v469, %v481
      %v489 = vadd.f32 %v472, %v481
      %v490 = vmul.f32 %v403, 2.0
      %v491 = vmul.f32 %v408, 2.0
      %v492 = vmul.f32 %v413, 2.0
      %v493 = vmul.f32 %v418, 2.0
      %v494 = vmul.f32 %v423, 2.0
      %v495 = vmul.f32 %v428, 2.0
      %v496 = vmul.f32 %v433, 2.0
      %v497 = vmul.f32 %v438, 2.0
      %v498 = vsub.f32 %v482, %v490
      %v499 = vsub.f32 %v483, %v491
      %v500 = vsub.f32 %v484, %v492
      %v501 = vsub.f32 %v485, %v493
      %v502 = vsub.f32 %v486, %v494
      %v503 = vsub.f32 %v487, %v495
      %v504 = vsub.f32 %v488, %v496
      %v505 = vsub.f32 %v489, %v497
      %v506 = vmax.f32 %v498, 0.0
      %v507 = vmax.f32 %v499, 0.0
      %v508 = vmax.f32 %v500, 0.0
      %v509 = vmax.f32 %v501, 0.0
      %v510 = vmax.f32 %v502, 0.0
      %v511 = vmax.f32 %v503, 0.0
      %v512 = vmax.f32 %v504, 0.0
      %v513 = vmax.f32 %v505, 0.0
      %s514 = smul.u32 %s21, 64
      %v515 = vlaneseq
      %v516 = vshrl.u32 %v515, 7
      %v517 = vadd.s32 %v516, 8
      %v518 = vadd.s32 %v516, 16
      %v519 = vadd.s32 %v516, 24
      %v520 = vadd.s32 %v516, 32
      %v521 = vadd.s32 %v516, 40
      %v522 = vadd.s32 %v516, 48
      %v523 = vadd.s32 %v516, 56
      %v524 = vstv %s514
      %v525 = vadd.s32 %v524, %v516
      %v526 = vadd.s32 %v524, %v517
      %v527 = vadd.s32 %v524, %v518
      %v528 = vadd.s32 %v524, %v519
      %v529 = vadd.s32 %v524, %v520
      %v530 = vadd.s32 %v524, %v521
      %v531 = vadd.s32 %v524, %v522
      %v532 = vadd.s32 %v524, %v523
      %v533 = vlaneseq
      %v534 = vand.u32 %v533, 127
      %vm535 = vcmp.eq.s32.totalorder %v534, %v525
      %vm536 = vcmp.eq.s32.totalorder %v534, %v526
      %vm537 = vcmp.eq.s32.totalorder %v534, %v527
      %vm538 = vcmp.eq.s32.totalorder %v534, %v528
      %vm539 = vcmp.eq.s32.totalorder %v534, %v529
      %vm540 = vcmp.eq.s32.totalorder %v534, %v530
      %vm541 = vcmp.eq.s32.totalorder %v534, %v531
      %vm542 = vcmp.eq.s32.totalorder %v534, %v532
      %v543 = vsel %vm535, -1.0, %v506
      %v544 = vsel %vm536, -1.0, %v507
      %v545 = vsel %vm537, -1.0, %v508
      %v546 = vsel %vm538, -1.0, %v509
      %v547 = vsel %vm539, -1.0, %v510
      %v548 = vsel %vm540, -1.0, %v511
      %v549 = vsel %vm541, -1.0, %v512
      %v550 = vsel %vm542, -1.0, %v513
      %vm551 = vcmask 523264
      %v552 = vsel %vm551, %v543, inf
      %553 = vmin.xlane.f32.xlu0 %v552
      %v554 = vpop.xlane.xlu0 %553
      %v555 = vsel %vm551, %v544, inf
      %556 = vmin.xlane.f32.xlu0 %v555
      %v557 = vpop.xlane.xlu0 %556
      %v558 = vsel %vm551, %v545, inf
      %559 = vmin.xlane.f32.xlu0 %v558
      %v560 = vpop.xlane.xlu0 %559
      %v561 = vsel %vm551, %v546, inf
      %562 = vmin.xlane.f32.xlu0 %v561
      %v563 = vpop.xlane.xlu0 %562
      %v564 = vsel %vm551, %v547, inf
      %565 = vmin.xlane.f32.xlu0 %v564
      %v566 = vpop.xlane.xlu0 %565
      %v567 = vsel %vm551, %v548, inf
      %568 = vmin.xlane.f32.xlu0 %v567
      %v569 = vpop.xlane.xlu0 %568
      %v570 = vsel %vm551, %v549, inf
      %571 = vmin.xlane.f32.xlu0 %v570
      %v572 = vpop.xlane.xlu0 %571
      %v573 = vsel %vm551, %v550, inf
      %574 = vmin.xlane.f32.xlu0 %v573
      %v575 = vpop.xlane.xlu0 %574
      %vm576 = vcmp.le.f32.partialorder %v543, %v554
      %vm577 = vcmp.le.f32.partialorder %v544, %v557
      %vm578 = vcmp.le.f32.partialorder %v545, %v560
      %vm579 = vcmp.le.f32.partialorder %v546, %v563
      %vm580 = vcmp.le.f32.partialorder %v547, %v566
      %vm581 = vcmp.le.f32.partialorder %v548, %v569
      %vm582 = vcmp.le.f32.partialorder %v549, %v572
      %vm583 = vcmp.le.f32.partialorder %v550, %v575
      %v584 = vsel %vm576, %v534, 1073741824
      %v585 = vsel %vm577, %v534, 1073741824
      %v586 = vsel %vm578, %v534, 1073741824
      %v587 = vsel %vm579, %v534, 1073741824
      %v588 = vsel %vm580, %v534, 1073741824
      %v589 = vsel %vm581, %v534, 1073741824
      %v590 = vsel %vm582, %v534, 1073741824
      %v591 = vsel %vm583, %v534, 1073741824
      %v592 = vsel %vm551, %v584, 2147483647
      %v593 = vand.u32 %v592, 65535
      %v594 = vshra.s32 %v592, 16
      %v595 = vcvt.s32.f32 %v593
      %v596 = vcvt.s32.f32 %v594
      %597 = vmin.xlane.f32.xlu0 %v596
      %v598 = vpop.xlane.xlu0 %597
      %vm599 = vcmp.eq.f32.partialorder %v596, %v598
      %v600 = vsel %vm599, %v595, inf
      %601 = vmin.xlane.f32.xlu0 %v600
      %v602 = vpop.xlane.xlu0 %601
      %v603 = vcvt.f32.s32 %v602
      %v604 = vcvt.f32.s32 %v598
      %v605 = vshll.u32 %v604, 16
      %v606 = vadd.s32 %v605, %v603
      %v607 = vsel %vm551, %v585, 2147483647
      %v608 = vand.u32 %v607, 65535
      %v609 = vshra.s32 %v607, 16
      %v610 = vcvt.s32.f32 %v608
      %v611 = vcvt.s32.f32 %v609
      %612 = vmin.xlane.f32.xlu0 %v611
      %v613 = vpop.xlane.xlu0 %612
      %vm614 = vcmp.eq.f32.partialorder %v611, %v613
      %v615 = vsel %vm614, %v610, inf
      %616 = vmin.xlane.f32.xlu0 %v615
      %v617 = vpop.xlane.xlu0 %616
      %v618 = vcvt.f32.s32 %v617
      %v619 = vcvt.f32.s32 %v613
      %v620 = vshll.u32 %v619, 16
      %v621 = vadd.s32 %v620, %v618
      %v622 = vsel %vm551, %v586, 2147483647
      %v623 = vand.u32 %v622, 65535
      %v624 = vshra.s32 %v622, 16
      %v625 = vcvt.s32.f32 %v623
      %v626 = vcvt.s32.f32 %v624
      %627 = vmin.xlane.f32.xlu0 %v626
      %v628 = vpop.xlane.xlu0 %627
      %vm629 = vcmp.eq.f32.partialorder %v626, %v628
      %v630 = vsel %vm629, %v625, inf
      %631 = vmin.xlane.f32.xlu0 %v630
      %v632 = vpop.xlane.xlu0 %631
      %v633 = vcvt.f32.s32 %v632
      %v634 = vcvt.f32.s32 %v628
      %v635 = vshll.u32 %v634, 16
      %v636 = vadd.s32 %v635, %v633
      %v637 = vsel %vm551, %v587, 2147483647
      %v638 = vand.u32 %v637, 65535
      %v639 = vshra.s32 %v637, 16
      %v640 = vcvt.s32.f32 %v638
      %v641 = vcvt.s32.f32 %v639
      %642 = vmin.xlane.f32.xlu0 %v641
      %v643 = vpop.xlane.xlu0 %642
      %vm644 = vcmp.eq.f32.partialorder %v641, %v643
      %v645 = vsel %vm644, %v640, inf
      %646 = vmin.xlane.f32.xlu0 %v645
      %v647 = vpop.xlane.xlu0 %646
      %v648 = vcvt.f32.s32 %v647
      %v649 = vcvt.f32.s32 %v643
      %v650 = vshll.u32 %v649, 16
      %v651 = vadd.s32 %v650, %v648
      %v652 = vsel %vm551, %v588, 2147483647
      %v653 = vand.u32 %v652, 65535
      %v654 = vshra.s32 %v652, 16
      %v655 = vcvt.s32.f32 %v653
      %v656 = vcvt.s32.f32 %v654
      %657 = vmin.xlane.f32.xlu0 %v656
      %v658 = vpop.xlane.xlu0 %657
      %vm659 = vcmp.eq.f32.partialorder %v656, %v658
      %v660 = vsel %vm659, %v655, inf
      %661 = vmin.xlane.f32.xlu0 %v660
      %v662 = vpop.xlane.xlu0 %661
      %v663 = vcvt.f32.s32 %v662
      %v664 = vcvt.f32.s32 %v658
      %v665 = vshll.u32 %v664, 16
      %v666 = vadd.s32 %v665, %v663
      %v667 = vsel %vm551, %v589, 2147483647
      %v668 = vand.u32 %v667, 65535
      %v669 = vshra.s32 %v667, 16
      %v670 = vcvt.s32.f32 %v668
      %v671 = vcvt.s32.f32 %v669
      %672 = vmin.xlane.f32.xlu0 %v671
      %v673 = vpop.xlane.xlu0 %672
      %vm674 = vcmp.eq.f32.partialorder %v671, %v673
      %v675 = vsel %vm674, %v670, inf
      %676 = vmin.xlane.f32.xlu0 %v675
      %v677 = vpop.xlane.xlu0 %676
      %v678 = vcvt.f32.s32 %v677
      %v679 = vcvt.f32.s32 %v673
      %v680 = vshll.u32 %v679, 16
      %v681 = vadd.s32 %v680, %v678
      %v682 = vsel %vm551, %v590, 2147483647
      %v683 = vand.u32 %v682, 65535
      %v684 = vshra.s32 %v682, 16
      %v685 = vcvt.s32.f32 %v683
      %v686 = vcvt.s32.f32 %v684
      %687 = vmin.xlane.f32.xlu0 %v686
      %v688 = vpop.xlane.xlu0 %687
      %vm689 = vcmp.eq.f32.partialorder %v686, %v688
      %v690 = vsel %vm689, %v685, inf
      %691 = vmin.xlane.f32.xlu0 %v690
      %v692 = vpop.xlane.xlu0 %691
      %v693 = vcvt.f32.s32 %v692
      %v694 = vcvt.f32.s32 %v688
      %v695 = vshll.u32 %v694, 16
      %v696 = vadd.s32 %v695, %v693
      %v697 = vsel %vm551, %v591, 2147483647
      %v698 = vand.u32 %v697, 65535
      %v699 = vshra.s32 %v697, 16
      %v700 = vcvt.s32.f32 %v698
      %v701 = vcvt.s32.f32 %v699
      %702 = vmin.xlane.f32.xlu0 %v701
      %v703 = vpop.xlane.xlu0 %702
      %vm704 = vcmp.eq.f32.partialorder %v701, %v703
      %v705 = vsel %vm704, %v700, inf
      %706 = vmin.xlane.f32.xlu0 %v705
      %v707 = vpop.xlane.xlu0 %706
      %v708 = vcvt.f32.s32 %v707
      %v709 = vcvt.f32.s32 %v703
      %v710 = vshll.u32 %v709, 16
      %v711 = vadd.s32 %v710, %v708
      %vm712 = vcmp.eq.s32.totalorder %v534, %v606
      %vm713 = vcmp.eq.s32.totalorder %v534, %v621
      %vm714 = vcmp.eq.s32.totalorder %v534, %v636
      %vm715 = vcmp.eq.s32.totalorder %v534, %v651
      %vm716 = vcmp.eq.s32.totalorder %v534, %v666
      %vm717 = vcmp.eq.s32.totalorder %v534, %v681
      %vm718 = vcmp.eq.s32.totalorder %v534, %v696
      %vm719 = vcmp.eq.s32.totalorder %v534, %v711
      %v720 = vsel %vm712, 3e+38, %v543
      %v721 = vsel %vm713, 3e+38, %v544
      %v722 = vsel %vm714, 3e+38, %v545
      %v723 = vsel %vm715, 3e+38, %v546
      %v724 = vsel %vm716, 3e+38, %v547
      %v725 = vsel %vm717, 3e+38, %v548
      %v726 = vsel %vm718, 3e+38, %v549
      %v727 = vsel %vm719, 3e+38, %v550
      %v728 = vsel %vm551, %v720, inf
      %729 = vmin.xlane.f32.xlu0 %v728
      %v730 = vpop.xlane.xlu0 %729
      %v731 = vsel %vm551, %v721, inf
      %732 = vmin.xlane.f32.xlu0 %v731
      %v733 = vpop.xlane.xlu0 %732
      %v734 = vsel %vm551, %v722, inf
      %735 = vmin.xlane.f32.xlu0 %v734
      %v736 = vpop.xlane.xlu0 %735
      %v737 = vsel %vm551, %v723, inf
      %738 = vmin.xlane.f32.xlu0 %v737
      %v739 = vpop.xlane.xlu0 %738
      %v740 = vsel %vm551, %v724, inf
      %741 = vmin.xlane.f32.xlu0 %v740
      %v742 = vpop.xlane.xlu0 %741
      %v743 = vsel %vm551, %v725, inf
      %744 = vmin.xlane.f32.xlu0 %v743
      %v745 = vpop.xlane.xlu0 %744
      %v746 = vsel %vm551, %v726, inf
      %747 = vmin.xlane.f32.xlu0 %v746
      %v748 = vpop.xlane.xlu0 %747
      %v749 = vsel %vm551, %v727, inf
      %750 = vmin.xlane.f32.xlu0 %v749
      %v751 = vpop.xlane.xlu0 %750
      %vm752 = vcmp.le.f32.partialorder %v720, %v730
      %vm753 = vcmp.le.f32.partialorder %v721, %v733
      %vm754 = vcmp.le.f32.partialorder %v722, %v736
      %vm755 = vcmp.le.f32.partialorder %v723, %v739
      %vm756 = vcmp.le.f32.partialorder %v724, %v742
      %vm757 = vcmp.le.f32.partialorder %v725, %v745
      %vm758 = vcmp.le.f32.partialorder %v726, %v748
      %vm759 = vcmp.le.f32.partialorder %v727, %v751
      %v760 = vsel %vm752, %v534, 1073741824
      %v761 = vsel %vm753, %v534, 1073741824
      %v762 = vsel %vm754, %v534, 1073741824
      %v763 = vsel %vm755, %v534, 1073741824
      %v764 = vsel %vm756, %v534, 1073741824
      %v765 = vsel %vm757, %v534, 1073741824
      %v766 = vsel %vm758, %v534, 1073741824
      %v767 = vsel %vm759, %v534, 1073741824
      %v768 = vsel %vm551, %v760, 2147483647
      %v769 = vand.u32 %v768, 65535
      %v770 = vshra.s32 %v768, 16
      %v771 = vcvt.s32.f32 %v769
      %v772 = vcvt.s32.f32 %v770
      %773 = vmin.xlane.f32.xlu0 %v772
      %v774 = vpop.xlane.xlu0 %773
      %vm775 = vcmp.eq.f32.partialorder %v772, %v774
      %v776 = vsel %vm775, %v771, inf
      %777 = vmin.xlane.f32.xlu0 %v776
      %v778 = vpop.xlane.xlu0 %777
      %v779 = vcvt.f32.s32 %v778
      %v780 = vcvt.f32.s32 %v774
      %v781 = vshll.u32 %v780, 16
      %v782 = vadd.s32 %v781, %v779
      %v783 = vsel %vm551, %v761, 2147483647
      %v784 = vand.u32 %v783, 65535
      %v785 = vshra.s32 %v783, 16
      %v786 = vcvt.s32.f32 %v784
      %v787 = vcvt.s32.f32 %v785
      %788 = vmin.xlane.f32.xlu0 %v787
      %v789 = vpop.xlane.xlu0 %788
      %vm790 = vcmp.eq.f32.partialorder %v787, %v789
      %v791 = vsel %vm790, %v786, inf
      %792 = vmin.xlane.f32.xlu0 %v791
      %v793 = vpop.xlane.xlu0 %792
      %v794 = vcvt.f32.s32 %v793
      %v795 = vcvt.f32.s32 %v789
      %v796 = vshll.u32 %v795, 16
      %v797 = vadd.s32 %v796, %v794
      %v798 = vsel %vm551, %v762, 2147483647
      %v799 = vand.u32 %v798, 65535
      %v800 = vshra.s32 %v798, 16
      %v801 = vcvt.s32.f32 %v799
      %v802 = vcvt.s32.f32 %v800
      %803 = vmin.xlane.f32.xlu0 %v802
      %v804 = vpop.xlane.xlu0 %803
      %vm805 = vcmp.eq.f32.partialorder %v802, %v804
      %v806 = vsel %vm805, %v801, inf
      %807 = vmin.xlane.f32.xlu0 %v806
      %v808 = vpop.xlane.xlu0 %807
      %v809 = vcvt.f32.s32 %v808
      %v810 = vcvt.f32.s32 %v804
      %v811 = vshll.u32 %v810, 16
      %v812 = vadd.s32 %v811, %v809
      %v813 = vsel %vm551, %v763, 2147483647
      %v814 = vand.u32 %v813, 65535
      %v815 = vshra.s32 %v813, 16
      %v816 = vcvt.s32.f32 %v814
      %v817 = vcvt.s32.f32 %v815
      %818 = vmin.xlane.f32.xlu0 %v817
      %v819 = vpop.xlane.xlu0 %818
      %vm820 = vcmp.eq.f32.partialorder %v817, %v819
      %v821 = vsel %vm820, %v816, inf
      %822 = vmin.xlane.f32.xlu0 %v821
      %v823 = vpop.xlane.xlu0 %822
      %v824 = vcvt.f32.s32 %v823
      %v825 = vcvt.f32.s32 %v819
      %v826 = vshll.u32 %v825, 16
      %v827 = vadd.s32 %v826, %v824
      %v828 = vsel %vm551, %v764, 2147483647
      %v829 = vand.u32 %v828, 65535
      %v830 = vshra.s32 %v828, 16
      %v831 = vcvt.s32.f32 %v829
      %v832 = vcvt.s32.f32 %v830
      %833 = vmin.xlane.f32.xlu0 %v832
      %v834 = vpop.xlane.xlu0 %833
      %vm835 = vcmp.eq.f32.partialorder %v832, %v834
      %v836 = vsel %vm835, %v831, inf
      %837 = vmin.xlane.f32.xlu0 %v836
      %v838 = vpop.xlane.xlu0 %837
      %v839 = vcvt.f32.s32 %v838
      %v840 = vcvt.f32.s32 %v834
      %v841 = vshll.u32 %v840, 16
      %v842 = vadd.s32 %v841, %v839
      %v843 = vsel %vm551, %v765, 2147483647
      %v844 = vand.u32 %v843, 65535
      %v845 = vshra.s32 %v843, 16
      %v846 = vcvt.s32.f32 %v844
      %v847 = vcvt.s32.f32 %v845
      %848 = vmin.xlane.f32.xlu0 %v847
      %v849 = vpop.xlane.xlu0 %848
      %vm850 = vcmp.eq.f32.partialorder %v847, %v849
      %v851 = vsel %vm850, %v846, inf
      %852 = vmin.xlane.f32.xlu0 %v851
      %v853 = vpop.xlane.xlu0 %852
      %v854 = vcvt.f32.s32 %v853
      %v855 = vcvt.f32.s32 %v849
      %v856 = vshll.u32 %v855, 16
      %v857 = vadd.s32 %v856, %v854
      %v858 = vsel %vm551, %v766, 2147483647
      %v859 = vand.u32 %v858, 65535
      %v860 = vshra.s32 %v858, 16
      %v861 = vcvt.s32.f32 %v859
      %v862 = vcvt.s32.f32 %v860
      %863 = vmin.xlane.f32.xlu0 %v862
      %v864 = vpop.xlane.xlu0 %863
      %vm865 = vcmp.eq.f32.partialorder %v862, %v864
      %v866 = vsel %vm865, %v861, inf
      %867 = vmin.xlane.f32.xlu0 %v866
      %v868 = vpop.xlane.xlu0 %867
      %v869 = vcvt.f32.s32 %v868
      %v870 = vcvt.f32.s32 %v864
      %v871 = vshll.u32 %v870, 16
      %v872 = vadd.s32 %v871, %v869
      %v873 = vsel %vm551, %v767, 2147483647
      %v874 = vand.u32 %v873, 65535
      %v875 = vshra.s32 %v873, 16
      %v876 = vcvt.s32.f32 %v874
      %v877 = vcvt.s32.f32 %v875
      %878 = vmin.xlane.f32.xlu0 %v877
      %v879 = vpop.xlane.xlu0 %878
      %vm880 = vcmp.eq.f32.partialorder %v877, %v879
      %v881 = vsel %vm880, %v876, inf
      %882 = vmin.xlane.f32.xlu0 %v881
      %v883 = vpop.xlane.xlu0 %882
      %v884 = vcvt.f32.s32 %v883
      %v885 = vcvt.f32.s32 %v879
      %v886 = vshll.u32 %v885, 16
      %v887 = vadd.s32 %v886, %v884
      %vm888 = vcmp.eq.s32.totalorder %v534, %v782
      %vm889 = vcmp.eq.s32.totalorder %v534, %v797
      %vm890 = vcmp.eq.s32.totalorder %v534, %v812
      %vm891 = vcmp.eq.s32.totalorder %v534, %v827
      %vm892 = vcmp.eq.s32.totalorder %v534, %v842
      %vm893 = vcmp.eq.s32.totalorder %v534, %v857
      %vm894 = vcmp.eq.s32.totalorder %v534, %v872
      %vm895 = vcmp.eq.s32.totalorder %v534, %v887
      %v896 = vsel %vm888, 3e+38, %v720
      %v897 = vsel %vm889, 3e+38, %v721
      %v898 = vsel %vm890, 3e+38, %v722
      %v899 = vsel %vm891, 3e+38, %v723
      %v900 = vsel %vm892, 3e+38, %v724
      %v901 = vsel %vm893, 3e+38, %v725
      %v902 = vsel %vm894, 3e+38, %v726
      %v903 = vsel %vm895, 3e+38, %v727
      %v904 = vsel %vm551, %v896, inf
      %905 = vmin.xlane.f32.xlu0 %v904
      %v906 = vpop.xlane.xlu0 %905
      %v907 = vsel %vm551, %v897, inf
      %908 = vmin.xlane.f32.xlu0 %v907
      %v909 = vpop.xlane.xlu0 %908
      %v910 = vsel %vm551, %v898, inf
      %911 = vmin.xlane.f32.xlu0 %v910
      %v912 = vpop.xlane.xlu0 %911
      %v913 = vsel %vm551, %v899, inf
      %914 = vmin.xlane.f32.xlu0 %v913
      %v915 = vpop.xlane.xlu0 %914
      %v916 = vsel %vm551, %v900, inf
      %917 = vmin.xlane.f32.xlu0 %v916
      %v918 = vpop.xlane.xlu0 %917
      %v919 = vsel %vm551, %v901, inf
      %920 = vmin.xlane.f32.xlu0 %v919
      %v921 = vpop.xlane.xlu0 %920
      %v922 = vsel %vm551, %v902, inf
      %923 = vmin.xlane.f32.xlu0 %v922
      %v924 = vpop.xlane.xlu0 %923
      %v925 = vsel %vm551, %v903, inf
      %926 = vmin.xlane.f32.xlu0 %v925
      %v927 = vpop.xlane.xlu0 %926
      %vm928 = vcmp.le.f32.partialorder %v896, %v906
      %vm929 = vcmp.le.f32.partialorder %v897, %v909
      %vm930 = vcmp.le.f32.partialorder %v898, %v912
      %vm931 = vcmp.le.f32.partialorder %v899, %v915
      %vm932 = vcmp.le.f32.partialorder %v900, %v918
      %vm933 = vcmp.le.f32.partialorder %v901, %v921
      %vm934 = vcmp.le.f32.partialorder %v902, %v924
      %vm935 = vcmp.le.f32.partialorder %v903, %v927
      %v936 = vsel %vm928, %v534, 1073741824
      %v937 = vsel %vm929, %v534, 1073741824
      %v938 = vsel %vm930, %v534, 1073741824
      %v939 = vsel %vm931, %v534, 1073741824
      %v940 = vsel %vm932, %v534, 1073741824
      %v941 = vsel %vm933, %v534, 1073741824
      %v942 = vsel %vm934, %v534, 1073741824
      %v943 = vsel %vm935, %v534, 1073741824
      %v944 = vsel %vm551, %v936, 2147483647
      %v945 = vand.u32 %v944, 65535
      %v946 = vshra.s32 %v944, 16
      %v947 = vcvt.s32.f32 %v945
      %v948 = vcvt.s32.f32 %v946
      %949 = vmin.xlane.f32.xlu0 %v948
      %v950 = vpop.xlane.xlu0 %949
      %vm951 = vcmp.eq.f32.partialorder %v948, %v950
      %v952 = vsel %vm951, %v947, inf
      %953 = vmin.xlane.f32.xlu0 %v952
      %v954 = vpop.xlane.xlu0 %953
      %v955 = vcvt.f32.s32 %v954
      %v956 = vcvt.f32.s32 %v950
      %v957 = vshll.u32 %v956, 16
      %v958 = vadd.s32 %v957, %v955
      %v959 = vsel %vm551, %v937, 2147483647
      %v960 = vand.u32 %v959, 65535
      %v961 = vshra.s32 %v959, 16
      %v962 = vcvt.s32.f32 %v960
      %v963 = vcvt.s32.f32 %v961
      %964 = vmin.xlane.f32.xlu0 %v963
      %v965 = vpop.xlane.xlu0 %964
      %vm966 = vcmp.eq.f32.partialorder %v963, %v965
      %v967 = vsel %vm966, %v962, inf
      %968 = vmin.xlane.f32.xlu0 %v967
      %v969 = vpop.xlane.xlu0 %968
      %v970 = vcvt.f32.s32 %v969
      %v971 = vcvt.f32.s32 %v965
      %v972 = vshll.u32 %v971, 16
      %v973 = vadd.s32 %v972, %v970
      %v974 = vsel %vm551, %v938, 2147483647
      %v975 = vand.u32 %v974, 65535
      %v976 = vshra.s32 %v974, 16
      %v977 = vcvt.s32.f32 %v975
      %v978 = vcvt.s32.f32 %v976
      %979 = vmin.xlane.f32.xlu0 %v978
      %v980 = vpop.xlane.xlu0 %979
      %vm981 = vcmp.eq.f32.partialorder %v978, %v980
      %v982 = vsel %vm981, %v977, inf
      %983 = vmin.xlane.f32.xlu0 %v982
      %v984 = vpop.xlane.xlu0 %983
      %v985 = vcvt.f32.s32 %v984
      %v986 = vcvt.f32.s32 %v980
      %v987 = vshll.u32 %v986, 16
      %v988 = vadd.s32 %v987, %v985
      %v989 = vsel %vm551, %v939, 2147483647
      %v990 = vand.u32 %v989, 65535
      %v991 = vshra.s32 %v989, 16
      %v992 = vcvt.s32.f32 %v990
      %v993 = vcvt.s32.f32 %v991
      %994 = vmin.xlane.f32.xlu0 %v993
      %v995 = vpop.xlane.xlu0 %994
      %vm996 = vcmp.eq.f32.partialorder %v993, %v995
      %v997 = vsel %vm996, %v992, inf
      %998 = vmin.xlane.f32.xlu0 %v997
      %v999 = vpop.xlane.xlu0 %998
      %v1000 = vcvt.f32.s32 %v999
      %v1001 = vcvt.f32.s32 %v995
      %v1002 = vshll.u32 %v1001, 16
      %v1003 = vadd.s32 %v1002, %v1000
      %v1004 = vsel %vm551, %v940, 2147483647
      %v1005 = vand.u32 %v1004, 65535
      %v1006 = vshra.s32 %v1004, 16
      %v1007 = vcvt.s32.f32 %v1005
      %v1008 = vcvt.s32.f32 %v1006
      %1009 = vmin.xlane.f32.xlu0 %v1008
      %v1010 = vpop.xlane.xlu0 %1009
      %vm1011 = vcmp.eq.f32.partialorder %v1008, %v1010
      %v1012 = vsel %vm1011, %v1007, inf
      %1013 = vmin.xlane.f32.xlu0 %v1012
      %v1014 = vpop.xlane.xlu0 %1013
      %v1015 = vcvt.f32.s32 %v1014
      %v1016 = vcvt.f32.s32 %v1010
      %v1017 = vshll.u32 %v1016, 16
      %v1018 = vadd.s32 %v1017, %v1015
      %v1019 = vsel %vm551, %v941, 2147483647
      %v1020 = vand.u32 %v1019, 65535
      %v1021 = vshra.s32 %v1019, 16
      %v1022 = vcvt.s32.f32 %v1020
      %v1023 = vcvt.s32.f32 %v1021
      %1024 = vmin.xlane.f32.xlu0 %v1023
      %v1025 = vpop.xlane.xlu0 %1024
      %vm1026 = vcmp.eq.f32.partialorder %v1023, %v1025
      %v1027 = vsel %vm1026, %v1022, inf
      %1028 = vmin.xlane.f32.xlu0 %v1027
      %v1029 = vpop.xlane.xlu0 %1028
      %v1030 = vcvt.f32.s32 %v1029
      %v1031 = vcvt.f32.s32 %v1025
      %v1032 = vshll.u32 %v1031, 16
      %v1033 = vadd.s32 %v1032, %v1030
      %v1034 = vsel %vm551, %v942, 2147483647
      %v1035 = vand.u32 %v1034, 65535
      %v1036 = vshra.s32 %v1034, 16
      %v1037 = vcvt.s32.f32 %v1035
      %v1038 = vcvt.s32.f32 %v1036
      %1039 = vmin.xlane.f32.xlu0 %v1038
      %v1040 = vpop.xlane.xlu0 %1039
      %vm1041 = vcmp.eq.f32.partialorder %v1038, %v1040
      %v1042 = vsel %vm1041, %v1037, inf
      %1043 = vmin.xlane.f32.xlu0 %v1042
      %v1044 = vpop.xlane.xlu0 %1043
      %v1045 = vcvt.f32.s32 %v1044
      %v1046 = vcvt.f32.s32 %v1040
      %v1047 = vshll.u32 %v1046, 16
      %v1048 = vadd.s32 %v1047, %v1045
      %v1049 = vsel %vm551, %v943, 2147483647
      %v1050 = vand.u32 %v1049, 65535
      %v1051 = vshra.s32 %v1049, 16
      %v1052 = vcvt.s32.f32 %v1050
      %v1053 = vcvt.s32.f32 %v1051
      %1054 = vmin.xlane.f32.xlu0 %v1053
      %v1055 = vpop.xlane.xlu0 %1054
      %vm1056 = vcmp.eq.f32.partialorder %v1053, %v1055
      %v1057 = vsel %vm1056, %v1052, inf
      %1058 = vmin.xlane.f32.xlu0 %v1057
      %v1059 = vpop.xlane.xlu0 %1058
      %v1060 = vcvt.f32.s32 %v1059
      %v1061 = vcvt.f32.s32 %v1055
      %v1062 = vshll.u32 %v1061, 16
      %v1063 = vadd.s32 %v1062, %v1060
      %vm1064 = vcmp.eq.s32.totalorder %v534, %v958
      %vm1065 = vcmp.eq.s32.totalorder %v534, %v973
      %vm1066 = vcmp.eq.s32.totalorder %v534, %v988
      %vm1067 = vcmp.eq.s32.totalorder %v534, %v1003
      %vm1068 = vcmp.eq.s32.totalorder %v534, %v1018
      %vm1069 = vcmp.eq.s32.totalorder %v534, %v1033
      %vm1070 = vcmp.eq.s32.totalorder %v534, %v1048
      %vm1071 = vcmp.eq.s32.totalorder %v534, %v1063
      %v1072 = vsel %vm1064, 3e+38, %v896
      %v1073 = vsel %vm1065, 3e+38, %v897
      %v1074 = vsel %vm1066, 3e+38, %v898
      %v1075 = vsel %vm1067, 3e+38, %v899
      %v1076 = vsel %vm1068, 3e+38, %v900
      %v1077 = vsel %vm1069, 3e+38, %v901
      %v1078 = vsel %vm1070, 3e+38, %v902
      %v1079 = vsel %vm1071, 3e+38, %v903
      %v1080 = vsel %vm551, %v1072, inf
      %1081 = vmin.xlane.f32.xlu0 %v1080
      %v1082 = vpop.xlane.xlu0 %1081
      %v1083 = vsel %vm551, %v1073, inf
      %1084 = vmin.xlane.f32.xlu0 %v1083
      %v1085 = vpop.xlane.xlu0 %1084
      %v1086 = vsel %vm551, %v1074, inf
      %1087 = vmin.xlane.f32.xlu0 %v1086
      %v1088 = vpop.xlane.xlu0 %1087
      %v1089 = vsel %vm551, %v1075, inf
      %1090 = vmin.xlane.f32.xlu0 %v1089
      %v1091 = vpop.xlane.xlu0 %1090
      %v1092 = vsel %vm551, %v1076, inf
      %1093 = vmin.xlane.f32.xlu0 %v1092
      %v1094 = vpop.xlane.xlu0 %1093
      %v1095 = vsel %vm551, %v1077, inf
      %1096 = vmin.xlane.f32.xlu0 %v1095
      %v1097 = vpop.xlane.xlu0 %1096
      %v1098 = vsel %vm551, %v1078, inf
      %1099 = vmin.xlane.f32.xlu0 %v1098
      %v1100 = vpop.xlane.xlu0 %1099
      %v1101 = vsel %vm551, %v1079, inf
      %1102 = vmin.xlane.f32.xlu0 %v1101
      %v1103 = vpop.xlane.xlu0 %1102
      %vm1104 = vcmp.le.f32.partialorder %v1072, %v1082
      %vm1105 = vcmp.le.f32.partialorder %v1073, %v1085
      %vm1106 = vcmp.le.f32.partialorder %v1074, %v1088
      %vm1107 = vcmp.le.f32.partialorder %v1075, %v1091
      %vm1108 = vcmp.le.f32.partialorder %v1076, %v1094
      %vm1109 = vcmp.le.f32.partialorder %v1077, %v1097
      %vm1110 = vcmp.le.f32.partialorder %v1078, %v1100
      %vm1111 = vcmp.le.f32.partialorder %v1079, %v1103
      %v1112 = vsel %vm1104, %v534, 1073741824
      %v1113 = vsel %vm1105, %v534, 1073741824
      %v1114 = vsel %vm1106, %v534, 1073741824
      %v1115 = vsel %vm1107, %v534, 1073741824
      %v1116 = vsel %vm1108, %v534, 1073741824
      %v1117 = vsel %vm1109, %v534, 1073741824
      %v1118 = vsel %vm1110, %v534, 1073741824
      %v1119 = vsel %vm1111, %v534, 1073741824
      %v1120 = vsel %vm551, %v1112, 2147483647
      %v1121 = vand.u32 %v1120, 65535
      %v1122 = vshra.s32 %v1120, 16
      %v1123 = vcvt.s32.f32 %v1121
      %v1124 = vcvt.s32.f32 %v1122
      %1125 = vmin.xlane.f32.xlu0 %v1124
      %v1126 = vpop.xlane.xlu0 %1125
      %vm1127 = vcmp.eq.f32.partialorder %v1124, %v1126
      %v1128 = vsel %vm1127, %v1123, inf
      %1129 = vmin.xlane.f32.xlu0 %v1128
      %v1130 = vpop.xlane.xlu0 %1129
      %v1131 = vcvt.f32.s32 %v1130
      %v1132 = vcvt.f32.s32 %v1126
      %v1133 = vshll.u32 %v1132, 16
      %v1134 = vadd.s32 %v1133, %v1131
      %v1135 = vsel %vm551, %v1113, 2147483647
      %v1136 = vand.u32 %v1135, 65535
      %v1137 = vshra.s32 %v1135, 16
      %v1138 = vcvt.s32.f32 %v1136
      %v1139 = vcvt.s32.f32 %v1137
      %1140 = vmin.xlane.f32.xlu0 %v1139
      %v1141 = vpop.xlane.xlu0 %1140
      %vm1142 = vcmp.eq.f32.partialorder %v1139, %v1141
      %v1143 = vsel %vm1142, %v1138, inf
      %1144 = vmin.xlane.f32.xlu0 %v1143
      %v1145 = vpop.xlane.xlu0 %1144
      %v1146 = vcvt.f32.s32 %v1145
      %v1147 = vcvt.f32.s32 %v1141
      %v1148 = vshll.u32 %v1147, 16
      %v1149 = vadd.s32 %v1148, %v1146
      %v1150 = vsel %vm551, %v1114, 2147483647
      %v1151 = vand.u32 %v1150, 65535
      %v1152 = vshra.s32 %v1150, 16
      %v1153 = vcvt.s32.f32 %v1151
      %v1154 = vcvt.s32.f32 %v1152
      %1155 = vmin.xlane.f32.xlu0 %v1154
      %v1156 = vpop.xlane.xlu0 %1155
      %vm1157 = vcmp.eq.f32.partialorder %v1154, %v1156
      %v1158 = vsel %vm1157, %v1153, inf
      %1159 = vmin.xlane.f32.xlu0 %v1158
      %v1160 = vpop.xlane.xlu0 %1159
      %v1161 = vcvt.f32.s32 %v1160
      %v1162 = vcvt.f32.s32 %v1156
      %v1163 = vshll.u32 %v1162, 16
      %v1164 = vadd.s32 %v1163, %v1161
      %v1165 = vsel %vm551, %v1115, 2147483647
      %v1166 = vand.u32 %v1165, 65535
      %v1167 = vshra.s32 %v1165, 16
      %v1168 = vcvt.s32.f32 %v1166
      %v1169 = vcvt.s32.f32 %v1167
      %1170 = vmin.xlane.f32.xlu0 %v1169
      %v1171 = vpop.xlane.xlu0 %1170
      %vm1172 = vcmp.eq.f32.partialorder %v1169, %v1171
      %v1173 = vsel %vm1172, %v1168, inf
      %1174 = vmin.xlane.f32.xlu0 %v1173
      %v1175 = vpop.xlane.xlu0 %1174
      %v1176 = vcvt.f32.s32 %v1175
      %v1177 = vcvt.f32.s32 %v1171
      %v1178 = vshll.u32 %v1177, 16
      %v1179 = vadd.s32 %v1178, %v1176
      %v1180 = vsel %vm551, %v1116, 2147483647
      %v1181 = vand.u32 %v1180, 65535
      %v1182 = vshra.s32 %v1180, 16
      %v1183 = vcvt.s32.f32 %v1181
      %v1184 = vcvt.s32.f32 %v1182
      %1185 = vmin.xlane.f32.xlu0 %v1184
      %v1186 = vpop.xlane.xlu0 %1185
      %vm1187 = vcmp.eq.f32.partialorder %v1184, %v1186
      %v1188 = vsel %vm1187, %v1183, inf
      %1189 = vmin.xlane.f32.xlu0 %v1188
      %v1190 = vpop.xlane.xlu0 %1189
      %v1191 = vcvt.f32.s32 %v1190
      %v1192 = vcvt.f32.s32 %v1186
      %v1193 = vshll.u32 %v1192, 16
      %v1194 = vadd.s32 %v1193, %v1191
      %v1195 = vsel %vm551, %v1117, 2147483647
      %v1196 = vand.u32 %v1195, 65535
      %v1197 = vshra.s32 %v1195, 16
      %v1198 = vcvt.s32.f32 %v1196
      %v1199 = vcvt.s32.f32 %v1197
      %1200 = vmin.xlane.f32.xlu0 %v1199
      %v1201 = vpop.xlane.xlu0 %1200
      %vm1202 = vcmp.eq.f32.partialorder %v1199, %v1201
      %v1203 = vsel %vm1202, %v1198, inf
      %1204 = vmin.xlane.f32.xlu0 %v1203
      %v1205 = vpop.xlane.xlu0 %1204
      %v1206 = vcvt.f32.s32 %v1205
      %v1207 = vcvt.f32.s32 %v1201
      %v1208 = vshll.u32 %v1207, 16
      %v1209 = vadd.s32 %v1208, %v1206
      %v1210 = vsel %vm551, %v1118, 2147483647
      %v1211 = vand.u32 %v1210, 65535
      %v1212 = vshra.s32 %v1210, 16
      %v1213 = vcvt.s32.f32 %v1211
      %v1214 = vcvt.s32.f32 %v1212
      %1215 = vmin.xlane.f32.xlu0 %v1214
      %v1216 = vpop.xlane.xlu0 %1215
      %vm1217 = vcmp.eq.f32.partialorder %v1214, %v1216
      %v1218 = vsel %vm1217, %v1213, inf
      %1219 = vmin.xlane.f32.xlu0 %v1218
      %v1220 = vpop.xlane.xlu0 %1219
      %v1221 = vcvt.f32.s32 %v1220
      %v1222 = vcvt.f32.s32 %v1216
      %v1223 = vshll.u32 %v1222, 16
      %v1224 = vadd.s32 %v1223, %v1221
      %v1225 = vsel %vm551, %v1119, 2147483647
      %v1226 = vand.u32 %v1225, 65535
      %v1227 = vshra.s32 %v1225, 16
      %v1228 = vcvt.s32.f32 %v1226
      %v1229 = vcvt.s32.f32 %v1227
      %1230 = vmin.xlane.f32.xlu0 %v1229
      %v1231 = vpop.xlane.xlu0 %1230
      %vm1232 = vcmp.eq.f32.partialorder %v1229, %v1231
      %v1233 = vsel %vm1232, %v1228, inf
      %1234 = vmin.xlane.f32.xlu0 %v1233
      %v1235 = vpop.xlane.xlu0 %1234
      %v1236 = vcvt.f32.s32 %v1235
      %v1237 = vcvt.f32.s32 %v1231
      %v1238 = vshll.u32 %v1237, 16
      %v1239 = vadd.s32 %v1238, %v1236
      %vm1240 = vcmp.eq.s32.totalorder %v534, %v1134
      %vm1241 = vcmp.eq.s32.totalorder %v534, %v1149
      %vm1242 = vcmp.eq.s32.totalorder %v534, %v1164
      %vm1243 = vcmp.eq.s32.totalorder %v534, %v1179
      %vm1244 = vcmp.eq.s32.totalorder %v534, %v1194
      %vm1245 = vcmp.eq.s32.totalorder %v534, %v1209
      %vm1246 = vcmp.eq.s32.totalorder %v534, %v1224
      %vm1247 = vcmp.eq.s32.totalorder %v534, %v1239
      %v1248 = vsel %vm1240, 3e+38, %v1072
      %v1249 = vsel %vm1241, 3e+38, %v1073
      %v1250 = vsel %vm1242, 3e+38, %v1074
      %v1251 = vsel %vm1243, 3e+38, %v1075
      %v1252 = vsel %vm1244, 3e+38, %v1076
      %v1253 = vsel %vm1245, 3e+38, %v1077
      %v1254 = vsel %vm1246, 3e+38, %v1078
      %v1255 = vsel %vm1247, 3e+38, %v1079
      %v1256 = vsel %vm551, %v1248, inf
      %1257 = vmin.xlane.f32.xlu0 %v1256
      %v1258 = vpop.xlane.xlu0 %1257
      %v1259 = vsel %vm551, %v1249, inf
      %1260 = vmin.xlane.f32.xlu0 %v1259
      %v1261 = vpop.xlane.xlu0 %1260
      %v1262 = vsel %vm551, %v1250, inf
      %1263 = vmin.xlane.f32.xlu0 %v1262
      %v1264 = vpop.xlane.xlu0 %1263
      %v1265 = vsel %vm551, %v1251, inf
      %1266 = vmin.xlane.f32.xlu0 %v1265
      %v1267 = vpop.xlane.xlu0 %1266
      %v1268 = vsel %vm551, %v1252, inf
      %1269 = vmin.xlane.f32.xlu0 %v1268
      %v1270 = vpop.xlane.xlu0 %1269
      %v1271 = vsel %vm551, %v1253, inf
      %1272 = vmin.xlane.f32.xlu0 %v1271
      %v1273 = vpop.xlane.xlu0 %1272
      %v1274 = vsel %vm551, %v1254, inf
      %1275 = vmin.xlane.f32.xlu0 %v1274
      %v1276 = vpop.xlane.xlu0 %1275
      %v1277 = vsel %vm551, %v1255, inf
      %1278 = vmin.xlane.f32.xlu0 %v1277
      %v1279 = vpop.xlane.xlu0 %1278
      %vm1280 = vcmp.le.f32.partialorder %v1248, %v1258
      %vm1281 = vcmp.le.f32.partialorder %v1249, %v1261
      %vm1282 = vcmp.le.f32.partialorder %v1250, %v1264
      %vm1283 = vcmp.le.f32.partialorder %v1251, %v1267
      %vm1284 = vcmp.le.f32.partialorder %v1252, %v1270
      %vm1285 = vcmp.le.f32.partialorder %v1253, %v1273
      %vm1286 = vcmp.le.f32.partialorder %v1254, %v1276
      %vm1287 = vcmp.le.f32.partialorder %v1255, %v1279
      %v1288 = vsel %vm1280, %v534, 1073741824
      %v1289 = vsel %vm1281, %v534, 1073741824
      %v1290 = vsel %vm1282, %v534, 1073741824
      %v1291 = vsel %vm1283, %v534, 1073741824
      %v1292 = vsel %vm1284, %v534, 1073741824
      %v1293 = vsel %vm1285, %v534, 1073741824
      %v1294 = vsel %vm1286, %v534, 1073741824
      %v1295 = vsel %vm1287, %v534, 1073741824
      %v1296 = vsel %vm551, %v1288, 2147483647
      %v1297 = vand.u32 %v1296, 65535
      %v1298 = vshra.s32 %v1296, 16
      %v1299 = vcvt.s32.f32 %v1297
      %v1300 = vcvt.s32.f32 %v1298
      %1301 = vmin.xlane.f32.xlu0 %v1300
      %v1302 = vpop.xlane.xlu0 %1301
      %vm1303 = vcmp.eq.f32.partialorder %v1300, %v1302
      %v1304 = vsel %vm1303, %v1299, inf
      %1305 = vmin.xlane.f32.xlu0 %v1304
      %v1306 = vpop.xlane.xlu0 %1305
      %v1307 = vcvt.f32.s32 %v1306
      %v1308 = vcvt.f32.s32 %v1302
      %v1309 = vshll.u32 %v1308, 16
      %v1310 = vadd.s32 %v1309, %v1307
      %v1311 = vsel %vm551, %v1289, 2147483647
      %v1312 = vand.u32 %v1311, 65535
      %v1313 = vshra.s32 %v1311, 16
      %v1314 = vcvt.s32.f32 %v1312
      %v1315 = vcvt.s32.f32 %v1313
      %1316 = vmin.xlane.f32.xlu0 %v1315
      %v1317 = vpop.xlane.xlu0 %1316
      %vm1318 = vcmp.eq.f32.partialorder %v1315, %v1317
      %v1319 = vsel %vm1318, %v1314, inf
      %1320 = vmin.xlane.f32.xlu0 %v1319
      %v1321 = vpop.xlane.xlu0 %1320
      %v1322 = vcvt.f32.s32 %v1321
      %v1323 = vcvt.f32.s32 %v1317
      %v1324 = vshll.u32 %v1323, 16
      %v1325 = vadd.s32 %v1324, %v1322
      %v1326 = vsel %vm551, %v1290, 2147483647
      %v1327 = vand.u32 %v1326, 65535
      %v1328 = vshra.s32 %v1326, 16
      %v1329 = vcvt.s32.f32 %v1327
      %v1330 = vcvt.s32.f32 %v1328
      %1331 = vmin.xlane.f32.xlu0 %v1330
      %v1332 = vpop.xlane.xlu0 %1331
      %vm1333 = vcmp.eq.f32.partialorder %v1330, %v1332
      %v1334 = vsel %vm1333, %v1329, inf
      %1335 = vmin.xlane.f32.xlu0 %v1334
      %v1336 = vpop.xlane.xlu0 %1335
      %v1337 = vcvt.f32.s32 %v1336
      %v1338 = vcvt.f32.s32 %v1332
      %v1339 = vshll.u32 %v1338, 16
      %v1340 = vadd.s32 %v1339, %v1337
      %v1341 = vsel %vm551, %v1291, 2147483647
      %v1342 = vand.u32 %v1341, 65535
      %v1343 = vshra.s32 %v1341, 16
      %v1344 = vcvt.s32.f32 %v1342
      %v1345 = vcvt.s32.f32 %v1343
      %1346 = vmin.xlane.f32.xlu0 %v1345
      %v1347 = vpop.xlane.xlu0 %1346
      %vm1348 = vcmp.eq.f32.partialorder %v1345, %v1347
      %v1349 = vsel %vm1348, %v1344, inf
      %1350 = vmin.xlane.f32.xlu0 %v1349
      %v1351 = vpop.xlane.xlu0 %1350
      %v1352 = vcvt.f32.s32 %v1351
      %v1353 = vcvt.f32.s32 %v1347
      %v1354 = vshll.u32 %v1353, 16
      %v1355 = vadd.s32 %v1354, %v1352
      %v1356 = vsel %vm551, %v1292, 2147483647
      %v1357 = vand.u32 %v1356, 65535
      %v1358 = vshra.s32 %v1356, 16
      %v1359 = vcvt.s32.f32 %v1357
      %v1360 = vcvt.s32.f32 %v1358
      %1361 = vmin.xlane.f32.xlu0 %v1360
      %v1362 = vpop.xlane.xlu0 %1361
      %vm1363 = vcmp.eq.f32.partialorder %v1360, %v1362
      %v1364 = vsel %vm1363, %v1359, inf
      %1365 = vmin.xlane.f32.xlu0 %v1364
      %v1366 = vpop.xlane.xlu0 %1365
      %v1367 = vcvt.f32.s32 %v1366
      %v1368 = vcvt.f32.s32 %v1362
      %v1369 = vshll.u32 %v1368, 16
      %v1370 = vadd.s32 %v1369, %v1367
      %v1371 = vsel %vm551, %v1293, 2147483647
      %v1372 = vand.u32 %v1371, 65535
      %v1373 = vshra.s32 %v1371, 16
      %v1374 = vcvt.s32.f32 %v1372
      %v1375 = vcvt.s32.f32 %v1373
      %1376 = vmin.xlane.f32.xlu0 %v1375
      %v1377 = vpop.xlane.xlu0 %1376
      %vm1378 = vcmp.eq.f32.partialorder %v1375, %v1377
      %v1379 = vsel %vm1378, %v1374, inf
      %1380 = vmin.xlane.f32.xlu0 %v1379
      %v1381 = vpop.xlane.xlu0 %1380
      %v1382 = vcvt.f32.s32 %v1381
      %v1383 = vcvt.f32.s32 %v1377
      %v1384 = vshll.u32 %v1383, 16
      %v1385 = vadd.s32 %v1384, %v1382
      %v1386 = vsel %vm551, %v1294, 2147483647
      %v1387 = vand.u32 %v1386, 65535
      %v1388 = vshra.s32 %v1386, 16
      %v1389 = vcvt.s32.f32 %v1387
      %v1390 = vcvt.s32.f32 %v1388
      %1391 = vmin.xlane.f32.xlu0 %v1390
      %v1392 = vpop.xlane.xlu0 %1391
      %vm1393 = vcmp.eq.f32.partialorder %v1390, %v1392
      %v1394 = vsel %vm1393, %v1389, inf
      %1395 = vmin.xlane.f32.xlu0 %v1394
      %v1396 = vpop.xlane.xlu0 %1395
      %v1397 = vcvt.f32.s32 %v1396
      %v1398 = vcvt.f32.s32 %v1392
      %v1399 = vshll.u32 %v1398, 16
      %v1400 = vadd.s32 %v1399, %v1397
      %v1401 = vsel %vm551, %v1295, 2147483647
      %v1402 = vand.u32 %v1401, 65535
      %v1403 = vshra.s32 %v1401, 16
      %v1404 = vcvt.s32.f32 %v1402
      %v1405 = vcvt.s32.f32 %v1403
      %1406 = vmin.xlane.f32.xlu0 %v1405
      %v1407 = vpop.xlane.xlu0 %1406
      %vm1408 = vcmp.eq.f32.partialorder %v1405, %v1407
      %v1409 = vsel %vm1408, %v1404, inf
      %1410 = vmin.xlane.f32.xlu0 %v1409
      %v1411 = vpop.xlane.xlu0 %1410
      %v1412 = vcvt.f32.s32 %v1411
      %v1413 = vcvt.f32.s32 %v1407
      %v1414 = vshll.u32 %v1413, 16
      %v1415 = vadd.s32 %v1414, %v1412
      %vm1416 = vcmp.eq.s32.totalorder %v534, %v1310
      %vm1417 = vcmp.eq.s32.totalorder %v534, %v1325
      %vm1418 = vcmp.eq.s32.totalorder %v534, %v1340
      %vm1419 = vcmp.eq.s32.totalorder %v534, %v1355
      %vm1420 = vcmp.eq.s32.totalorder %v534, %v1370
      %vm1421 = vcmp.eq.s32.totalorder %v534, %v1385
      %vm1422 = vcmp.eq.s32.totalorder %v534, %v1400
      %vm1423 = vcmp.eq.s32.totalorder %v534, %v1415
      %v1424 = vsel %vm1416, 3e+38, %v1248
      %v1425 = vsel %vm1417, 3e+38, %v1249
      %v1426 = vsel %vm1418, 3e+38, %v1250
      %v1427 = vsel %vm1419, 3e+38, %v1251
      %v1428 = vsel %vm1420, 3e+38, %v1252
      %v1429 = vsel %vm1421, 3e+38, %v1253
      %v1430 = vsel %vm1422, 3e+38, %v1254
      %v1431 = vsel %vm1423, 3e+38, %v1255
      %v1432 = vsel %vm551, %v1424, inf
      %1433 = vmin.xlane.f32.xlu0 %v1432
      %v1434 = vpop.xlane.xlu0 %1433
      %v1435 = vsel %vm551, %v1425, inf
      %1436 = vmin.xlane.f32.xlu0 %v1435
      %v1437 = vpop.xlane.xlu0 %1436
      %v1438 = vsel %vm551, %v1426, inf
      %1439 = vmin.xlane.f32.xlu0 %v1438
      %v1440 = vpop.xlane.xlu0 %1439
      %v1441 = vsel %vm551, %v1427, inf
      %1442 = vmin.xlane.f32.xlu0 %v1441
      %v1443 = vpop.xlane.xlu0 %1442
      %v1444 = vsel %vm551, %v1428, inf
      %1445 = vmin.xlane.f32.xlu0 %v1444
      %v1446 = vpop.xlane.xlu0 %1445
      %v1447 = vsel %vm551, %v1429, inf
      %1448 = vmin.xlane.f32.xlu0 %v1447
      %v1449 = vpop.xlane.xlu0 %1448
      %v1450 = vsel %vm551, %v1430, inf
      %1451 = vmin.xlane.f32.xlu0 %v1450
      %v1452 = vpop.xlane.xlu0 %1451
      %v1453 = vsel %vm551, %v1431, inf
      %1454 = vmin.xlane.f32.xlu0 %v1453
      %v1455 = vpop.xlane.xlu0 %1454
      %vm1456 = vcmp.le.f32.partialorder %v1424, %v1434
      %vm1457 = vcmp.le.f32.partialorder %v1425, %v1437
      %vm1458 = vcmp.le.f32.partialorder %v1426, %v1440
      %vm1459 = vcmp.le.f32.partialorder %v1427, %v1443
      %vm1460 = vcmp.le.f32.partialorder %v1428, %v1446
      %vm1461 = vcmp.le.f32.partialorder %v1429, %v1449
      %vm1462 = vcmp.le.f32.partialorder %v1430, %v1452
      %vm1463 = vcmp.le.f32.partialorder %v1431, %v1455
      %v1464 = vsel %vm1456, %v534, 1073741824
      %v1465 = vsel %vm1457, %v534, 1073741824
      %v1466 = vsel %vm1458, %v534, 1073741824
      %v1467 = vsel %vm1459, %v534, 1073741824
      %v1468 = vsel %vm1460, %v534, 1073741824
      %v1469 = vsel %vm1461, %v534, 1073741824
      %v1470 = vsel %vm1462, %v534, 1073741824
      %v1471 = vsel %vm1463, %v534, 1073741824
      %v1472 = vsel %vm551, %v1464, 2147483647
      %v1473 = vand.u32 %v1472, 65535
      %v1474 = vshra.s32 %v1472, 16
      %v1475 = vcvt.s32.f32 %v1473
      %v1476 = vcvt.s32.f32 %v1474
      %1477 = vmin.xlane.f32.xlu0 %v1476
      %v1478 = vpop.xlane.xlu0 %1477
      %vm1479 = vcmp.eq.f32.partialorder %v1476, %v1478
      %v1480 = vsel %vm1479, %v1475, inf
      %1481 = vmin.xlane.f32.xlu0 %v1480
      %v1482 = vpop.xlane.xlu0 %1481
      %v1483 = vcvt.f32.s32 %v1482
      %v1484 = vcvt.f32.s32 %v1478
      %v1485 = vshll.u32 %v1484, 16
      %v1486 = vadd.s32 %v1485, %v1483
      %v1487 = vsel %vm551, %v1465, 2147483647
      %v1488 = vand.u32 %v1487, 65535
      %v1489 = vshra.s32 %v1487, 16
      %v1490 = vcvt.s32.f32 %v1488
      %v1491 = vcvt.s32.f32 %v1489
      %1492 = vmin.xlane.f32.xlu0 %v1491
      %v1493 = vpop.xlane.xlu0 %1492
      %vm1494 = vcmp.eq.f32.partialorder %v1491, %v1493
      %v1495 = vsel %vm1494, %v1490, inf
      %1496 = vmin.xlane.f32.xlu0 %v1495
      %v1497 = vpop.xlane.xlu0 %1496
      %v1498 = vcvt.f32.s32 %v1497
      %v1499 = vcvt.f32.s32 %v1493
      %v1500 = vshll.u32 %v1499, 16
      %v1501 = vadd.s32 %v1500, %v1498
      %v1502 = vsel %vm551, %v1466, 2147483647
      %v1503 = vand.u32 %v1502, 65535
      %v1504 = vshra.s32 %v1502, 16
      %v1505 = vcvt.s32.f32 %v1503
      %v1506 = vcvt.s32.f32 %v1504
      %1507 = vmin.xlane.f32.xlu0 %v1506
      %v1508 = vpop.xlane.xlu0 %1507
      %vm1509 = vcmp.eq.f32.partialorder %v1506, %v1508
      %v1510 = vsel %vm1509, %v1505, inf
      %1511 = vmin.xlane.f32.xlu0 %v1510
      %v1512 = vpop.xlane.xlu0 %1511
      %v1513 = vcvt.f32.s32 %v1512
      %v1514 = vcvt.f32.s32 %v1508
      %v1515 = vshll.u32 %v1514, 16
      %v1516 = vadd.s32 %v1515, %v1513
      %v1517 = vsel %vm551, %v1467, 2147483647
      %v1518 = vand.u32 %v1517, 65535
      %v1519 = vshra.s32 %v1517, 16
      %v1520 = vcvt.s32.f32 %v1518
      %v1521 = vcvt.s32.f32 %v1519
      %1522 = vmin.xlane.f32.xlu0 %v1521
      %v1523 = vpop.xlane.xlu0 %1522
      %vm1524 = vcmp.eq.f32.partialorder %v1521, %v1523
      %v1525 = vsel %vm1524, %v1520, inf
      %1526 = vmin.xlane.f32.xlu0 %v1525
      %v1527 = vpop.xlane.xlu0 %1526
      %v1528 = vcvt.f32.s32 %v1527
      %v1529 = vcvt.f32.s32 %v1523
      %v1530 = vshll.u32 %v1529, 16
      %v1531 = vadd.s32 %v1530, %v1528
      %v1532 = vsel %vm551, %v1468, 2147483647
      %v1533 = vand.u32 %v1532, 65535
      %v1534 = vshra.s32 %v1532, 16
      %v1535 = vcvt.s32.f32 %v1533
      %v1536 = vcvt.s32.f32 %v1534
      %1537 = vmin.xlane.f32.xlu0 %v1536
      %v1538 = vpop.xlane.xlu0 %1537
      %vm1539 = vcmp.eq.f32.partialorder %v1536, %v1538
      %v1540 = vsel %vm1539, %v1535, inf
      %1541 = vmin.xlane.f32.xlu0 %v1540
      %v1542 = vpop.xlane.xlu0 %1541
      %v1543 = vcvt.f32.s32 %v1542
      %v1544 = vcvt.f32.s32 %v1538
      %v1545 = vshll.u32 %v1544, 16
      %v1546 = vadd.s32 %v1545, %v1543
      %v1547 = vsel %vm551, %v1469, 2147483647
      %v1548 = vand.u32 %v1547, 65535
      %v1549 = vshra.s32 %v1547, 16
      %v1550 = vcvt.s32.f32 %v1548
      %v1551 = vcvt.s32.f32 %v1549
      %1552 = vmin.xlane.f32.xlu0 %v1551
      %v1553 = vpop.xlane.xlu0 %1552
      %vm1554 = vcmp.eq.f32.partialorder %v1551, %v1553
      %v1555 = vsel %vm1554, %v1550, inf
      %1556 = vmin.xlane.f32.xlu0 %v1555
      %v1557 = vpop.xlane.xlu0 %1556
      %v1558 = vcvt.f32.s32 %v1557
      %v1559 = vcvt.f32.s32 %v1553
      %v1560 = vshll.u32 %v1559, 16
      %v1561 = vadd.s32 %v1560, %v1558
      %v1562 = vsel %vm551, %v1470, 2147483647
      %v1563 = vand.u32 %v1562, 65535
      %v1564 = vshra.s32 %v1562, 16
      %v1565 = vcvt.s32.f32 %v1563
      %v1566 = vcvt.s32.f32 %v1564
      %1567 = vmin.xlane.f32.xlu0 %v1566
      %v1568 = vpop.xlane.xlu0 %1567
      %vm1569 = vcmp.eq.f32.partialorder %v1566, %v1568
      %v1570 = vsel %vm1569, %v1565, inf
      %1571 = vmin.xlane.f32.xlu0 %v1570
      %v1572 = vpop.xlane.xlu0 %1571
      %v1573 = vcvt.f32.s32 %v1572
      %v1574 = vcvt.f32.s32 %v1568
      %v1575 = vshll.u32 %v1574, 16
      %v1576 = vadd.s32 %v1575, %v1573
      %v1577 = vsel %vm551, %v1471, 2147483647
      %v1578 = vand.u32 %v1577, 65535
      %v1579 = vshra.s32 %v1577, 16
      %v1580 = vcvt.s32.f32 %v1578
      %v1581 = vcvt.s32.f32 %v1579
      %1582 = vmin.xlane.f32.xlu0 %v1581
      %v1583 = vpop.xlane.xlu0 %1582
      %vm1584 = vcmp.eq.f32.partialorder %v1581, %v1583
      %v1585 = vsel %vm1584, %v1580, inf
      %1586 = vmin.xlane.f32.xlu0 %v1585
      %v1587 = vpop.xlane.xlu0 %1586
      %v1588 = vcvt.f32.s32 %v1587
      %v1589 = vcvt.f32.s32 %v1583
      %v1590 = vshll.u32 %v1589, 16
      %v1591 = vadd.s32 %v1590, %v1588
      %vm1592 = vcmp.eq.s32.totalorder %v534, %v1486
      %vm1593 = vcmp.eq.s32.totalorder %v534, %v1501
      %vm1594 = vcmp.eq.s32.totalorder %v534, %v1516
      %vm1595 = vcmp.eq.s32.totalorder %v534, %v1531
      %vm1596 = vcmp.eq.s32.totalorder %v534, %v1546
      %vm1597 = vcmp.eq.s32.totalorder %v534, %v1561
      %vm1598 = vcmp.eq.s32.totalorder %v534, %v1576
      %vm1599 = vcmp.eq.s32.totalorder %v534, %v1591
      %v1600 = vsel %vm1592, 3e+38, %v1424
      %v1601 = vsel %vm1593, 3e+38, %v1425
      %v1602 = vsel %vm1594, 3e+38, %v1426
      %v1603 = vsel %vm1595, 3e+38, %v1427
      %v1604 = vsel %vm1596, 3e+38, %v1428
      %v1605 = vsel %vm1597, 3e+38, %v1429
      %v1606 = vsel %vm1598, 3e+38, %v1430
      %v1607 = vsel %vm1599, 3e+38, %v1431
      %v1608 = vsel %vm551, %v1600, inf
      %1609 = vmin.xlane.f32.xlu0 %v1608
      %v1610 = vpop.xlane.xlu0 %1609
      %v1611 = vsel %vm551, %v1601, inf
      %1612 = vmin.xlane.f32.xlu0 %v1611
      %v1613 = vpop.xlane.xlu0 %1612
      %v1614 = vsel %vm551, %v1602, inf
      %1615 = vmin.xlane.f32.xlu0 %v1614
      %v1616 = vpop.xlane.xlu0 %1615
      %v1617 = vsel %vm551, %v1603, inf
      %1618 = vmin.xlane.f32.xlu0 %v1617
      %v1619 = vpop.xlane.xlu0 %1618
      %v1620 = vsel %vm551, %v1604, inf
      %1621 = vmin.xlane.f32.xlu0 %v1620
      %v1622 = vpop.xlane.xlu0 %1621
      %v1623 = vsel %vm551, %v1605, inf
      %1624 = vmin.xlane.f32.xlu0 %v1623
      %v1625 = vpop.xlane.xlu0 %1624
      %v1626 = vsel %vm551, %v1606, inf
      %1627 = vmin.xlane.f32.xlu0 %v1626
      %v1628 = vpop.xlane.xlu0 %1627
      %v1629 = vsel %vm551, %v1607, inf
      %1630 = vmin.xlane.f32.xlu0 %v1629
      %v1631 = vpop.xlane.xlu0 %1630
      %vm1632 = vcmp.le.f32.partialorder %v1600, %v1610
      %vm1633 = vcmp.le.f32.partialorder %v1601, %v1613
      %vm1634 = vcmp.le.f32.partialorder %v1602, %v1616
      %vm1635 = vcmp.le.f32.partialorder %v1603, %v1619
      %vm1636 = vcmp.le.f32.partialorder %v1604, %v1622
      %vm1637 = vcmp.le.f32.partialorder %v1605, %v1625
      %vm1638 = vcmp.le.f32.partialorder %v1606, %v1628
      %vm1639 = vcmp.le.f32.partialorder %v1607, %v1631
      %v1640 = vsel %vm1632, %v534, 1073741824
      %v1641 = vsel %vm1633, %v534, 1073741824
      %v1642 = vsel %vm1634, %v534, 1073741824
      %v1643 = vsel %vm1635, %v534, 1073741824
      %v1644 = vsel %vm1636, %v534, 1073741824
      %v1645 = vsel %vm1637, %v534, 1073741824
      %v1646 = vsel %vm1638, %v534, 1073741824
      %v1647 = vsel %vm1639, %v534, 1073741824
      %v1648 = vsel %vm551, %v1640, 2147483647
      %v1649 = vand.u32 %v1648, 65535
      %v1650 = vshra.s32 %v1648, 16
      %v1651 = vcvt.s32.f32 %v1649
      %v1652 = vcvt.s32.f32 %v1650
      %1653 = vmin.xlane.f32.xlu0 %v1652
      %v1654 = vpop.xlane.xlu0 %1653
      %vm1655 = vcmp.eq.f32.partialorder %v1652, %v1654
      %v1656 = vsel %vm1655, %v1651, inf
      %1657 = vmin.xlane.f32.xlu0 %v1656
      %v1658 = vpop.xlane.xlu0 %1657
      %v1659 = vcvt.f32.s32 %v1658
      %v1660 = vcvt.f32.s32 %v1654
      %v1661 = vshll.u32 %v1660, 16
      %v1662 = vadd.s32 %v1661, %v1659
      %v1663 = vsel %vm551, %v1641, 2147483647
      %v1664 = vand.u32 %v1663, 65535
      %v1665 = vshra.s32 %v1663, 16
      %v1666 = vcvt.s32.f32 %v1664
      %v1667 = vcvt.s32.f32 %v1665
      %1668 = vmin.xlane.f32.xlu0 %v1667
      %v1669 = vpop.xlane.xlu0 %1668
      %vm1670 = vcmp.eq.f32.partialorder %v1667, %v1669
      %v1671 = vsel %vm1670, %v1666, inf
      %1672 = vmin.xlane.f32.xlu0 %v1671
      %v1673 = vpop.xlane.xlu0 %1672
      %v1674 = vcvt.f32.s32 %v1673
      %v1675 = vcvt.f32.s32 %v1669
      %v1676 = vshll.u32 %v1675, 16
      %v1677 = vadd.s32 %v1676, %v1674
      %v1678 = vsel %vm551, %v1642, 2147483647
      %v1679 = vand.u32 %v1678, 65535
      %v1680 = vshra.s32 %v1678, 16
      %v1681 = vcvt.s32.f32 %v1679
      %v1682 = vcvt.s32.f32 %v1680
      %1683 = vmin.xlane.f32.xlu0 %v1682
      %v1684 = vpop.xlane.xlu0 %1683
      %vm1685 = vcmp.eq.f32.partialorder %v1682, %v1684
      %v1686 = vsel %vm1685, %v1681, inf
      %1687 = vmin.xlane.f32.xlu0 %v1686
      %v1688 = vpop.xlane.xlu0 %1687
      %v1689 = vcvt.f32.s32 %v1688
      %v1690 = vcvt.f32.s32 %v1684
      %v1691 = vshll.u32 %v1690, 16
      %v1692 = vadd.s32 %v1691, %v1689
      %v1693 = vsel %vm551, %v1643, 2147483647
      %v1694 = vand.u32 %v1693, 65535
      %v1695 = vshra.s32 %v1693, 16
      %v1696 = vcvt.s32.f32 %v1694
      %v1697 = vcvt.s32.f32 %v1695
      %1698 = vmin.xlane.f32.xlu0 %v1697
      %v1699 = vpop.xlane.xlu0 %1698
      %vm1700 = vcmp.eq.f32.partialorder %v1697, %v1699
      %v1701 = vsel %vm1700, %v1696, inf
      %1702 = vmin.xlane.f32.xlu0 %v1701
      %v1703 = vpop.xlane.xlu0 %1702
      %v1704 = vcvt.f32.s32 %v1703
      %v1705 = vcvt.f32.s32 %v1699
      %v1706 = vshll.u32 %v1705, 16
      %v1707 = vadd.s32 %v1706, %v1704
      %v1708 = vsel %vm551, %v1644, 2147483647
      %v1709 = vand.u32 %v1708, 65535
      %v1710 = vshra.s32 %v1708, 16
      %v1711 = vcvt.s32.f32 %v1709
      %v1712 = vcvt.s32.f32 %v1710
      %1713 = vmin.xlane.f32.xlu0 %v1712
      %v1714 = vpop.xlane.xlu0 %1713
      %vm1715 = vcmp.eq.f32.partialorder %v1712, %v1714
      %v1716 = vsel %vm1715, %v1711, inf
      %1717 = vmin.xlane.f32.xlu0 %v1716
      %v1718 = vpop.xlane.xlu0 %1717
      %v1719 = vcvt.f32.s32 %v1718
      %v1720 = vcvt.f32.s32 %v1714
      %v1721 = vshll.u32 %v1720, 16
      %v1722 = vadd.s32 %v1721, %v1719
      %v1723 = vsel %vm551, %v1645, 2147483647
      %v1724 = vand.u32 %v1723, 65535
      %v1725 = vshra.s32 %v1723, 16
      %v1726 = vcvt.s32.f32 %v1724
      %v1727 = vcvt.s32.f32 %v1725
      %1728 = vmin.xlane.f32.xlu0 %v1727
      %v1729 = vpop.xlane.xlu0 %1728
      %vm1730 = vcmp.eq.f32.partialorder %v1727, %v1729
      %v1731 = vsel %vm1730, %v1726, inf
      %1732 = vmin.xlane.f32.xlu0 %v1731
      %v1733 = vpop.xlane.xlu0 %1732
      %v1734 = vcvt.f32.s32 %v1733
      %v1735 = vcvt.f32.s32 %v1729
      %v1736 = vshll.u32 %v1735, 16
      %v1737 = vadd.s32 %v1736, %v1734
      %v1738 = vsel %vm551, %v1646, 2147483647
      %v1739 = vand.u32 %v1738, 65535
      %v1740 = vshra.s32 %v1738, 16
      %v1741 = vcvt.s32.f32 %v1739
      %v1742 = vcvt.s32.f32 %v1740
      %1743 = vmin.xlane.f32.xlu0 %v1742
      %v1744 = vpop.xlane.xlu0 %1743
      %vm1745 = vcmp.eq.f32.partialorder %v1742, %v1744
      %v1746 = vsel %vm1745, %v1741, inf
      %1747 = vmin.xlane.f32.xlu0 %v1746
      %v1748 = vpop.xlane.xlu0 %1747
      %v1749 = vcvt.f32.s32 %v1748
      %v1750 = vcvt.f32.s32 %v1744
      %v1751 = vshll.u32 %v1750, 16
      %v1752 = vadd.s32 %v1751, %v1749
      %v1753 = vsel %vm551, %v1647, 2147483647
      %v1754 = vand.u32 %v1753, 65535
      %v1755 = vshra.s32 %v1753, 16
      %v1756 = vcvt.s32.f32 %v1754
      %v1757 = vcvt.s32.f32 %v1755
      %1758 = vmin.xlane.f32.xlu0 %v1757
      %v1759 = vpop.xlane.xlu0 %1758
      %vm1760 = vcmp.eq.f32.partialorder %v1757, %v1759
      %v1761 = vsel %vm1760, %v1756, inf
      %1762 = vmin.xlane.f32.xlu0 %v1761
      %v1763 = vpop.xlane.xlu0 %1762
      %v1764 = vcvt.f32.s32 %v1763
      %v1765 = vcvt.f32.s32 %v1759
      %v1766 = vshll.u32 %v1765, 16
      %v1767 = vadd.s32 %v1766, %v1764
      %vm1768 = vcmp.eq.s32.totalorder %v534, %v1662
      %vm1769 = vcmp.eq.s32.totalorder %v534, %v1677
      %vm1770 = vcmp.eq.s32.totalorder %v534, %v1692
      %vm1771 = vcmp.eq.s32.totalorder %v534, %v1707
      %vm1772 = vcmp.eq.s32.totalorder %v534, %v1722
      %vm1773 = vcmp.eq.s32.totalorder %v534, %v1737
      %vm1774 = vcmp.eq.s32.totalorder %v534, %v1752
      %vm1775 = vcmp.eq.s32.totalorder %v534, %v1767
      %v1776 = vsel %vm1768, 3e+38, %v1600
      %v1777 = vsel %vm1769, 3e+38, %v1601
      %v1778 = vsel %vm1770, 3e+38, %v1602
      %v1779 = vsel %vm1771, 3e+38, %v1603
      %v1780 = vsel %vm1772, 3e+38, %v1604
      %v1781 = vsel %vm1773, 3e+38, %v1605
      %v1782 = vsel %vm1774, 3e+38, %v1606
      %v1783 = vsel %vm1775, 3e+38, %v1607
      %v1784 = vsel %vm551, %v1776, inf
      %1785 = vmin.xlane.f32.xlu0 %v1784
      %v1786 = vpop.xlane.xlu0 %1785
      %v1787 = vsel %vm551, %v1777, inf
      %1788 = vmin.xlane.f32.xlu0 %v1787
      %v1789 = vpop.xlane.xlu0 %1788
      %v1790 = vsel %vm551, %v1778, inf
      %1791 = vmin.xlane.f32.xlu0 %v1790
      %v1792 = vpop.xlane.xlu0 %1791
      %v1793 = vsel %vm551, %v1779, inf
      %1794 = vmin.xlane.f32.xlu0 %v1793
      %v1795 = vpop.xlane.xlu0 %1794
      %v1796 = vsel %vm551, %v1780, inf
      %1797 = vmin.xlane.f32.xlu0 %v1796
      %v1798 = vpop.xlane.xlu0 %1797
      %v1799 = vsel %vm551, %v1781, inf
      %1800 = vmin.xlane.f32.xlu0 %v1799
      %v1801 = vpop.xlane.xlu0 %1800
      %v1802 = vsel %vm551, %v1782, inf
      %1803 = vmin.xlane.f32.xlu0 %v1802
      %v1804 = vpop.xlane.xlu0 %1803
      %v1805 = vsel %vm551, %v1783, inf
      %1806 = vmin.xlane.f32.xlu0 %v1805
      %v1807 = vpop.xlane.xlu0 %1806
      %vm1808 = vcmp.le.f32.partialorder %v1776, %v1786
      %vm1809 = vcmp.le.f32.partialorder %v1777, %v1789
      %vm1810 = vcmp.le.f32.partialorder %v1778, %v1792
      %vm1811 = vcmp.le.f32.partialorder %v1779, %v1795
      %vm1812 = vcmp.le.f32.partialorder %v1780, %v1798
      %vm1813 = vcmp.le.f32.partialorder %v1781, %v1801
      %vm1814 = vcmp.le.f32.partialorder %v1782, %v1804
      %vm1815 = vcmp.le.f32.partialorder %v1783, %v1807
      %v1816 = vsel %vm1808, %v534, 1073741824
      %v1817 = vsel %vm1809, %v534, 1073741824
      %v1818 = vsel %vm1810, %v534, 1073741824
      %v1819 = vsel %vm1811, %v534, 1073741824
      %v1820 = vsel %vm1812, %v534, 1073741824
      %v1821 = vsel %vm1813, %v534, 1073741824
      %v1822 = vsel %vm1814, %v534, 1073741824
      %v1823 = vsel %vm1815, %v534, 1073741824
      %v1824 = vsel %vm551, %v1816, 2147483647
      %v1825 = vand.u32 %v1824, 65535
      %v1826 = vshra.s32 %v1824, 16
      %v1827 = vcvt.s32.f32 %v1825
      %v1828 = vcvt.s32.f32 %v1826
      %1829 = vmin.xlane.f32.xlu0 %v1828
      %v1830 = vpop.xlane.xlu0 %1829
      %vm1831 = vcmp.eq.f32.partialorder %v1828, %v1830
      %v1832 = vsel %vm1831, %v1827, inf
      %1833 = vmin.xlane.f32.xlu0 %v1832
      %v1834 = vpop.xlane.xlu0 %1833
      %v1835 = vcvt.f32.s32 %v1834
      %v1836 = vcvt.f32.s32 %v1830
      %v1837 = vshll.u32 %v1836, 16
      %v1838 = vadd.s32 %v1837, %v1835
      %v1839 = vsel %vm551, %v1817, 2147483647
      %v1840 = vand.u32 %v1839, 65535
      %v1841 = vshra.s32 %v1839, 16
      %v1842 = vcvt.s32.f32 %v1840
      %v1843 = vcvt.s32.f32 %v1841
      %1844 = vmin.xlane.f32.xlu0 %v1843
      %v1845 = vpop.xlane.xlu0 %1844
      %vm1846 = vcmp.eq.f32.partialorder %v1843, %v1845
      %v1847 = vsel %vm1846, %v1842, inf
      %1848 = vmin.xlane.f32.xlu0 %v1847
      %v1849 = vpop.xlane.xlu0 %1848
      %v1850 = vcvt.f32.s32 %v1849
      %v1851 = vcvt.f32.s32 %v1845
      %v1852 = vshll.u32 %v1851, 16
      %v1853 = vadd.s32 %v1852, %v1850
      %v1854 = vsel %vm551, %v1818, 2147483647
      %v1855 = vand.u32 %v1854, 65535
      %v1856 = vshra.s32 %v1854, 16
      %v1857 = vcvt.s32.f32 %v1855
      %v1858 = vcvt.s32.f32 %v1856
      %1859 = vmin.xlane.f32.xlu0 %v1858
      %v1860 = vpop.xlane.xlu0 %1859
      %vm1861 = vcmp.eq.f32.partialorder %v1858, %v1860
      %v1862 = vsel %vm1861, %v1857, inf
      %1863 = vmin.xlane.f32.xlu0 %v1862
      %v1864 = vpop.xlane.xlu0 %1863
      %v1865 = vcvt.f32.s32 %v1864
      %v1866 = vcvt.f32.s32 %v1860
      %v1867 = vshll.u32 %v1866, 16
      %v1868 = vadd.s32 %v1867, %v1865
      %v1869 = vsel %vm551, %v1819, 2147483647
      %v1870 = vand.u32 %v1869, 65535
      %v1871 = vshra.s32 %v1869, 16
      %v1872 = vcvt.s32.f32 %v1870
      %v1873 = vcvt.s32.f32 %v1871
      %1874 = vmin.xlane.f32.xlu0 %v1873
      %v1875 = vpop.xlane.xlu0 %1874
      %vm1876 = vcmp.eq.f32.partialorder %v1873, %v1875
      %v1877 = vsel %vm1876, %v1872, inf
      %1878 = vmin.xlane.f32.xlu0 %v1877
      %v1879 = vpop.xlane.xlu0 %1878
      %v1880 = vcvt.f32.s32 %v1879
      %v1881 = vcvt.f32.s32 %v1875
      %v1882 = vshll.u32 %v1881, 16
      %v1883 = vadd.s32 %v1882, %v1880
      %v1884 = vsel %vm551, %v1820, 2147483647
      %v1885 = vand.u32 %v1884, 65535
      %v1886 = vshra.s32 %v1884, 16
      %v1887 = vcvt.s32.f32 %v1885
      %v1888 = vcvt.s32.f32 %v1886
      %1889 = vmin.xlane.f32.xlu0 %v1888
      %v1890 = vpop.xlane.xlu0 %1889
      %vm1891 = vcmp.eq.f32.partialorder %v1888, %v1890
      %v1892 = vsel %vm1891, %v1887, inf
      %1893 = vmin.xlane.f32.xlu0 %v1892
      %v1894 = vpop.xlane.xlu0 %1893
      %v1895 = vcvt.f32.s32 %v1894
      %v1896 = vcvt.f32.s32 %v1890
      %v1897 = vshll.u32 %v1896, 16
      %v1898 = vadd.s32 %v1897, %v1895
      %v1899 = vsel %vm551, %v1821, 2147483647
      %v1900 = vand.u32 %v1899, 65535
      %v1901 = vshra.s32 %v1899, 16
      %v1902 = vcvt.s32.f32 %v1900
      %v1903 = vcvt.s32.f32 %v1901
      %1904 = vmin.xlane.f32.xlu0 %v1903
      %v1905 = vpop.xlane.xlu0 %1904
      %vm1906 = vcmp.eq.f32.partialorder %v1903, %v1905
      %v1907 = vsel %vm1906, %v1902, inf
      %1908 = vmin.xlane.f32.xlu0 %v1907
      %v1909 = vpop.xlane.xlu0 %1908
      %v1910 = vcvt.f32.s32 %v1909
      %v1911 = vcvt.f32.s32 %v1905
      %v1912 = vshll.u32 %v1911, 16
      %v1913 = vadd.s32 %v1912, %v1910
      %v1914 = vsel %vm551, %v1822, 2147483647
      %v1915 = vand.u32 %v1914, 65535
      %v1916 = vshra.s32 %v1914, 16
      %v1917 = vcvt.s32.f32 %v1915
      %v1918 = vcvt.s32.f32 %v1916
      %1919 = vmin.xlane.f32.xlu0 %v1918
      %v1920 = vpop.xlane.xlu0 %1919
      %vm1921 = vcmp.eq.f32.partialorder %v1918, %v1920
      %v1922 = vsel %vm1921, %v1917, inf
      %1923 = vmin.xlane.f32.xlu0 %v1922
      %v1924 = vpop.xlane.xlu0 %1923
      %v1925 = vcvt.f32.s32 %v1924
      %v1926 = vcvt.f32.s32 %v1920
      %v1927 = vshll.u32 %v1926, 16
      %v1928 = vadd.s32 %v1927, %v1925
      %v1929 = vsel %vm551, %v1823, 2147483647
      %v1930 = vand.u32 %v1929, 65535
      %v1931 = vshra.s32 %v1929, 16
      %v1932 = vcvt.s32.f32 %v1930
      %v1933 = vcvt.s32.f32 %v1931
      %1934 = vmin.xlane.f32.xlu0 %v1933
      %v1935 = vpop.xlane.xlu0 %1934
      %vm1936 = vcmp.eq.f32.partialorder %v1933, %v1935
      %v1937 = vsel %vm1936, %v1932, inf
      %1938 = vmin.xlane.f32.xlu0 %v1937
      %v1939 = vpop.xlane.xlu0 %1938
      %v1940 = vcvt.f32.s32 %v1939
      %v1941 = vcvt.f32.s32 %v1935
      %v1942 = vshll.u32 %v1941, 16
      %v1943 = vadd.s32 %v1942, %v1940
      %vm1944 = vcmp.eq.s32.totalorder %v534, %v1838
      %vm1945 = vcmp.eq.s32.totalorder %v534, %v1853
      %vm1946 = vcmp.eq.s32.totalorder %v534, %v1868
      %vm1947 = vcmp.eq.s32.totalorder %v534, %v1883
      %vm1948 = vcmp.eq.s32.totalorder %v534, %v1898
      %vm1949 = vcmp.eq.s32.totalorder %v534, %v1913
      %vm1950 = vcmp.eq.s32.totalorder %v534, %v1928
      %vm1951 = vcmp.eq.s32.totalorder %v534, %v1943
      %v1952 = vsel %vm1944, 3e+38, %v1776
      %v1953 = vsel %vm1945, 3e+38, %v1777
      %v1954 = vsel %vm1946, 3e+38, %v1778
      %v1955 = vsel %vm1947, 3e+38, %v1779
      %v1956 = vsel %vm1948, 3e+38, %v1780
      %v1957 = vsel %vm1949, 3e+38, %v1781
      %v1958 = vsel %vm1950, 3e+38, %v1782
      %v1959 = vsel %vm1951, 3e+38, %v1783
      %vm1960 = vcmp.ge.f32.partialorder %v1952, 3e+38
      %vm1961 = vcmp.ge.f32.partialorder %v1953, 3e+38
      %vm1962 = vcmp.ge.f32.partialorder %v1954, 3e+38
      %vm1963 = vcmp.ge.f32.partialorder %v1955, 3e+38
      %vm1964 = vcmp.ge.f32.partialorder %v1956, 3e+38
      %vm1965 = vcmp.ge.f32.partialorder %v1957, 3e+38
      %vm1966 = vcmp.ge.f32.partialorder %v1958, 3e+38
      %vm1967 = vcmp.ge.f32.partialorder %v1959, 3e+38
      %v1968 = vsel %vm1960, 1, 0
      %v1969 = vsel %vm1961, 1, 0
      %v1970 = vsel %vm1962, 1, 0
      %v1971 = vsel %vm1963, 1, 0
      %v1972 = vsel %vm1964, 1, 0
      %v1973 = vsel %vm1965, 1, 0
      %v1974 = vsel %vm1966, 1, 0
      %v1975 = vsel %vm1967, 1, 0
      %v1976 = vcvt.s32.f32 %v1968
      %v1977 = vcvt.s32.f32 %v1969
      %v1978 = vcvt.s32.f32 %v1970
      %v1979 = vcvt.s32.f32 %v1971
      %v1980 = vcvt.s32.f32 %v1972
      %v1981 = vcvt.s32.f32 %v1973
      %v1982 = vcvt.s32.f32 %v1974
      %v1983 = vcvt.s32.f32 %v1975
      %vm1984 = vcmask 7168
      %v1985 = vsel %vm1984, %v606, %v782
      %v1986 = vsel %vm1984, %v621, %v797
      %v1987 = vsel %vm1984, %v636, %v812
      %v1988 = vsel %vm1984, %v651, %v827
      %v1989 = vsel %vm1984, %v666, %v842
      %v1990 = vsel %vm1984, %v681, %v857
      %v1991 = vsel %vm1984, %v696, %v872
      %v1992 = vsel %vm1984, %v711, %v887
      %vm1993 = vcmask 15360
      %v1994 = vsel %vm1993, %v1985, %v958
      %v1995 = vsel %vm1993, %v1986, %v973
      %v1996 = vsel %vm1993, %v1987, %v988
      %v1997 = vsel %vm1993, %v1988, %v1003
      %v1998 = vsel %vm1993, %v1989, %v1018
      %v1999 = vsel %vm1993, %v1990, %v1033
      %v2000 = vsel %vm1993, %v1991, %v1048
      %v2001 = vsel %vm1993, %v1992, %v1063
      %v2002 = vsel %vm307, %v1994, %v1134
      %v2003 = vsel %vm307, %v1995, %v1149
      %v2004 = vsel %vm307, %v1996, %v1164
      %v2005 = vsel %vm307, %v1997, %v1179
      %v2006 = vsel %vm307, %v1998, %v1194
      %v2007 = vsel %vm307, %v1999, %v1209
      %v2008 = vsel %vm307, %v2000, %v1224
      %v2009 = vsel %vm307, %v2001, %v1239
      %vm2010 = vcmask 31744
      %v2011 = vsel %vm2010, %v2002, %v1310
      %v2012 = vsel %vm2010, %v2003, %v1325
      %v2013 = vsel %vm2010, %v2004, %v1340
      %v2014 = vsel %vm2010, %v2005, %v1355
      %v2015 = vsel %vm2010, %v2006, %v1370
      %v2016 = vsel %vm2010, %v2007, %v1385
      %v2017 = vsel %vm2010, %v2008, %v1400
      %v2018 = vsel %vm2010, %v2009, %v1415
      %vm2019 = vcmask 39936
      %v2020 = vsel %vm2019, %v2011, %v1486
      %v2021 = vsel %vm2019, %v2012, %v1501
      %v2022 = vsel %vm2019, %v2013, %v1516
      %v2023 = vsel %vm2019, %v2014, %v1531
      %v2024 = vsel %vm2019, %v2015, %v1546
      %v2025 = vsel %vm2019, %v2016, %v1561
      %v2026 = vsel %vm2019, %v2017, %v1576
      %v2027 = vsel %vm2019, %v2018, %v1591
      %vm2028 = vcmask 48128
      %v2029 = vsel %vm2028, %v2020, %v1662
      %v2030 = vsel %vm2028, %v2021, %v1677
      %v2031 = vsel %vm2028, %v2022, %v1692
      %v2032 = vsel %vm2028, %v2023, %v1707
      %v2033 = vsel %vm2028, %v2024, %v1722
      %v2034 = vsel %vm2028, %v2025, %v1737
      %v2035 = vsel %vm2028, %v2026, %v1752
      %v2036 = vsel %vm2028, %v2027, %v1767
      %vm2037 = vcmask 56320
      %v2038 = vsel %vm2037, %v2029, %v1838
      %v2039 = vsel %vm2037, %v2030, %v1853
      %v2040 = vsel %vm2037, %v2031, %v1868
      %v2041 = vsel %vm2037, %v2032, %v1883
      %v2042 = vsel %vm2037, %v2033, %v1898
      %v2043 = vsel %vm2037, %v2034, %v1913
      %v2044 = vsel %vm2037, %v2035, %v1928
      %v2045 = vsel %vm2037, %v2036, %v1943
      %vm2046 = vcmask 64512
      %2047 = vst.msk [vmem:[%s286] sm:$0xff] %vm2046, %v2038
      %2048 = vst.msk [vmem:[%s286 + $0x8] sm:$0xff] %vm2046, %v2039
      %2049 = vst.msk [vmem:[%s286 + $0x10] sm:$0xff] %vm2046, %v2040
      %2050 = vst.msk [vmem:[%s286 + $0x18] sm:$0xff] %vm2046, %v2041
      %2051 = vst.msk [vmem:[%s286 + $0x20] sm:$0xff] %vm2046, %v2042
      %2052 = vst.msk [vmem:[%s286 + $0x28] sm:$0xff] %vm2046, %v2043
      %2053 = vst.msk [vmem:[%s286 + $0x30] sm:$0xff] %vm2046, %v2044
      %2054 = vst.msk [vmem:[%s286 + $0x38] sm:$0xff] %vm2046, %v2045
      %v2055 = vld [vmem:[%s277] sm:$0xff]
      %v2056 = vld [vmem:[%s277 + $0x8] sm:$0x1]
      %v2058 = vsel %vm551, %v1976, 0
      %v2061 = vsel %vm551, %v1977, 0
      %v2064 = vsel %vm551, %v1978, 0
      %v2067 = vsel %vm551, %v1979, 0
      %v2070 = vsel %vm551, %v1980, 0
      %v2073 = vsel %vm551, %v1981, 0
      %v2076 = vsel %vm551, %v1982, 0
      %v2079 = vsel %vm551, %v1983, 0
      %v2082 = vsel %vm551, %v2055, 0
      %v2085 = vsel %vm551, %v2056, 0
      %2087 = vmatprep.subr.mxu0 0.0
      %2088 = vmatpush1.xpose.msra.mxu0 %v2082
      %2089 = vmatprep.subr.mxu0 0.0
      %2090 = vmatpush1.xpose.msra.mxu0 %v2085
      %2091 = vmatprep.subr.mxu0 0.0
      %2092 = vmatpush1.xpose.msra.mxu0 0.0
      %2093 = vmatprep.subr.mxu0 0.0
      %2094 = vmatpush1.xpose.msra.mxu0 0.0
      %2095 = vmatprep.subr.mxu0 0.0
      %2096 = vmatpush1.xpose.msra.mxu0 0.0
      %2097 = vmatprep.subr.mxu0 0.0
      %2098 = vmatpush1.xpose.msra.mxu0 0.0
      %2099 = vmatprep.subr.mxu0 0.0
      %2100 = vmatpush1.xpose.msra.mxu0 0.0
      %2101 = vmatprep.subr.mxu0 0.0
      %2102 = vmatpush1.xpose.msra.mxu0 0.0
      %2103 = vmatprep.subr.mxu0 0.0
      %2104 = vmatpush1.xpose.msra.mxu0 0.0
      %2105 = vmatprep.subr.mxu0 0.0
      %2106 = vmatpush1.xpose.msra.mxu0 0.0
      %2107 = vmatprep.subr.mxu0 0.0
      %2108 = vmatpush1.xpose.msra.mxu0 0.0
      %2109 = vmatprep.subr.mxu0 0.0
      %2110 = vmatpush1.xpose.msra.mxu0 0.0
      %2111 = vmatprep.subr.mxu0 0.0
      %2112 = vmatpush1.xpose.msra.mxu0 0.0
      %2113 = vmatprep.subr.mxu0 0.0
      %2114 = vmatpush1.xpose.msra.mxu0 0.0
      %2115 = vmatprep.subr.mxu0 0.0
      %2116 = vmatpush1.xpose.msra.mxu0 0.0
      %2117 = vmatprep.subr.mxu0 0.0
      %2118 = vmatpush1.xpose.msra.mxu0 0.0
      %2119 = vmatprep.subr.mxu0 0.0
      %2120 = vmatpush1.xpose.msra.mxu0 0.0
      %2121 = vmatprep.subr.mxu0 0.0
      %2122 = vmatpush1.xpose.msra.mxu0 0.0
      %2123 = vmatprep.subr.mxu0 0.0
      %2124 = vmatpush1.xpose.msra.mxu0 0.0
      %2125 = vmatprep.subr.mxu0 0.0
      %2126 = vmatpush1.xpose.msra.mxu0 0.0
      %2127 = vmatprep.subr.mxu0 0.0
      %2128 = vmatpush1.xpose.msra.mxu0 0.0
      %2129 = vmatprep.subr.mxu0 0.0
      %2130 = vmatpush1.xpose.msra.mxu0 0.0
      %2131 = vmatprep.subr.mxu0 0.0
      %2132 = vmatpush1.xpose.msra.mxu0 0.0
      %2133 = vmatprep.subr.mxu0 0.0
      %2134 = vmatpush1.xpose.msra.mxu0 0.0
      %2135 = vmatprep.subr.mxu0 0.0
      %2136 = vmatpush1.xpose.msra.mxu0 0.0
      %2137 = vmatprep.subr.mxu0 0.0
      %2138 = vmatpush1.xpose.msra.mxu0 0.0
      %2139 = vmatprep.subr.mxu0 0.0
      %2140 = vmatpush1.xpose.msra.mxu0 0.0
      %2141 = vmatprep.subr.mxu0 0.0
      %2142 = vmatpush1.xpose.msra.mxu0 0.0
      %2143 = vmatprep.subr.mxu0 0.0
      %2144 = vmatpush1.xpose.msra.mxu0 0.0
      %2145 = vmatprep.subr.mxu0 0.0
      %2146 = vmatpush1.xpose.msra.mxu0 0.0
      %2147 = vmatprep.subr.mxu0 0.0
      %2148 = vmatpush1.xpose.msra.mxu0 0.0
      %2149 = vmatprep.subr.mxu0 0.0
      %2150 = vmatpush1.xpose.msra.mxu0 0.0
      %2151 = vmatprep.mubr.f32.mxu0 0.0
      %2152 = vmatmul.mubr.f32.gmra.mrb[0].mxu0 %v2058
      %v2153 = vpop.f32.mrb[0].mxu0
      %v2154 = vadd.f32 0.0, %v2153
      %v2155 = vpop.f32.mrb[0].mxu0
      %2156 = vmatprep.mubr.f32.mxu0 0.0
      %2157 = vmatmul.mubr.f32.gmra.mrb[0].mxu0 %v2061
      %v2158 = vpop.f32.mrb[0].mxu0
      %v2159 = vadd.f32 0.0, %v2158
      %v2160 = vpop.f32.mrb[0].mxu0
      %2161 = vmatprep.mubr.f32.mxu0 0.0
      %2162 = vmatmul.mubr.f32.gmra.mrb[0].mxu0 %v2064
      %v2163 = vpop.f32.mrb[0].mxu0
      %v2164 = vadd.f32 0.0, %v2163
      %v2165 = vpop.f32.mrb[0].mxu0
      %2166 = vmatprep.mubr.f32.mxu0 0.0
      %2167 = vmatmul.mubr.f32.gmra.mrb[0].mxu0 %v2067
      %v2168 = vpop.f32.mrb[0].mxu0
      %v2169 = vadd.f32 0.0, %v2168
      %v2170 = vpop.f32.mrb[0].mxu0
      %2171 = vmatprep.mubr.f32.mxu0 0.0
      %2172 = vmatmul.mubr.f32.gmra.mrb[0].mxu0 %v2070
      %v2173 = vpop.f32.mrb[0].mxu0
      %v2174 = vadd.f32 0.0, %v2173
      %v2175 = vpop.f32.mrb[0].mxu0
      %2176 = vmatprep.mubr.f32.mxu0 0.0
      %2177 = vmatmul.mubr.f32.gmra.mrb[0].mxu0 %v2073
      %v2178 = vpop.f32.mrb[0].mxu0
      %v2179 = vadd.f32 0.0, %v2178
      %v2180 = vpop.f32.mrb[0].mxu0
      %2181 = vmatprep.mubr.f32.mxu0 0.0
      %2182 = vmatmul.mubr.f32.gmra.mrb[0].mxu0 %v2076
      %v2183 = vpop.f32.mrb[0].mxu0
      %v2184 = vadd.f32 0.0, %v2183
      %v2185 = vpop.f32.mrb[0].mxu0
      %2186 = vmatprep.mubr.f32.mxu0 0.0
      %2187 = vmatmul.mubr.f32.gmra.mrb[0].mxu0 %v2079
      %v2188 = vpop.f32.mrb[0].mxu0
      %v2189 = vadd.f32 0.0, %v2188
      %v2190 = vpop.f32.mrb[0].mxu0
      %2191 = vdwg.mxu0
      %v2192 = vmul.f32 %v298, 2.0
      %v2193 = vmul.f32 %v299, 2.0
      %v2194 = vmul.f32 %v300, 2.0
      %v2195 = vmul.f32 %v301, 2.0
      %v2196 = vmul.f32 %v302, 2.0
      %v2197 = vmul.f32 %v303, 2.0
      %v2198 = vmul.f32 %v304, 2.0
      %v2199 = vmul.f32 %v305, 2.0
      %v2200 = vmul.f32 %v2192, %v2154
      %v2201 = vmul.f32 %v2193, %v2159
      %v2202 = vmul.f32 %v2194, %v2164
      %v2203 = vmul.f32 %v2195, %v2169
      %v2204 = vmul.f32 %v2196, %v2174
      %v2205 = vmul.f32 %v2197, %v2179
      %v2206 = vmul.f32 %v2198, %v2184
      %v2207 = vmul.f32 %v2199, %v2189
      %2216 = vrot.lane.b32.xlu0 %v2200, 3
      %v2217 = vpop.permute.xlu0 %2216
      %2218 = vrot.lane.b32.xlu0 %v2201, 3
      %v2219 = vpop.permute.xlu0 %2218
      %2220 = vrot.lane.b32.xlu0 %v2202, 3
      %v2221 = vpop.permute.xlu0 %2220
      %2222 = vrot.lane.b32.xlu0 %v2203, 3
      %v2223 = vpop.permute.xlu0 %2222
      %2224 = vrot.lane.b32.xlu0 %v2204, 3
      %v2225 = vpop.permute.xlu0 %2224
      %2226 = vrot.lane.b32.xlu0 %v2205, 3
      %v2227 = vpop.permute.xlu0 %2226
      %2228 = vrot.lane.b32.xlu0 %v2206, 3
      %v2229 = vpop.permute.xlu0 %2228
      %2230 = vrot.lane.b32.xlu0 %v2207, 3
      %v2231 = vpop.permute.xlu0 %2230
      %v2240 = vsub.f32 %v2154, %v2217
      %v2241 = vsub.f32 %v2159, %v2219
      %v2242 = vsub.f32 %v2164, %v2221
      %v2243 = vsub.f32 %v2169, %v2223
      %v2244 = vsub.f32 %v2174, %v2225
      %v2245 = vsub.f32 %v2179, %v2227
      %v2246 = vsub.f32 %v2184, %v2229
      %v2247 = vsub.f32 %v2189, %v2231
      %v2248 = vmul.f32 %v298, 8.0
      %v2249 = vmul.f32 %v299, 8.0
      %v2250 = vmul.f32 %v300, 8.0
      %v2251 = vmul.f32 %v301, 8.0
      %v2252 = vmul.f32 %v302, 8.0
      %v2253 = vmul.f32 %v303, 8.0
      %v2254 = vmul.f32 %v304, 8.0
      %v2255 = vmul.f32 %v305, 8.0
      %v2256 = vmul.f32 %v2248, %v298
      %v2257 = vmul.f32 %v2249, %v299
      %v2258 = vmul.f32 %v2250, %v300
      %v2259 = vmul.f32 %v2251, %v301
      %v2260 = vmul.f32 %v2252, %v302
      %v2261 = vmul.f32 %v2253, %v303
      %v2262 = vmul.f32 %v2254, %v304
      %v2263 = vmul.f32 %v2255, %v305
      %2272 = vrot.lane.b32.xlu0 %v2256, 3
      %v2273 = vpop.permute.xlu0 %2272
      %2274 = vrot.lane.b32.xlu0 %v2257, 3
      %v2275 = vpop.permute.xlu0 %2274
      %2276 = vrot.lane.b32.xlu0 %v2258, 3
      %v2277 = vpop.permute.xlu0 %2276
      %2278 = vrot.lane.b32.xlu0 %v2259, 3
      %v2279 = vpop.permute.xlu0 %2278
      %2280 = vrot.lane.b32.xlu0 %v2260, 3
      %v2281 = vpop.permute.xlu0 %2280
      %2282 = vrot.lane.b32.xlu0 %v2261, 3
      %v2283 = vpop.permute.xlu0 %2282
      %2284 = vrot.lane.b32.xlu0 %v2262, 3
      %v2285 = vpop.permute.xlu0 %2284
      %2286 = vrot.lane.b32.xlu0 %v2263, 3
      %v2287 = vpop.permute.xlu0 %2286
      %v2296 = vadd.f32 %v2240, %v2273
      %v2297 = vadd.f32 %v2241, %v2275
      %v2298 = vadd.f32 %v2242, %v2277
      %v2299 = vadd.f32 %v2243, %v2279
      %v2300 = vadd.f32 %v2244, %v2281
      %v2301 = vadd.f32 %v2245, %v2283
      %v2302 = vadd.f32 %v2246, %v2285
      %v2303 = vadd.f32 %v2247, %v2287
      %2312 = vrot.lane.b32.xlu0 %v2154, 127
      %v2313 = vpop.permute.xlu0 %2312
      %2314 = vrot.lane.b32.xlu0 %v2159, 127
      %v2315 = vpop.permute.xlu0 %2314
      %2316 = vrot.lane.b32.xlu0 %v2164, 127
      %v2317 = vpop.permute.xlu0 %2316
      %2318 = vrot.lane.b32.xlu0 %v2169, 127
      %v2319 = vpop.permute.xlu0 %2318
      %2320 = vrot.lane.b32.xlu0 %v2174, 127
      %v2321 = vpop.permute.xlu0 %2320
      %2322 = vrot.lane.b32.xlu0 %v2179, 127
      %v2323 = vpop.permute.xlu0 %2322
      %2324 = vrot.lane.b32.xlu0 %v2184, 127
      %v2325 = vpop.permute.xlu0 %2324
      %2326 = vrot.lane.b32.xlu0 %v2189, 127
      %v2327 = vpop.permute.xlu0 %2326
      %v2336 = vmul.f32 %v298, %v2313
      %v2337 = vmul.f32 %v299, %v2315
      %v2338 = vmul.f32 %v300, %v2317
      %v2339 = vmul.f32 %v301, %v2319
      %v2340 = vmul.f32 %v302, %v2321
      %v2341 = vmul.f32 %v303, %v2323
      %v2342 = vmul.f32 %v304, %v2325
      %v2343 = vmul.f32 %v305, %v2327
      %2352 = vrot.lane.b32.xlu0 %v2336, 6
      %v2353 = vpop.permute.xlu0 %2352
      %2354 = vrot.lane.b32.xlu0 %v2337, 6
      %v2355 = vpop.permute.xlu0 %2354
      %2356 = vrot.lane.b32.xlu0 %v2338, 6
      %v2357 = vpop.permute.xlu0 %2356
      %2358 = vrot.lane.b32.xlu0 %v2339, 6
      %v2359 = vpop.permute.xlu0 %2358
      %2360 = vrot.lane.b32.xlu0 %v2340, 6
      %v2361 = vpop.permute.xlu0 %2360
      %2362 = vrot.lane.b32.xlu0 %v2341, 6
      %v2363 = vpop.permute.xlu0 %2362
      %2364 = vrot.lane.b32.xlu0 %v2342, 6
      %v2365 = vpop.permute.xlu0 %2364
      %2366 = vrot.lane.b32.xlu0 %v2343, 6
      %v2367 = vpop.permute.xlu0 %2366
      %v2376 = vsub.f32 %v2154, %v2353
      %v2377 = vsub.f32 %v2159, %v2355
      %v2378 = vsub.f32 %v2164, %v2357
      %v2379 = vsub.f32 %v2169, %v2359
      %v2380 = vsub.f32 %v2174, %v2361
      %v2381 = vsub.f32 %v2179, %v2363
      %v2382 = vsub.f32 %v2184, %v2365
      %v2383 = vsub.f32 %v2189, %v2367
      %2384 = vrot.lane.b32.xlu0 %v2154, 1
      %v2385 = vpop.permute.xlu0 %2384
      %2386 = vrot.lane.b32.xlu0 %v2159, 1
      %v2387 = vpop.permute.xlu0 %2386
      %2388 = vrot.lane.b32.xlu0 %v2164, 1
      %v2389 = vpop.permute.xlu0 %2388
      %2390 = vrot.lane.b32.xlu0 %v2169, 1
      %v2391 = vpop.permute.xlu0 %2390
      %2392 = vrot.lane.b32.xlu0 %v2174, 1
      %v2393 = vpop.permute.xlu0 %2392
      %2394 = vrot.lane.b32.xlu0 %v2179, 1
      %v2395 = vpop.permute.xlu0 %2394
      %2396 = vrot.lane.b32.xlu0 %v2184, 1
      %v2397 = vpop.permute.xlu0 %2396
      %2398 = vrot.lane.b32.xlu0 %v2189, 1
      %v2399 = vpop.permute.xlu0 %2398
      %v2408 = vmul.f32 %v298, %v2385
      %v2409 = vmul.f32 %v299, %v2387
      %v2410 = vmul.f32 %v300, %v2389
      %v2411 = vmul.f32 %v301, %v2391
      %v2412 = vmul.f32 %v302, %v2393
      %v2413 = vmul.f32 %v303, %v2395
      %v2414 = vmul.f32 %v304, %v2397
      %v2415 = vmul.f32 %v305, %v2399
      %2424 = vrot.lane.b32.xlu0 %v2408, 5
      %v2425 = vpop.permute.xlu0 %2424
      %2426 = vrot.lane.b32.xlu0 %v2409, 5
      %v2427 = vpop.permute.xlu0 %2426
      %2428 = vrot.lane.b32.xlu0 %v2410, 5
      %v2429 = vpop.permute.xlu0 %2428
      %2430 = vrot.lane.b32.xlu0 %v2411, 5
      %v2431 = vpop.permute.xlu0 %2430
      %2432 = vrot.lane.b32.xlu0 %v2412, 5
      %v2433 = vpop.permute.xlu0 %2432
      %2434 = vrot.lane.b32.xlu0 %v2413, 5
      %v2435 = vpop.permute.xlu0 %2434
      %2436 = vrot.lane.b32.xlu0 %v2414, 5
      %v2437 = vpop.permute.xlu0 %2436
      %2438 = vrot.lane.b32.xlu0 %v2415, 5
      %v2439 = vpop.permute.xlu0 %2438
      %v2448 = vsub.f32 %v2376, %v2425
      %v2449 = vsub.f32 %v2377, %v2427
      %v2450 = vsub.f32 %v2378, %v2429
      %v2451 = vsub.f32 %v2379, %v2431
      %v2452 = vsub.f32 %v2380, %v2433
      %v2453 = vsub.f32 %v2381, %v2435
      %v2454 = vsub.f32 %v2382, %v2437
      %v2455 = vsub.f32 %v2383, %v2439
      %2456 = vrot.lane.b32.xlu0 %v298, 127
      %v2457 = vpop.permute.xlu0 %2456
      %2458 = vrot.lane.b32.xlu0 %v299, 127
      %v2459 = vpop.permute.xlu0 %2458
      %2460 = vrot.lane.b32.xlu0 %v300, 127
      %v2461 = vpop.permute.xlu0 %2460
      %2462 = vrot.lane.b32.xlu0 %v301, 127
      %v2463 = vpop.permute.xlu0 %2462
      %2464 = vrot.lane.b32.xlu0 %v302, 127
      %v2465 = vpop.permute.xlu0 %2464
      %2466 = vrot.lane.b32.xlu0 %v303, 127
      %v2467 = vpop.permute.xlu0 %2466
      %2468 = vrot.lane.b32.xlu0 %v304, 127
      %v2469 = vpop.permute.xlu0 %2468
      %2470 = vrot.lane.b32.xlu0 %v305, 127
      %v2471 = vpop.permute.xlu0 %2470
      %v2480 = vmul.f32 %v2248, %v2457
      %v2481 = vmul.f32 %v2249, %v2459
      %v2482 = vmul.f32 %v2250, %v2461
      %v2483 = vmul.f32 %v2251, %v2463
      %v2484 = vmul.f32 %v2252, %v2465
      %v2485 = vmul.f32 %v2253, %v2467
      %v2486 = vmul.f32 %v2254, %v2469
      %v2487 = vmul.f32 %v2255, %v2471
      %2496 = vrot.lane.b32.xlu0 %v2480, 6
      %v2497 = vpop.permute.xlu0 %2496
      %2498 = vrot.lane.b32.xlu0 %v2481, 6
      %v2499 = vpop.permute.xlu0 %2498
      %2500 = vrot.lane.b32.xlu0 %v2482, 6
      %v2501 = vpop.permute.xlu0 %2500
      %2502 = vrot.lane.b32.xlu0 %v2483, 6
      %v2503 = vpop.permute.xlu0 %2502
      %2504 = vrot.lane.b32.xlu0 %v2484, 6
      %v2505 = vpop.permute.xlu0 %2504
      %2506 = vrot.lane.b32.xlu0 %v2485, 6
      %v2507 = vpop.permute.xlu0 %2506
      %2508 = vrot.lane.b32.xlu0 %v2486, 6
      %v2509 = vpop.permute.xlu0 %2508
      %2510 = vrot.lane.b32.xlu0 %v2487, 6
      %v2511 = vpop.permute.xlu0 %2510
      %v2520 = vadd.f32 %v2448, %v2497
      %v2521 = vadd.f32 %v2449, %v2499
      %v2522 = vadd.f32 %v2450, %v2501
      %v2523 = vadd.f32 %v2451, %v2503
      %v2524 = vadd.f32 %v2452, %v2505
      %v2525 = vadd.f32 %v2453, %v2507
      %v2526 = vadd.f32 %v2454, %v2509
      %v2527 = vadd.f32 %v2455, %v2511
      %2528 = vrot.lane.b32.xlu0 %v2154, 126
      %v2529 = vpop.permute.xlu0 %2528
      %2530 = vrot.lane.b32.xlu0 %v2159, 126
      %v2531 = vpop.permute.xlu0 %2530
      %2532 = vrot.lane.b32.xlu0 %v2164, 126
      %v2533 = vpop.permute.xlu0 %2532
      %2534 = vrot.lane.b32.xlu0 %v2169, 126
      %v2535 = vpop.permute.xlu0 %2534
      %2536 = vrot.lane.b32.xlu0 %v2174, 126
      %v2537 = vpop.permute.xlu0 %2536
      %2538 = vrot.lane.b32.xlu0 %v2179, 126
      %v2539 = vpop.permute.xlu0 %2538
      %2540 = vrot.lane.b32.xlu0 %v2184, 126
      %v2541 = vpop.permute.xlu0 %2540
      %2542 = vrot.lane.b32.xlu0 %v2189, 126
      %v2543 = vpop.permute.xlu0 %2542
      %v2552 = vmul.f32 %v298, %v2529
      %v2553 = vmul.f32 %v299, %v2531
      %v2554 = vmul.f32 %v300, %v2533
      %v2555 = vmul.f32 %v301, %v2535
      %v2556 = vmul.f32 %v302, %v2537
      %v2557 = vmul.f32 %v303, %v2539
      %v2558 = vmul.f32 %v304, %v2541
      %v2559 = vmul.f32 %v305, %v2543
      %2568 = vrot.lane.b32.xlu0 %v2552, 7
      %v2569 = vpop.permute.xlu0 %2568
      %2570 = vrot.lane.b32.xlu0 %v2553, 7
      %v2571 = vpop.permute.xlu0 %2570
      %2572 = vrot.lane.b32.xlu0 %v2554, 7
      %v2573 = vpop.permute.xlu0 %2572
      %2574 = vrot.lane.b32.xlu0 %v2555, 7
      %v2575 = vpop.permute.xlu0 %2574
      %2576 = vrot.lane.b32.xlu0 %v2556, 7
      %v2577 = vpop.permute.xlu0 %2576
      %2578 = vrot.lane.b32.xlu0 %v2557, 7
      %v2579 = vpop.permute.xlu0 %2578
      %2580 = vrot.lane.b32.xlu0 %v2558, 7
      %v2581 = vpop.permute.xlu0 %2580
      %2582 = vrot.lane.b32.xlu0 %v2559, 7
      %v2583 = vpop.permute.xlu0 %2582
      %v2592 = vsub.f32 %v2154, %v2569
      %v2593 = vsub.f32 %v2159, %v2571
      %v2594 = vsub.f32 %v2164, %v2573
      %v2595 = vsub.f32 %v2169, %v2575
      %v2596 = vsub.f32 %v2174, %v2577
      %v2597 = vsub.f32 %v2179, %v2579
      %v2598 = vsub.f32 %v2184, %v2581
      %v2599 = vsub.f32 %v2189, %v2583
      %2600 = vrot.lane.b32.xlu0 %v2154, 2
      %v2601 = vpop.permute.xlu0 %2600
      %2602 = vrot.lane.b32.xlu0 %v2159, 2
      %v2603 = vpop.permute.xlu0 %2602
      %2604 = vrot.lane.b32.xlu0 %v2164, 2
      %v2605 = vpop.permute.xlu0 %2604
      %2606 = vrot.lane.b32.xlu0 %v2169, 2
      %v2607 = vpop.permute.xlu0 %2606
      %2608 = vrot.lane.b32.xlu0 %v2174, 2
      %v2609 = vpop.permute.xlu0 %2608
      %2610 = vrot.lane.b32.xlu0 %v2179, 2
      %v2611 = vpop.permute.xlu0 %2610
      %2612 = vrot.lane.b32.xlu0 %v2184, 2
      %v2613 = vpop.permute.xlu0 %2612
      %2614 = vrot.lane.b32.xlu0 %v2189, 2
      %v2615 = vpop.permute.xlu0 %2614
      %v2624 = vmul.f32 %v298, %v2601
      %v2625 = vmul.f32 %v299, %v2603
      %v2626 = vmul.f32 %v300, %v2605
      %v2627 = vmul.f32 %v301, %v2607
      %v2628 = vmul.f32 %v302, %v2609
      %v2629 = vmul.f32 %v303, %v2611
      %v2630 = vmul.f32 %v304, %v2613
      %v2631 = vmul.f32 %v305, %v2615
      %2640 = vrot.lane.b32.xlu0 %v2624, 5
      %v2641 = vpop.permute.xlu0 %2640
      %2642 = vrot.lane.b32.xlu0 %v2625, 5
      %v2643 = vpop.permute.xlu0 %2642
      %2644 = vrot.lane.b32.xlu0 %v2626, 5
      %v2645 = vpop.permute.xlu0 %2644
      %2646 = vrot.lane.b32.xlu0 %v2627, 5
      %v2647 = vpop.permute.xlu0 %2646
      %2648 = vrot.lane.b32.xlu0 %v2628, 5
      %v2649 = vpop.permute.xlu0 %2648
      %2650 = vrot.lane.b32.xlu0 %v2629, 5
      %v2651 = vpop.permute.xlu0 %2650
      %2652 = vrot.lane.b32.xlu0 %v2630, 5
      %v2653 = vpop.permute.xlu0 %2652
      %2654 = vrot.lane.b32.xlu0 %v2631, 5
      %v2655 = vpop.permute.xlu0 %2654
      %v2664 = vsub.f32 %v2592, %v2641
      %v2665 = vsub.f32 %v2593, %v2643
      %v2666 = vsub.f32 %v2594, %v2645
      %v2667 = vsub.f32 %v2595, %v2647
      %v2668 = vsub.f32 %v2596, %v2649
      %v2669 = vsub.f32 %v2597, %v2651
      %v2670 = vsub.f32 %v2598, %v2653
      %v2671 = vsub.f32 %v2599, %v2655
      %2672 = vrot.lane.b32.xlu0 %v298, 126
      %v2673 = vpop.permute.xlu0 %2672
      %2674 = vrot.lane.b32.xlu0 %v299, 126
      %v2675 = vpop.permute.xlu0 %2674
      %2676 = vrot.lane.b32.xlu0 %v300, 126
      %v2677 = vpop.permute.xlu0 %2676
      %2678 = vrot.lane.b32.xlu0 %v301, 126
      %v2679 = vpop.permute.xlu0 %2678
      %2680 = vrot.lane.b32.xlu0 %v302, 126
      %v2681 = vpop.permute.xlu0 %2680
      %2682 = vrot.lane.b32.xlu0 %v303, 126
      %v2683 = vpop.permute.xlu0 %2682
      %2684 = vrot.lane.b32.xlu0 %v304, 126
      %v2685 = vpop.permute.xlu0 %2684
      %2686 = vrot.lane.b32.xlu0 %v305, 126
      %v2687 = vpop.permute.xlu0 %2686
      %v2696 = vmul.f32 %v2248, %v2673
      %v2697 = vmul.f32 %v2249, %v2675
      %v2698 = vmul.f32 %v2250, %v2677
      %v2699 = vmul.f32 %v2251, %v2679
      %v2700 = vmul.f32 %v2252, %v2681
      %v2701 = vmul.f32 %v2253, %v2683
      %v2702 = vmul.f32 %v2254, %v2685
      %v2703 = vmul.f32 %v2255, %v2687
      %2712 = vrot.lane.b32.xlu0 %v2696, 7
      %v2713 = vpop.permute.xlu0 %2712
      %2714 = vrot.lane.b32.xlu0 %v2697, 7
      %v2715 = vpop.permute.xlu0 %2714
      %2716 = vrot.lane.b32.xlu0 %v2698, 7
      %v2717 = vpop.permute.xlu0 %2716
      %2718 = vrot.lane.b32.xlu0 %v2699, 7
      %v2719 = vpop.permute.xlu0 %2718
      %2720 = vrot.lane.b32.xlu0 %v2700, 7
      %v2721 = vpop.permute.xlu0 %2720
      %2722 = vrot.lane.b32.xlu0 %v2701, 7
      %v2723 = vpop.permute.xlu0 %2722
      %2724 = vrot.lane.b32.xlu0 %v2702, 7
      %v2725 = vpop.permute.xlu0 %2724
      %2726 = vrot.lane.b32.xlu0 %v2703, 7
      %v2727 = vpop.permute.xlu0 %2726
      %v2736 = vadd.f32 %v2664, %v2713
      %v2737 = vadd.f32 %v2665, %v2715
      %v2738 = vadd.f32 %v2666, %v2717
      %v2739 = vadd.f32 %v2667, %v2719
      %v2740 = vadd.f32 %v2668, %v2721
      %v2741 = vadd.f32 %v2669, %v2723
      %v2742 = vadd.f32 %v2670, %v2725
      %v2743 = vadd.f32 %v2671, %v2727
      %2744 = vrot.lane.b32.xlu0 %v2336, 7
      %v2745 = vpop.permute.xlu0 %2744
      %2746 = vrot.lane.b32.xlu0 %v2337, 7
      %v2747 = vpop.permute.xlu0 %2746
      %2748 = vrot.lane.b32.xlu0 %v2338, 7
      %v2749 = vpop.permute.xlu0 %2748
      %2750 = vrot.lane.b32.xlu0 %v2339, 7
      %v2751 = vpop.permute.xlu0 %2750
      %2752 = vrot.lane.b32.xlu0 %v2340, 7
      %v2753 = vpop.permute.xlu0 %2752
      %2754 = vrot.lane.b32.xlu0 %v2341, 7
      %v2755 = vpop.permute.xlu0 %2754
      %2756 = vrot.lane.b32.xlu0 %v2342, 7
      %v2757 = vpop.permute.xlu0 %2756
      %2758 = vrot.lane.b32.xlu0 %v2343, 7
      %v2759 = vpop.permute.xlu0 %2758
      %v2768 = vsub.f32 %v2154, %v2745
      %v2769 = vsub.f32 %v2159, %v2747
      %v2770 = vsub.f32 %v2164, %v2749
      %v2771 = vsub.f32 %v2169, %v2751
      %v2772 = vsub.f32 %v2174, %v2753
      %v2773 = vsub.f32 %v2179, %v2755
      %v2774 = vsub.f32 %v2184, %v2757
      %v2775 = vsub.f32 %v2189, %v2759
      %2776 = vrot.lane.b32.xlu0 %v2408, 6
      %v2777 = vpop.permute.xlu0 %2776
      %2778 = vrot.lane.b32.xlu0 %v2409, 6
      %v2779 = vpop.permute.xlu0 %2778
      %2780 = vrot.lane.b32.xlu0 %v2410, 6
      %v2781 = vpop.permute.xlu0 %2780
      %2782 = vrot.lane.b32.xlu0 %v2411, 6
      %v2783 = vpop.permute.xlu0 %2782
      %2784 = vrot.lane.b32.xlu0 %v2412, 6
      %v2785 = vpop.permute.xlu0 %2784
      %2786 = vrot.lane.b32.xlu0 %v2413, 6
      %v2787 = vpop.permute.xlu0 %2786
      %2788 = vrot.lane.b32.xlu0 %v2414, 6
      %v2789 = vpop.permute.xlu0 %2788
      %2790 = vrot.lane.b32.xlu0 %v2415, 6
      %v2791 = vpop.permute.xlu0 %2790
      %v2800 = vsub.f32 %v2768, %v2777
      %v2801 = vsub.f32 %v2769, %v2779
      %v2802 = vsub.f32 %v2770, %v2781
      %v2803 = vsub.f32 %v2771, %v2783
      %v2804 = vsub.f32 %v2772, %v2785
      %v2805 = vsub.f32 %v2773, %v2787
      %v2806 = vsub.f32 %v2774, %v2789
      %v2807 = vsub.f32 %v2775, %v2791
      %2808 = vrot.lane.b32.xlu0 %v2480, 7
      %v2809 = vpop.permute.xlu0 %2808
      %2810 = vrot.lane.b32.xlu0 %v2481, 7
      %v2811 = vpop.permute.xlu0 %2810
      %2812 = vrot.lane.b32.xlu0 %v2482, 7
      %v2813 = vpop.permute.xlu0 %2812
      %2814 = vrot.lane.b32.xlu0 %v2483, 7
      %v2815 = vpop.permute.xlu0 %2814
      %2816 = vrot.lane.b32.xlu0 %v2484, 7
      %v2817 = vpop.permute.xlu0 %2816
      %2818 = vrot.lane.b32.xlu0 %v2485, 7
      %v2819 = vpop.permute.xlu0 %2818
      %2820 = vrot.lane.b32.xlu0 %v2486, 7
      %v2821 = vpop.permute.xlu0 %2820
      %2822 = vrot.lane.b32.xlu0 %v2487, 7
      %v2823 = vpop.permute.xlu0 %2822
      %v2832 = vadd.f32 %v2800, %v2809
      %v2833 = vadd.f32 %v2801, %v2811
      %v2834 = vadd.f32 %v2802, %v2813
      %v2835 = vadd.f32 %v2803, %v2815
      %v2836 = vadd.f32 %v2804, %v2817
      %v2837 = vadd.f32 %v2805, %v2819
      %v2838 = vadd.f32 %v2806, %v2821
      %v2839 = vadd.f32 %v2807, %v2823
      %2848 = vrot.lane.b32.xlu0 %v2296, 125
      %v2849 = vpop.permute.xlu0 %2848
      %2850 = vrot.lane.b32.xlu0 %v2297, 125
      %v2851 = vpop.permute.xlu0 %2850
      %2852 = vrot.lane.b32.xlu0 %v2298, 125
      %v2853 = vpop.permute.xlu0 %2852
      %2854 = vrot.lane.b32.xlu0 %v2299, 125
      %v2855 = vpop.permute.xlu0 %2854
      %2856 = vrot.lane.b32.xlu0 %v2300, 125
      %v2857 = vpop.permute.xlu0 %2856
      %2858 = vrot.lane.b32.xlu0 %v2301, 125
      %v2859 = vpop.permute.xlu0 %2858
      %2860 = vrot.lane.b32.xlu0 %v2302, 125
      %v2861 = vpop.permute.xlu0 %2860
      %2862 = vrot.lane.b32.xlu0 %v2303, 125
      %v2863 = vpop.permute.xlu0 %2862
      %2880 = vrot.lane.b32.xlu0 %v2520, 125
      %v2881 = vpop.permute.xlu0 %2880
      %2882 = vrot.lane.b32.xlu0 %v2521, 125
      %v2883 = vpop.permute.xlu0 %2882
      %2884 = vrot.lane.b32.xlu0 %v2522, 125
      %v2885 = vpop.permute.xlu0 %2884
      %2886 = vrot.lane.b32.xlu0 %v2523, 125
      %v2887 = vpop.permute.xlu0 %2886
      %2888 = vrot.lane.b32.xlu0 %v2524, 125
      %v2889 = vpop.permute.xlu0 %2888
      %2890 = vrot.lane.b32.xlu0 %v2525, 125
      %v2891 = vpop.permute.xlu0 %2890
      %2892 = vrot.lane.b32.xlu0 %v2526, 125
      %v2893 = vpop.permute.xlu0 %2892
      %2894 = vrot.lane.b32.xlu0 %v2527, 125
      %v2895 = vpop.permute.xlu0 %2894
      %2912 = vrot.lane.b32.xlu0 %v2736, 125
      %v2913 = vpop.permute.xlu0 %2912
      %2914 = vrot.lane.b32.xlu0 %v2737, 125
      %v2915 = vpop.permute.xlu0 %2914
      %2916 = vrot.lane.b32.xlu0 %v2738, 125
      %v2917 = vpop.permute.xlu0 %2916
      %2918 = vrot.lane.b32.xlu0 %v2739, 125
      %v2919 = vpop.permute.xlu0 %2918
      %2920 = vrot.lane.b32.xlu0 %v2740, 125
      %v2921 = vpop.permute.xlu0 %2920
      %2922 = vrot.lane.b32.xlu0 %v2741, 125
      %v2923 = vpop.permute.xlu0 %2922
      %2924 = vrot.lane.b32.xlu0 %v2742, 125
      %v2925 = vpop.permute.xlu0 %2924
      %2926 = vrot.lane.b32.xlu0 %v2743, 125
      %v2927 = vpop.permute.xlu0 %2926
      %2944 = vrot.lane.b32.xlu0 %v2832, 125
      %v2945 = vpop.permute.xlu0 %2944
      %2946 = vrot.lane.b32.xlu0 %v2833, 125
      %v2947 = vpop.permute.xlu0 %2946
      %2948 = vrot.lane.b32.xlu0 %v2834, 125
      %v2949 = vpop.permute.xlu0 %2948
      %2950 = vrot.lane.b32.xlu0 %v2835, 125
      %v2951 = vpop.permute.xlu0 %2950
      %2952 = vrot.lane.b32.xlu0 %v2836, 125
      %v2953 = vpop.permute.xlu0 %2952
      %2954 = vrot.lane.b32.xlu0 %v2837, 125
      %v2955 = vpop.permute.xlu0 %2954
      %2956 = vrot.lane.b32.xlu0 %v2838, 125
      %v2957 = vpop.permute.xlu0 %2956
      %2958 = vrot.lane.b32.xlu0 %v2839, 125
      %v2959 = vpop.permute.xlu0 %2958
      %v2968 = vsel %vm1993, %v2849, %v2849
      %v2969 = vsel %vm1993, %v2851, %v2851
      %v2970 = vsel %vm1993, %v2853, %v2853
      %v2971 = vsel %vm1993, %v2855, %v2855
      %v2972 = vsel %vm1993, %v2857, %v2857
      %v2973 = vsel %vm1993, %v2859, %v2859
      %v2974 = vsel %vm1993, %v2861, %v2861
      %v2975 = vsel %vm1993, %v2863, %v2863
      %v2976 = vsel %vm307, %v2968, %v2881
      %v2977 = vsel %vm307, %v2969, %v2883
      %v2978 = vsel %vm307, %v2970, %v2885
      %v2979 = vsel %vm307, %v2971, %v2887
      %v2980 = vsel %vm307, %v2972, %v2889
      %v2981 = vsel %vm307, %v2973, %v2891
      %v2982 = vsel %vm307, %v2974, %v2893
      %v2983 = vsel %vm307, %v2975, %v2895
      %v2984 = vsel %vm2010, %v2976, %v2913
      %v2985 = vsel %vm2010, %v2977, %v2915
      %v2986 = vsel %vm2010, %v2978, %v2917
      %v2987 = vsel %vm2010, %v2979, %v2919
      %v2988 = vsel %vm2010, %v2980, %v2921
      %v2989 = vsel %vm2010, %v2981, %v2923
      %v2990 = vsel %vm2010, %v2982, %v2925
      %v2991 = vsel %vm2010, %v2983, %v2927
      %v2992 = vsel %vm2019, %v2984, %v2945
      %v2993 = vsel %vm2019, %v2985, %v2947
      %v2994 = vsel %vm2019, %v2986, %v2949
      %v2995 = vsel %vm2019, %v2987, %v2951
      %v2996 = vsel %vm2019, %v2988, %v2953
      %v2997 = vsel %vm2019, %v2989, %v2955
      %v2998 = vsel %vm2019, %v2990, %v2957
      %v2999 = vsel %vm2019, %v2991, %v2959
      %3000 = vst.msk [vmem:[%s296] sm:$0xff] %vm2028, %v2992
      %3001 = vst.msk [vmem:[%s296 + $0x8] sm:$0xff] %vm2028, %v2993
      %3002 = vst.msk [vmem:[%s296 + $0x10] sm:$0xff] %vm2028, %v2994
      %3003 = vst.msk [vmem:[%s296 + $0x18] sm:$0xff] %vm2028, %v2995
      %3004 = vst.msk [vmem:[%s296 + $0x20] sm:$0xff] %vm2028, %v2996
      %3005 = vst.msk [vmem:[%s296 + $0x28] sm:$0xff] %vm2028, %v2997
      %3006 = vst.msk [vmem:[%s296 + $0x30] sm:$0xff] %vm2028, %v2998
      %3007 = vst.msk [vmem:[%s296 + $0x38] sm:$0xff] %vm2028, %v2999
      %s3008 = smul.u32 8, %s21
      %p3009 = scmp.lt.s32.totalorder %s20, 1
      %s3010 = scalar_select %p3009, %s20, 1
      %p3011 = scmp.lt.s32.totalorder %s3008, 7
      %s3012 = scalar_select %p3011, %s3008, 7
      %s3013 = smul.addr %s3010, 8
      %s3014 = sadd.s32 %s3012, %s3013
      %s3015 = smul.addr %s3014, 8
      %s3016 = scalar_lea.vmem %s3, %s3015
      %s3017 = smul.u32 8, %s21
      %p3018 = scmp.lt.s32.totalorder %s20, 1
      %s3019 = scalar_select %p3018, %s20, 1
      %p3020 = scmp.lt.s32.totalorder %s3017, 7
      %s3021 = scalar_select %p3020, %s3017, 7
      %s3022 = smul.addr %s3019, 8
      %s3023 = sadd.s32 %s3021, %s3022
      %s3024 = smul.addr %s3023, 8
      %s3025 = scalar_lea.vmem %s4, %s3024
      // Predicated region
      $region33: #{tpu_custom_call.1} parent=31 // pred_check
        %p3026 = pneg %p128
      $region34: #{tpu_custom_call.1} parent=31 // pred_check_branch
        %3028 = sbr.rel (%p3026) target = $region36
      $region35: #{tpu_custom_call.1} parent=31 // pred_region
        %s3029 = smul.u32 8, %s21
      $region36: #{tpu_custom_call.1} parent=31 // pred_fallthru
        _
      // Predicated region
      $region37: #{tpu_custom_call.1} parent=31 // pred_check
        %p3030 = pneg %p156
      $region38: #{tpu_custom_call.1} parent=31 // pred_check_branch
        %3032 = sbr.rel (%p3030) target = $region40
      $region39: #{tpu_custom_call.1} parent=31 // pred_region
        %s3033 = smul.u32 8, %s21
      $region40: #{tpu_custom_call.1} parent=31 // pred_fallthru
        _
    $region32: #{tpu_custom_call.1} parent=5 // pred_fallthru
      _
    %p3034 = scmp.le.s32.totalorder 2, %s11
    // Predicated region
    $region41: #{tpu_custom_call.1} parent=5 // pred_check
      %p3035 = pneg %p3034
    $region42: #{tpu_custom_call.1} parent=5 // pred_check_branch
      %3037 = sbr.rel (%p3035) target = $region44
    $region43: #{tpu_custom_call.1} parent=5 // pred_region
      %s3038 = ssub.s32 %s11, 2
      // Predicated region
      $region45: #{tpu_custom_call.1} parent=43 // pred_check
        %p3039 = pneg %p134
      $region46: #{tpu_custom_call.1} parent=43 // pred_check_branch
        %3041 = sbr.rel (%p3039) target = $region48
      $region47: #{tpu_custom_call.1} parent=43 // pred_region
        %s3042 = smul.u32 8, %s23
        %p3043 = scmp.lt.s32.totalorder %s22, 1
        %s3044 = scalar_select %p3043, %s22, 1
        %p3045 = scmp.lt.s32.totalorder %s3042, 7
        %s3046 = scalar_select %p3045, %s3042, 7
        %s3047 = smul.addr %s3044, 8
        %s3048 = sadd.s32 %s3046, %s3047
        %s3049 = smul.addr %s3048, 8
        %s3050 = scalar_lea.vmem %s3, %s3049
      $region48: #{tpu_custom_call.1} parent=43 // pred_fallthru
        _
      // Predicated region
      $region49: #{tpu_custom_call.1} parent=43 // pred_check
        %p3051 = pneg %p162
      $region50: #{tpu_custom_call.1} parent=43 // pred_check_branch
        %3053 = sbr.rel (%p3051) target = $region52
      $region51: #{tpu_custom_call.1} parent=43 // pred_region
        %s3054 = smul.u32 8, %s23
        %p3055 = scmp.lt.s32.totalorder %s22, 1
        %s3056 = scalar_select %p3055, %s22, 1
        %p3057 = scmp.lt.s32.totalorder %s3054, 7
        %s3058 = scalar_select %p3057, %s3054, 7
        %s3059 = smul.addr %s3056, 8
        %s3060 = sadd.s32 %s3058, %s3059
        %s3061 = smul.addr %s3060, 8
        %s3062 = scalar_lea.vmem %s4, %s3061
      $region52: #{tpu_custom_call.1} parent=43 // pred_fallthru
        _
    $region44: #{tpu_custom_call.1} parent=5 // pred_fallthru
      _
  $region6: #{tpu_custom_call.1} parent=0 // loop_footer
    %s15 = sadd.s32 1, %s11
  $region7: #{tpu_custom_call.1} parent=0 // loop_footer_branch
    %10 = sbr.rel target = $region3
  $region8: #{tpu_custom_call.1} parent=0 // loop_exit
    _

</llo_original>
